<compile_context>
chip_gen: v7x
topology: tpu7x:2x2x1
jax: 0.10.0
libtpu: 0.0.40
codegen_flags: <defaults>
</compile_context>

<pallas_src>
import jax
import jax.numpy as jnp
from jax import lax
from jax.experimental import pallas as pl
from jax.experimental.pallas import tpu as pltpu


# --------------------------- Pallas kernel --------------------------------
def _make_kernel(H, W, C, num_heads, key_dim, d):
    nh_kd = num_heads * key_dim
    dh = num_heads * d
    C2 = 2 * dh
    scale = float(key_dim) ** -0.5
    f32 = jnp.float32

    def kernel(x_ref, wqkv_ref, bqkv_ref, dww_ref, dwb_ref, pww_ref, pwb_ref,
               pqr_ref, pkr_ref, pqc_ref, pkc_ref,
               prw_ref, prb_ref, pcw_ref, pcb_ref, pjw_ref, pjb_ref,
               out_ref, xp_ref):
        x2 = x_ref[0].reshape(H * W, C)                        # (HW, C)

        # -------- fused to_q/to_k/to_v (1x1 conv + BN folded): one matmul ---
        qkv = jnp.dot(x2, wqkv_ref[...],
                      preferred_element_type=f32) + bqkv_ref[0]   # (HW, 2dh)
        qkv3 = qkv.reshape(H, W, C2)

        # -------- depthwise 3x3 + BN (folded) + ReLU ------------------------
        # zero only the 1-px border; interior is fully overwritten each step
        zrow = jnp.zeros((1, W + 2, C2), f32)
        zcol = jnp.zeros((H + 2, 1, C2), f32)
        xp_ref[0:1, :, :] = zrow
        xp_ref[H + 1:H + 2, :, :] = zrow
        xp_ref[:, 0:1, :] = zcol
        xp_ref[:, W + 1:W + 2, :] = zcol
        xp_ref[1:H + 1, 1:W + 1, :] = qkv3

        dw = dww_ref[...]                                      # (3, 3, 2dh)
        acc = jnp.zeros((H, W, C2), f32)
        for ky in range(3):
            for kx in range(3):
                acc = acc + xp_ref[ky:ky + H, kx:kx + W, :] * dw[ky, kx]
        a = jnp.maximum(acc + dwb_ref[0], 0.0)                 # act = ReLU

        # -------- pointwise 1x1 + BN (folded) -------------------------------
        qkv_pw = jnp.dot(a.reshape(H * W, C2), pww_ref[...],
                         preferred_element_type=f32) + pwb_ref[0]  # (HW, C)

        # -------- axial means (q, k, v are channel slices of qkv) -----------
        row_mean = jnp.mean(qkv3, axis=1)                      # (H, 2dh)
        col_mean = jnp.mean(qkv3, axis=0)                      # (W, 2dh)
        qr = row_mean[:, :nh_kd] + pqr_ref[...]
        kr = row_mean[:, nh_kd:2 * nh_kd] + pkr_ref[...]
        vr = row_mean[:, 2 * nh_kd:]                           # (H, dh)
        qc = col_mean[:, :nh_kd] + pqc_ref[...]
        kc = col_mean[:, nh_kd:2 * nh_kd] + pkc_ref[...]
        vc = col_mean[:, 2 * nh_kd:]                           # (W, dh)

        def axial_attn(qm, km, vm):
            outs = []
            for h in range(num_heads):
                qh = qm[:, h * key_dim:(h + 1) * key_dim]      # (L, kd)
                kh = km[:, h * key_dim:(h + 1) * key_dim]      # (L, kd)
                vh = vm[:, h * d:(h + 1) * d]                  # (L, d)
                s = jnp.einsum('ic,jc->ij', qh, kh,
                               preferred_element_type=f32) * scale
                s = s - jnp.max(s, axis=-1, keepdims=True)
                e = jnp.exp(s)
                p = e / jnp.sum(e, axis=-1, keepdims=True)
                outs.append(jnp.dot(p, vh, preferred_element_type=f32))
            return jnp.concatenate(outs, axis=-1)              # (L, dh)

        xr = axial_attn(qr, kr, vr)                            # (H, dh)
        xc = axial_attn(qc, kc, vc)                            # (W, dh)

        # proj_encode_row / proj_encode_column: ReLU then 1x1 conv + BN
        xr = jnp.dot(jnp.maximum(xr, 0.0), prw_ref[...],
                     preferred_element_type=f32) + prb_ref[0]
        xc = jnp.dot(jnp.maximum(xc, 0.0), pcw_ref[...],
                     preferred_element_type=f32) + pcb_ref[0]

        # -------- combine, proj, h_sigmoid gate -----------------------------
        v3 = qkv3[:, :, 2 * nh_kd:]                            # (H, W, dh)
        xx = v3 + xr[:, None, :] + xc[None, :, :]              # broadcast add
        xx = jnp.maximum(xx, 0.0).reshape(H * W, dh)
        xx = jnp.dot(xx, pjw_ref[...],
                     preferred_element_type=f32) + pjb_ref[0]  # (HW, C)
        hs = jnp.clip(xx + 3.0, 0.0, 6.0) * (1.0 / 6.0)        # h_sigmoid
        out_ref[...] = (hs * qkv_pw).reshape(1, H, W, C)

    return kernel


def sea_attention(x, params, *, num_heads, key_dim, d):
    B, H, W, C = x.shape
    nh_kd = num_heads * key_dim
    dh = num_heads * d
    C2 = 2 * dh
    (wqkv, bqkv, dww, dwb, pww, pwb, pqr, pkr, pqc, pkc,
     prw, prb, pcw, pcb, pjw, pjb) = params

    kernel = _make_kernel(H, W, C, num_heads, key_dim, d)

    grid_spec = pltpu.PrefetchScalarGridSpec(
        num_scalar_prefetch=0,
        grid=(B,),
        in_specs=[
            pl.BlockSpec((1, H, W, C), lambda n: (n, 0, 0, 0)),  # x
            pl.BlockSpec((C, C2), lambda n: (0, 0)),             # fused qkv w
            pl.BlockSpec((1, C2), lambda n: (0, 0)),             # fused qkv b
            pl.BlockSpec((3, 3, C2), lambda n: (0, 0, 0)),        # dwconv w
            pl.BlockSpec((1, C2), lambda n: (0, 0)),              # dwconv b
            pl.BlockSpec((C2, C), lambda n: (0, 0)),              # pwconv w
            pl.BlockSpec((1, C), lambda n: (0, 0)),               # pwconv b
            pl.BlockSpec((H, nh_kd), lambda n: (0, 0)),           # pos row q
            pl.BlockSpec((H, nh_kd), lambda n: (0, 0)),           # pos row k
            pl.BlockSpec((W, nh_kd), lambda n: (0, 0)),           # pos col q
            pl.BlockSpec((W, nh_kd), lambda n: (0, 0)),           # pos col k
            pl.BlockSpec((dh, dh), lambda n: (0, 0)),             # enc_row w
            pl.BlockSpec((1, dh), lambda n: (0, 0)),              # enc_row b
            pl.BlockSpec((dh, dh), lambda n: (0, 0)),             # enc_col w
            pl.BlockSpec((1, dh), lambda n: (0, 0)),              # enc_col b
            pl.BlockSpec((dh, C), lambda n: (0, 0)),              # proj w
            pl.BlockSpec((1, C), lambda n: (0, 0)),               # proj b
        ],
        out_specs=pl.BlockSpec((1, H, W, C), lambda n: (n, 0, 0, 0)),
        scratch_shapes=[pltpu.VMEM((H + 2, W + 2, C2), jnp.float32)],
    )
    return pl.pallas_call(
        kernel,
        out_shape=jax.ShapeDtypeStruct((B, H, W, C), jnp.float32),
        grid_spec=grid_spec,
        compiler_params=pltpu.CompilerParams(
            dimension_semantics=("parallel",)),
    )(x, wqkv, bqkv, dww, dwb, pww, pwb, pqr, pkr, pqc, pkc,
      prw, prb, pcw, pcb, pjw, pjb)


# ---------------- parameter construction (plain JAX glue) -----------------
def _interp_linear(p, L):
    """1D linear interp of (C, S) -> (C, L), F.interpolate align_corners=False."""
    Cc, S = p.shape
    if L == S:
        return p
    src = (jnp.arange(L, dtype=jnp.float32) + 0.5) * (S / L) - 0.5
    src = jnp.clip(src, 0.0, S - 1.0)
    lo = jnp.floor(src).astype(jnp.int32)
    hi = jnp.minimum(lo + 1, S - 1)
    w = src - lo.astype(jnp.float32)
    return p[:, lo] * (1.0 - w) + p[:, hi] * w


def init_params(key, *, dim, key_dim, num_heads, d, H, W, eps=1e-5):
    nh_kd = num_heads * key_dim
    dh = num_heads * d
    C2 = 2 * dh
    ks = iter(jax.random.split(key, 32))

    def bn(k, c):
        k1, k2, k3, k4 = jax.random.split(k, 4)
        gamma = 1.0 + 0.1 * jax.random.normal(k1, (c,), jnp.float32)
        beta = 0.05 * jax.random.normal(k2, (c,), jnp.float32)
        mean = 0.1 * jax.random.normal(k3, (c,), jnp.float32)
        var = 0.5 + jax.random.uniform(k4, (c,), jnp.float32)
        return gamma, beta, mean, var

    def fold(w, bnp):
        # inference-mode BN folding; output channel is the LAST axis of w.
        gamma, beta, mean, var = bnp
        s = gamma / jnp.sqrt(var + eps)
        return w * s, (beta - mean * s)[None, :]

    # to_q / to_k / to_v (1x1 conv, no bias, + BN) fused on the output axis
    wq, bq = fold(0.2 * jax.random.normal(next(ks), (dim, nh_kd), jnp.float32), bn(next(ks), nh_kd))
    wk, bk = fold(0.2 * jax.random.normal(next(ks), (dim, nh_kd), jnp.float32), bn(next(ks), nh_kd))
    wv, bv = fold(0.2 * jax.random.normal(next(ks), (dim, dh), jnp.float32), bn(next(ks), dh))
    wqkv = jnp.concatenate([wq, wk, wv], axis=1)       # (dim, 2dh)
    bqkv = jnp.concatenate([bq, bk, bv], axis=1)       # (1, 2dh)

    dww, dwb = fold(0.2 * jax.random.normal(next(ks), (3, 3, C2), jnp.float32), bn(next(ks), C2))
    pww, pwb = fold(0.2 * jax.random.normal(next(ks), (C2, dim), jnp.float32), bn(next(ks), dim))
    prw, prb = fold(0.2 * jax.random.normal(next(ks), (dh, dh), jnp.float32), bn(next(ks), dh))
    pcw, pcb = fold(0.2 * jax.random.normal(next(ks), (dh, dh), jnp.float32), bn(next(ks), dh))
    pjw, pjb = fold(0.2 * jax.random.normal(next(ks), (dh, dim), jnp.float32), bn(next(ks), dim))

    # SqueezeAxialPositionalEmbedding params (1, nh_kd, 16): interpolate to the
    # target length host-side (identity at H=W=16) and transpose to (L, nh_kd).
    def pos(k, L):
        p = jax.random.normal(k, (nh_kd, 16), jnp.float32)
        return _interp_linear(p, L).T

    pqr = pos(next(ks), H)
    pkr = pos(next(ks), H)
    pqc = pos(next(ks), W)
    pkc = pos(next(ks), W)

    return (wqkv, bqkv, dww, dwb, pww, pwb, pqr, pkr, pqc, pkc,
            prw, prb, pcw, pcb, pjw, pjb)


# ---------------- pure-JAX reference for verification ---------------------
def reference(x, params, *, num_heads, key_dim, d):
    (wqkv, bqkv, dww, dwb, pww, pwb, pqr, pkr, pqc, pkc,
     prw, prb, pcw, pcb, pjw, pjb) = params
    B, H, W, C = x.shape
    nh_kd = num_heads * key_dim
    dh = num_heads * d
    C2 = 2 * dh
    scale = float(key_dim) ** -0.5
    dn = ('NHWC', 'HWIO', 'NHWC')

    qkv = jnp.einsum('bhwc,co->bhwo', x, wqkv) + bqkv[0]        # (B,H,W,2dh)
    q = qkv[..., :nh_kd]
    k = qkv[..., nh_kd:2 * nh_kd]
    v = qkv[..., 2 * nh_kd:]

    a = lax.conv_general_dilated(qkv, dww.reshape(3, 3, 1, C2), (1, 1), 'SAME',
                                 dimension_numbers=dn,
                                 feature_group_count=C2) + dwb[0]
    a = jnp.maximum(a, 0.0)
    qkv_pw = jnp.einsum('bhwc,co->bhwo', a, pww) + pwb[0]       # (B,H,W,C)

    def axial(qm, km, vm):
        L = qm.shape[1]
        qh = qm.reshape(B, L, num_heads, key_dim).transpose(0, 2, 1, 3)
        kh = km.reshape(B, L, num_heads, key_dim).transpose(0, 2, 1, 3)
        vh = vm.reshape(B, L, num_heads, d).transpose(0, 2, 1, 3)
        attn = jax.nn.softmax(
            jnp.einsum('bnic,bnjc->bnij', qh, kh) * scale, axis=-1)
        o = jnp.einsum('bnij,bnjd->bnid', attn, vh)
        return o.transpose(0, 2, 1, 3).reshape(B, L, dh)

    xr = axial(q.mean(axis=2) + pqr, k.mean(axis=2) + pkr, v.mean(axis=2))
    xc = axial(q.mean(axis=1) + pqc, k.mean(axis=1) + pkc, v.mean(axis=1))
    xr = jnp.maximum(xr, 0.0) @ prw + prb[0]                    # (B,H,dh)
    xc = jnp.maximum(xc, 0.0) @ pcw + pcb[0]                    # (B,W,dh)

    xx = v + xr[:, :, None, :] + xc[:, None, :, :]              # (B,H,W,dh)
    xx = jnp.einsum('bhwc,co->bhwo', jnp.maximum(xx, 0.0), pjw) + pjb[0]
    hs = jnp.clip(xx + 3.0, 0.0, 6.0) / 6.0
    return hs * qkv_pw


if __name__ == "__main__":
    key = jax.random.PRNGKey(0)
    k_x, k_p = jax.random.split(key)

    # attn_ratio=2 so that cat([q,k,v]) has exactly 2*dh channels (required by
    # the module's dwconv); default attn_ratio=4 would not type-check in torch.
    B, H, W = 2, 16, 16
    dim, key_dim, num_heads, attn_ratio = 16, 8, 2, 2
    d = attn_ratio * key_dim                                   # dh = 32

    # NOTE: PyTorch forward takes NCHW; this kernel uses NHWC.
    x = jax.random.normal(k_x, (B, H, W, dim), jnp.float32)
    params = init_params(k_p, dim=dim, key_dim=key_dim, num_heads=num_heads,
                         d=d, H=H, W=W)

    out = sea_attention(x, params, num_heads=num_heads, key_dim=key_dim, d=d)
    out = jax.block_until_ready(out)

    ref = reference(x, params, num_heads=num_heads, key_dim=key_dim, d=d)
    err = float(jnp.max(jnp.abs(out - ref)))
    assert out.shape == (B, H, W, dim)
    assert err < 2e-3, f"max abs err {err}"
    print("KERNEL_OK")
</pallas_src>

<mosaic_0001>
module attributes {stable_mosaic.version = 11 : i64} {
  func.func @kernel(%arg0: i32, %arg1: memref<1x16x16x16xf32, #tpu.memory_space<vmem>>, %arg2: memref<16x64xf32, #tpu.memory_space<vmem>>, %arg3: memref<1x64xf32, #tpu.memory_space<vmem>>, %arg4: memref<3x3x64xf32, #tpu.memory_space<vmem>>, %arg5: memref<1x64xf32, #tpu.memory_space<vmem>>, %arg6: memref<64x16xf32, #tpu.memory_space<vmem>>, %arg7: memref<1x16xf32, #tpu.memory_space<vmem>>, %arg8: memref<16x16xf32, #tpu.memory_space<vmem>>, %arg9: memref<16x16xf32, #tpu.memory_space<vmem>>, %arg10: memref<16x16xf32, #tpu.memory_space<vmem>>, %arg11: memref<16x16xf32, #tpu.memory_space<vmem>>, %arg12: memref<32x32xf32, #tpu.memory_space<vmem>>, %arg13: memref<1x32xf32, #tpu.memory_space<vmem>>, %arg14: memref<32x32xf32, #tpu.memory_space<vmem>>, %arg15: memref<1x32xf32, #tpu.memory_space<vmem>>, %arg16: memref<32x16xf32, #tpu.memory_space<vmem>>, %arg17: memref<1x16xf32, #tpu.memory_space<vmem>>, %arg18: memref<1x16x16x16xf32, #tpu.memory_space<vmem>>, %arg19: memref<18x18x64xf32, #tpu.memory_space<vmem>>) attributes {dimension_semantics = [#tpu.dimension_semantics<parallel>], iteration_bounds = array<i64: 2>, scalar_prefetch = 0 : i64, scratch_operands = 1 : i64, tpu.core_type = #tpu.core_type<tc>, window_params = [{transform_indices = @transform_0, window_bounds = array<i64: 1, 16, 16, 16>}, {pipeline_mode = #tpu.pipeline_mode<synchronous>, transform_indices = @transform_1, window_bounds = array<i64: 16, 64>}, {pipeline_mode = #tpu.pipeline_mode<synchronous>, transform_indices = @transform_2, window_bounds = array<i64: 1, 64>}, {pipeline_mode = #tpu.pipeline_mode<synchronous>, transform_indices = @transform_3, window_bounds = array<i64: 3, 3, 64>}, {pipeline_mode = #tpu.pipeline_mode<synchronous>, transform_indices = @transform_4, window_bounds = array<i64: 1, 64>}, {pipeline_mode = #tpu.pipeline_mode<synchronous>, transform_indices = @transform_5, window_bounds = array<i64: 64, 16>}, {pipeline_mode = #tpu.pipeline_mode<synchronous>, transform_indices = @transform_6, window_bounds = array<i64: 1, 16>}, {pipeline_mode = #tpu.pipeline_mode<synchronous>, transform_indices = @transform_7, window_bounds = array<i64: 16, 16>}, {pipeline_mode = #tpu.pipeline_mode<synchronous>, transform_indices = @transform_8, window_bounds = array<i64: 16, 16>}, {pipeline_mode = #tpu.pipeline_mode<synchronous>, transform_indices = @transform_9, window_bounds = array<i64: 16, 16>}, {pipeline_mode = #tpu.pipeline_mode<synchronous>, transform_indices = @transform_10, window_bounds = array<i64: 16, 16>}, {pipeline_mode = #tpu.pipeline_mode<synchronous>, transform_indices = @transform_11, window_bounds = array<i64: 32, 32>}, {pipeline_mode = #tpu.pipeline_mode<synchronous>, transform_indices = @transform_12, window_bounds = array<i64: 1, 32>}, {pipeline_mode = #tpu.pipeline_mode<synchronous>, transform_indices = @transform_13, window_bounds = array<i64: 32, 32>}, {pipeline_mode = #tpu.pipeline_mode<synchronous>, transform_indices = @transform_14, window_bounds = array<i64: 1, 32>}, {pipeline_mode = #tpu.pipeline_mode<synchronous>, transform_indices = @transform_15, window_bounds = array<i64: 32, 16>}, {pipeline_mode = #tpu.pipeline_mode<synchronous>, transform_indices = @transform_16, window_bounds = array<i64: 1, 16>}, {transform_indices = @transform_17, window_bounds = array<i64: 1, 16, 16, 16>}]} {
    %c0 = arith.constant 0 : index
    %c0_0 = arith.constant 0 : index
    %c0_1 = arith.constant 0 : index
    %c0_2 = arith.constant 0 : index
    %0 = vector.load %arg1[%c0, %c0_0, %c0_1, %c0_2] : memref<1x16x16x16xf32, #tpu.memory_space<vmem>>, vector<1x16x16x16xf32>
    %1 = vector.shape_cast %0 : vector<1x16x16x16xf32> to vector<16x16x16xf32>
    %2 = vector.shape_cast %1 : vector<16x16x16xf32> to vector<256x16xf32>
    %c0_3 = arith.constant 0 : index
    %c0_4 = arith.constant 0 : index
    %3 = vector.load %arg2[%c0_3, %c0_4] : memref<16x64xf32, #tpu.memory_space<vmem>>, vector<16x64xf32>
    %cst = arith.constant dense<0.000000e+00> : vector<256x64xf32>
    %4 = tpu.matmul %2, %3, %cst {dimension_numbers = #tpu.dot_dimension_numbers<[1], [0], [0], [1], [0, 0, 1, 1], [], []>} : vector<256x16xf32>, vector<16x64xf32>, vector<256x64xf32> -> vector<256x64xf32>
    %c0_5 = arith.constant 0 : index
    %c0_6 = arith.constant 0 : index
    %5 = vector.load %arg3[%c0_5, %c0_6] : memref<1x64xf32, #tpu.memory_space<vmem>>, vector<1x64xf32>
    %6 = vector.shape_cast %5 : vector<1x64xf32> to vector<64xf32>
    %7 = vector.shape_cast %6 : vector<64xf32> to vector<1x64xf32>
    %8 = vector.broadcast %7 : vector<1x64xf32> to vector<256x64xf32>
    %9 = arith.addf %4, %8 : vector<256x64xf32>
    %10 = vector.shape_cast %9 : vector<256x64xf32> to vector<16x16x64xf32>
    %cst_7 = arith.constant 0.000000e+00 : f32
    %11 = vector.broadcast %cst_7 : f32 to vector<1x18x64xf32>
    %cst_8 = arith.constant 0.000000e+00 : f32
    %12 = vector.broadcast %cst_8 : f32 to vector<18x1x64xf32>
    %c0_9 = arith.constant 0 : index
    %c0_10 = arith.constant 0 : index
    %c0_11 = arith.constant 0 : index
    %13 = vector.load %arg19[%c0_9, %c0_10, %c0_11] : memref<18x18x64xf32, #tpu.memory_space<vmem>>, vector<1x18x64xf32>
    tpu.vector_store %arg19[%c0_9, %c0_10, %c0_11], %11 {strides = array<i32>} : memref<18x18x64xf32, #tpu.memory_space<vmem>>, vector<1x18x64xf32>,
    %c17 = arith.constant 17 : index
    %c0_12 = arith.constant 0 : index
    %c0_13 = arith.constant 0 : index
    %14 = vector.load %arg19[%c17, %c0_12, %c0_13] : memref<18x18x64xf32, #tpu.memory_space<vmem>>, vector<1x18x64xf32>
    tpu.vector_store %arg19[%c17, %c0_12, %c0_13], %11 {strides = array<i32>} : memref<18x18x64xf32, #tpu.memory_space<vmem>>, vector<1x18x64xf32>,
    %c0_14 = arith.constant 0 : index
    %c0_15 = arith.constant 0 : index
    %c0_16 = arith.constant 0 : index
    %15 = vector.load %arg19[%c0_14, %c0_15, %c0_16] : memref<18x18x64xf32, #tpu.memory_space<vmem>>, vector<18x1x64xf32>
    tpu.vector_store %arg19[%c0_14, %c0_15, %c0_16], %12 {strides = array<i32>} : memref<18x18x64xf32, #tpu.memory_space<vmem>>, vector<18x1x64xf32>,
    %c0_17 = arith.constant 0 : index
    %c17_18 = arith.constant 17 : index
    %c0_19 = arith.constant 0 : index
    %16 = vector.load %arg19[%c0_17, %c17_18, %c0_19] : memref<18x18x64xf32, #tpu.memory_space<vmem>>, vector<18x1x64xf32>
    tpu.vector_store %arg19[%c0_17, %c17_18, %c0_19], %12 {strides = array<i32>} : memref<18x18x64xf32, #tpu.memory_space<vmem>>, vector<18x1x64xf32>,
    %c1 = arith.constant 1 : index
    %c1_20 = arith.constant 1 : index
    %c0_21 = arith.constant 0 : index
    %17 = vector.load %arg19[%c1, %c1_20, %c0_21] : memref<18x18x64xf32, #tpu.memory_space<vmem>>, vector<16x16x64xf32>
    tpu.vector_store %arg19[%c1, %c1_20, %c0_21], %10 {strides = array<i32>} : memref<18x18x64xf32, #tpu.memory_space<vmem>>, vector<16x16x64xf32>,
    %c0_22 = arith.constant 0 : index
    %c0_23 = arith.constant 0 : index
    %c0_24 = arith.constant 0 : index
    %18 = vector.load %arg4[%c0_22, %c0_23, %c0_24] : memref<3x3x64xf32, #tpu.memory_space<vmem>>, vector<3x3x64xf32>
    %cst_25 = arith.constant 0.000000e+00 : f32
    %19 = vector.broadcast %cst_25 : f32 to vector<16x16x64xf32>
    %c0_26 = arith.constant 0 : index
    %c0_27 = arith.constant 0 : index
    %c0_28 = arith.constant 0 : index
    %20 = vector.load %arg19[%c0_26, %c0_27, %c0_28] : memref<18x18x64xf32, #tpu.memory_space<vmem>>, vector<16x16x64xf32>
    %21 = vector.extract_strided_slice %18 {offsets = [0, 0, 0], sizes = [1, 1, 64], strides = [1, 1, 1]} : vector<3x3x64xf32> to vector<1x1x64xf32>
    %22 = vector.shape_cast %21 : vector<1x1x64xf32> to vector<64xf32>
    %23 = vector.shape_cast %22 : vector<64xf32> to vector<1x1x64xf32>
    %24 = vector.broadcast %23 : vector<1x1x64xf32> to vector<16x16x64xf32>
    %25 = arith.mulf %20, %24 : vector<16x16x64xf32>
    %26 = arith.addf %19, %25 : vector<16x16x64xf32>
    %c0_29 = arith.constant 0 : index
    %c1_30 = arith.constant 1 : index
    %c0_31 = arith.constant 0 : index
    %27 = vector.load %arg19[%c0_29, %c1_30, %c0_31] : memref<18x18x64xf32, #tpu.memory_space<vmem>>, vector<16x16x64xf32>
    %28 = vector.extract_strided_slice %18 {offsets = [0, 1, 0], sizes = [1, 1, 64], strides = [1, 1, 1]} : vector<3x3x64xf32> to vector<1x1x64xf32>
    %29 = vector.shape_cast %28 : vector<1x1x64xf32> to vector<64xf32>
    %30 = vector.shape_cast %29 : vector<64xf32> to vector<1x1x64xf32>
    %31 = vector.broadcast %30 : vector<1x1x64xf32> to vector<16x16x64xf32>
    %32 = arith.mulf %27, %31 : vector<16x16x64xf32>
    %33 = arith.addf %26, %32 : vector<16x16x64xf32>
    %c0_32 = arith.constant 0 : index
    %c2 = arith.constant 2 : index
    %c0_33 = arith.constant 0 : index
    %34 = vector.load %arg19[%c0_32, %c2, %c0_33] : memref<18x18x64xf32, #tpu.memory_space<vmem>>, vector<16x16x64xf32>
    %35 = vector.extract_strided_slice %18 {offsets = [0, 2, 0], sizes = [1, 1, 64], strides = [1, 1, 1]} : vector<3x3x64xf32> to vector<1x1x64xf32>
    %36 = vector.shape_cast %35 : vector<1x1x64xf32> to vector<64xf32>
    %37 = vector.shape_cast %36 : vector<64xf32> to vector<1x1x64xf32>
    %38 = vector.broadcast %37 : vector<1x1x64xf32> to vector<16x16x64xf32>
    %39 = arith.mulf %34, %38 : vector<16x16x64xf32>
    %40 = arith.addf %33, %39 : vector<16x16x64xf32>
    %c1_34 = arith.constant 1 : index
    %c0_35 = arith.constant 0 : index
    %c0_36 = arith.constant 0 : index
    %41 = vector.load %arg19[%c1_34, %c0_35, %c0_36] : memref<18x18x64xf32, #tpu.memory_space<vmem>>, vector<16x16x64xf32>
    %42 = vector.extract_strided_slice %18 {offsets = [1, 0, 0], sizes = [1, 1, 64], strides = [1, 1, 1]} : vector<3x3x64xf32> to vector<1x1x64xf32>
    %43 = vector.shape_cast %42 : vector<1x1x64xf32> to vector<64xf32>
    %44 = vector.shape_cast %43 : vector<64xf32> to vector<1x1x64xf32>
    %45 = vector.broadcast %44 : vector<1x1x64xf32> to vector<16x16x64xf32>
    %46 = arith.mulf %41, %45 : vector<16x16x64xf32>
    %47 = arith.addf %40, %46 : vector<16x16x64xf32>
    %c1_37 = arith.constant 1 : index
    %c1_38 = arith.constant 1 : index
    %c0_39 = arith.constant 0 : index
    %48 = vector.load %arg19[%c1_37, %c1_38, %c0_39] : memref<18x18x64xf32, #tpu.memory_space<vmem>>, vector<16x16x64xf32>
    %49 = vector.extract_strided_slice %18 {offsets = [1, 1, 0], sizes = [1, 1, 64], strides = [1, 1, 1]} : vector<3x3x64xf32> to vector<1x1x64xf32>
    %50 = vector.shape_cast %49 : vector<1x1x64xf32> to vector<64xf32>
    %51 = vector.shape_cast %50 : vector<64xf32> to vector<1x1x64xf32>
    %52 = vector.broadcast %51 : vector<1x1x64xf32> to vector<16x16x64xf32>
    %53 = arith.mulf %48, %52 : vector<16x16x64xf32>
    %54 = arith.addf %47, %53 : vector<16x16x64xf32>
    %c1_40 = arith.constant 1 : index
    %c2_41 = arith.constant 2 : index
    %c0_42 = arith.constant 0 : index
    %55 = vector.load %arg19[%c1_40, %c2_41, %c0_42] : memref<18x18x64xf32, #tpu.memory_space<vmem>>, vector<16x16x64xf32>
    %56 = vector.extract_strided_slice %18 {offsets = [1, 2, 0], sizes = [1, 1, 64], strides = [1, 1, 1]} : vector<3x3x64xf32> to vector<1x1x64xf32>
    %57 = vector.shape_cast %56 : vector<1x1x64xf32> to vector<64xf32>
    %58 = vector.shape_cast %57 : vector<64xf32> to vector<1x1x64xf32>
    %59 = vector.broadcast %58 : vector<1x1x64xf32> to vector<16x16x64xf32>
    %60 = arith.mulf %55, %59 : vector<16x16x64xf32>
    %61 = arith.addf %54, %60 : vector<16x16x64xf32>
    %c2_43 = arith.constant 2 : index
    %c0_44 = arith.constant 0 : index
    %c0_45 = arith.constant 0 : index
    %62 = vector.load %arg19[%c2_43, %c0_44, %c0_45] : memref<18x18x64xf32, #tpu.memory_space<vmem>>, vector<16x16x64xf32>
    %63 = vector.extract_strided_slice %18 {offsets = [2, 0, 0], sizes = [1, 1, 64], strides = [1, 1, 1]} : vector<3x3x64xf32> to vector<1x1x64xf32>
    %64 = vector.shape_cast %63 : vector<1x1x64xf32> to vector<64xf32>
    %65 = vector.shape_cast %64 : vector<64xf32> to vector<1x1x64xf32>
    %66 = vector.broadcast %65 : vector<1x1x64xf32> to vector<16x16x64xf32>
    %67 = arith.mulf %62, %66 : vector<16x16x64xf32>
    %68 = arith.addf %61, %67 : vector<16x16x64xf32>
    %c2_46 = arith.constant 2 : index
    %c1_47 = arith.constant 1 : index
    %c0_48 = arith.constant 0 : index
    %69 = vector.load %arg19[%c2_46, %c1_47, %c0_48] : memref<18x18x64xf32, #tpu.memory_space<vmem>>, vector<16x16x64xf32>
    %70 = vector.extract_strided_slice %18 {offsets = [2, 1, 0], sizes = [1, 1, 64], strides = [1, 1, 1]} : vector<3x3x64xf32> to vector<1x1x64xf32>
    %71 = vector.shape_cast %70 : vector<1x1x64xf32> to vector<64xf32>
    %72 = vector.shape_cast %71 : vector<64xf32> to vector<1x1x64xf32>
    %73 = vector.broadcast %72 : vector<1x1x64xf32> to vector<16x16x64xf32>
    %74 = arith.mulf %69, %73 : vector<16x16x64xf32>
    %75 = arith.addf %68, %74 : vector<16x16x64xf32>
    %c2_49 = arith.constant 2 : index
    %c2_50 = arith.constant 2 : index
    %c0_51 = arith.constant 0 : index
    %76 = vector.load %arg19[%c2_49, %c2_50, %c0_51] : memref<18x18x64xf32, #tpu.memory_space<vmem>>, vector<16x16x64xf32>
    %77 = vector.extract_strided_slice %18 {offsets = [2, 2, 0], sizes = [1, 1, 64], strides = [1, 1, 1]} : vector<3x3x64xf32> to vector<1x1x64xf32>
    %78 = vector.shape_cast %77 : vector<1x1x64xf32> to vector<64xf32>
    %79 = vector.shape_cast %78 : vector<64xf32> to vector<1x1x64xf32>
    %80 = vector.broadcast %79 : vector<1x1x64xf32> to vector<16x16x64xf32>
    %81 = arith.mulf %76, %80 : vector<16x16x64xf32>
    %82 = arith.addf %75, %81 : vector<16x16x64xf32>
    %c0_52 = arith.constant 0 : index
    %c0_53 = arith.constant 0 : index
    %83 = vector.load %arg5[%c0_52, %c0_53] : memref<1x64xf32, #tpu.memory_space<vmem>>, vector<1x64xf32>
    %84 = vector.shape_cast %83 : vector<1x64xf32> to vector<64xf32>
    %85 = vector.shape_cast %84 : vector<64xf32> to vector<1x1x64xf32>
    %86 = vector.broadcast %85 : vector<1x1x64xf32> to vector<16x16x64xf32>
    %87 = arith.addf %82, %86 : vector<16x16x64xf32>
    %cst_54 = arith.constant 0.000000e+00 : f32
    %88 = vector.broadcast %cst_54 : f32 to vector<16x16x64xf32>
    %89 = arith.maximumf %87, %88 : vector<16x16x64xf32>
    %90 = vector.shape_cast %89 : vector<16x16x64xf32> to vector<256x64xf32>
    %c0_55 = arith.constant 0 : index
    %c0_56 = arith.constant 0 : index
    %91 = vector.load %arg6[%c0_55, %c0_56] : memref<64x16xf32, #tpu.memory_space<vmem>>, vector<64x16xf32>
    %cst_57 = arith.constant dense<0.000000e+00> : vector<256x16xf32>
    %92 = tpu.matmul %90, %91, %cst_57 {dimension_numbers = #tpu.dot_dimension_numbers<[1], [0], [0], [1], [0, 0, 1, 1], [], []>} : vector<256x64xf32>, vector<64x16xf32>, vector<256x16xf32> -> vector<256x16xf32>
    %c0_58 = arith.constant 0 : index
    %c0_59 = arith.constant 0 : index
    %93 = vector.load %arg7[%c0_58, %c0_59] : memref<1x16xf32, #tpu.memory_space<vmem>>, vector<1x16xf32>
    %94 = vector.shape_cast %93 : vector<1x16xf32> to vector<16xf32>
    %95 = vector.shape_cast %94 : vector<16xf32> to vector<1x16xf32>
    %96 = vector.broadcast %95 : vector<1x16xf32> to vector<256x16xf32>
    %97 = arith.addf %92, %96 : vector<256x16xf32>
    %cst_60 = arith.constant dense<0.000000e+00> : vector<16x64xf32>
    %98 = vector.multi_reduction <add>, %10, %cst_60 [1] : vector<16x16x64xf32> to vector<16x64xf32>
    %cst_61 = arith.constant 1.600000e+01 : f32
    %99 = vector.broadcast %cst_61 : f32 to vector<16x64xf32>
    %100 = arith.divf %98, %99 : vector<16x64xf32>
    %cst_62 = arith.constant dense<0.000000e+00> : vector<16x64xf32>
    %101 = vector.multi_reduction <add>, %10, %cst_62 [0] : vector<16x16x64xf32> to vector<16x64xf32>
    %cst_63 = arith.constant 1.600000e+01 : f32
    %102 = vector.broadcast %cst_63 : f32 to vector<16x64xf32>
    %103 = arith.divf %101, %102 : vector<16x64xf32>
    %104 = vector.extract_strided_slice %100 {offsets = [0, 0], sizes = [16, 16], strides = [1, 1]} : vector<16x64xf32> to vector<16x16xf32>
    %c0_64 = arith.constant 0 : index
    %c0_65 = arith.constant 0 : index
    %105 = vector.load %arg8[%c0_64, %c0_65] : memref<16x16xf32, #tpu.memory_space<vmem>>, vector<16x16xf32>
    %106 = arith.addf %104, %105 : vector<16x16xf32>
    %107 = vector.extract_strided_slice %100 {offsets = [0, 16], sizes = [16, 16], strides = [1, 1]} : vector<16x64xf32> to vector<16x16xf32>
    %c0_66 = arith.constant 0 : index
    %c0_67 = arith.constant 0 : index
    %108 = vector.load %arg9[%c0_66, %c0_67] : memref<16x16xf32, #tpu.memory_space<vmem>>, vector<16x16xf32>
    %109 = arith.addf %107, %108 : vector<16x16xf32>
    %110 = vector.extract_strided_slice %100 {offsets = [0, 32], sizes = [16, 32], strides = [1, 1]} : vector<16x64xf32> to vector<16x32xf32>
    %111 = vector.extract_strided_slice %103 {offsets = [0, 0], sizes = [16, 16], strides = [1, 1]} : vector<16x64xf32> to vector<16x16xf32>
    %c0_68 = arith.constant 0 : index
    %c0_69 = arith.constant 0 : index
    %112 = vector.load %arg10[%c0_68, %c0_69] : memref<16x16xf32, #tpu.memory_space<vmem>>, vector<16x16xf32>
    %113 = arith.addf %111, %112 : vector<16x16xf32>
    %114 = vector.extract_strided_slice %103 {offsets = [0, 16], sizes = [16, 16], strides = [1, 1]} : vector<16x64xf32> to vector<16x16xf32>
    %c0_70 = arith.constant 0 : index
    %c0_71 = arith.constant 0 : index
    %115 = vector.load %arg11[%c0_70, %c0_71] : memref<16x16xf32, #tpu.memory_space<vmem>>, vector<16x16xf32>
    %116 = arith.addf %114, %115 : vector<16x16xf32>
    %117 = vector.extract_strided_slice %103 {offsets = [0, 32], sizes = [16, 32], strides = [1, 1]} : vector<16x64xf32> to vector<16x32xf32>
    %118 = vector.extract_strided_slice %106 {offsets = [0, 0], sizes = [16, 8], strides = [1, 1]} : vector<16x16xf32> to vector<16x8xf32>
    %119 = vector.extract_strided_slice %109 {offsets = [0, 0], sizes = [16, 8], strides = [1, 1]} : vector<16x16xf32> to vector<16x8xf32>
    %120 = vector.extract_strided_slice %110 {offsets = [0, 0], sizes = [16, 16], strides = [1, 1]} : vector<16x32xf32> to vector<16x16xf32>
    "tpu.trace_start"() <{level = 10 : i32, message = "ic,jc->ij"}> : () -> ()
    %cst_72 = arith.constant dense<0.000000e+00> : vector<16x16xf32>
    %121 = tpu.matmul %118, %119, %cst_72 {dimension_numbers = #tpu.dot_dimension_numbers<[1], [1], [0], [0], [0, 0, 1, 0], [], []>} : vector<16x8xf32>, vector<16x8xf32>, vector<16x16xf32> -> vector<16x16xf32>
    "tpu.trace_stop"() : () -> ()
    %cst_73 = arith.constant 0.353553385 : f32
    %122 = vector.broadcast %cst_73 : f32 to vector<16x16xf32>
    %123 = arith.mulf %121, %122 : vector<16x16xf32>
    %cst_74 = arith.constant dense<0xFF800000> : vector<16xf32>
    %124 = vector.multi_reduction <maximumf>, %123, %cst_74 [1] : vector<16x16xf32> to vector<16xf32>
    %125 = vector.shape_cast %124 : vector<16xf32> to vector<16x1xf32>
    %126 = vector.broadcast %125 : vector<16x1xf32> to vector<16x16xf32>
    %127 = arith.subf %123, %126 : vector<16x16xf32>
    %128 = math.exp %127 : vector<16x16xf32>
    %cst_75 = arith.constant dense<0.000000e+00> : vector<16xf32>
    %129 = vector.multi_reduction <add>, %128, %cst_75 [1] : vector<16x16xf32> to vector<16xf32>
    %130 = vector.shape_cast %129 : vector<16xf32> to vector<16x1xf32>
    %131 = vector.broadcast %130 : vector<16x1xf32> to vector<16x16xf32>
    %132 = arith.divf %128, %131 : vector<16x16xf32>
    %cst_76 = arith.constant dense<0.000000e+00> : vector<16x16xf32>
    %133 = tpu.matmul %132, %120, %cst_76 {dimension_numbers = #tpu.dot_dimension_numbers<[1], [0], [0], [1], [0, 0, 1, 1], [], []>} : vector<16x16xf32>, vector<16x16xf32>, vector<16x16xf32> -> vector<16x16xf32>
    %134 = vector.extract_strided_slice %106 {offsets = [0, 8], sizes = [16, 8], strides = [1, 1]} : vector<16x16xf32> to vector<16x8xf32>
    %135 = vector.extract_strided_slice %109 {offsets = [0, 8], sizes = [16, 8], strides = [1, 1]} : vector<16x16xf32> to vector<16x8xf32>
    %136 = vector.extract_strided_slice %110 {offsets = [0, 16], sizes = [16, 16], strides = [1, 1]} : vector<16x32xf32> to vector<16x16xf32>
    "tpu.trace_start"() <{level = 10 : i32, message = "ic,jc->ij"}> : () -> ()
    %cst_77 = arith.constant dense<0.000000e+00> : vector<16x16xf32>
    %137 = tpu.matmul %134, %135, %cst_77 {dimension_numbers = #tpu.dot_dimension_numbers<[1], [1], [0], [0], [0, 0, 1, 0], [], []>} : vector<16x8xf32>, vector<16x8xf32>, vector<16x16xf32> -> vector<16x16xf32>
    "tpu.trace_stop"() : () -> ()
    %cst_78 = arith.constant 0.353553385 : f32
    %138 = vector.broadcast %cst_78 : f32 to vector<16x16xf32>
    %139 = arith.mulf %137, %138 : vector<16x16xf32>
    %cst_79 = arith.constant dense<0xFF800000> : vector<16xf32>
    %140 = vector.multi_reduction <maximumf>, %139, %cst_79 [1] : vector<16x16xf32> to vector<16xf32>
    %141 = vector.shape_cast %140 : vector<16xf32> to vector<16x1xf32>
    %142 = vector.broadcast %141 : vector<16x1xf32> to vector<16x16xf32>
    %143 = arith.subf %139, %142 : vector<16x16xf32>
    %144 = math.exp %143 : vector<16x16xf32>
    %cst_80 = arith.constant dense<0.000000e+00> : vector<16xf32>
    %145 = vector.multi_reduction <add>, %144, %cst_80 [1] : vector<16x16xf32> to vector<16xf32>
    %146 = vector.shape_cast %145 : vector<16xf32> to vector<16x1xf32>
    %147 = vector.broadcast %146 : vector<16x1xf32> to vector<16x16xf32>
    %148 = arith.divf %144, %147 : vector<16x16xf32>
    %cst_81 = arith.constant dense<0.000000e+00> : vector<16x16xf32>
    %149 = tpu.matmul %148, %136, %cst_81 {dimension_numbers = #tpu.dot_dimension_numbers<[1], [0], [0], [1], [0, 0, 1, 1], [], []>} : vector<16x16xf32>, vector<16x16xf32>, vector<16x16xf32> -> vector<16x16xf32>
    %150 = tpu.concatenate %133, %149 in 1 : vector<16x16xf32>, vector<16x16xf32> -> vector<16x32xf32>
    %151 = vector.extract_strided_slice %113 {offsets = [0, 0], sizes = [16, 8], strides = [1, 1]} : vector<16x16xf32> to vector<16x8xf32>
    %152 = vector.extract_strided_slice %116 {offsets = [0, 0], sizes = [16, 8], strides = [1, 1]} : vector<16x16xf32> to vector<16x8xf32>
    %153 = vector.extract_strided_slice %117 {offsets = [0, 0], sizes = [16, 16], strides = [1, 1]} : vector<16x32xf32> to vector<16x16xf32>
    "tpu.trace_start"() <{level = 10 : i32, message = "ic,jc->ij"}> : () -> ()
    %cst_82 = arith.constant dense<0.000000e+00> : vector<16x16xf32>
    %154 = tpu.matmul %151, %152, %cst_82 {dimension_numbers = #tpu.dot_dimension_numbers<[1], [1], [0], [0], [0, 0, 1, 0], [], []>} : vector<16x8xf32>, vector<16x8xf32>, vector<16x16xf32> -> vector<16x16xf32>
    "tpu.trace_stop"() : () -> ()
    %cst_83 = arith.constant 0.353553385 : f32
    %155 = vector.broadcast %cst_83 : f32 to vector<16x16xf32>
    %156 = arith.mulf %154, %155 : vector<16x16xf32>
    %cst_84 = arith.constant dense<0xFF800000> : vector<16xf32>
    %157 = vector.multi_reduction <maximumf>, %156, %cst_84 [1] : vector<16x16xf32> to vector<16xf32>
    %158 = vector.shape_cast %157 : vector<16xf32> to vector<16x1xf32>
    %159 = vector.broadcast %158 : vector<16x1xf32> to vector<16x16xf32>
    %160 = arith.subf %156, %159 : vector<16x16xf32>
    %161 = math.exp %160 : vector<16x16xf32>
    %cst_85 = arith.constant dense<0.000000e+00> : vector<16xf32>
    %162 = vector.multi_reduction <add>, %161, %cst_85 [1] : vector<16x16xf32> to vector<16xf32>
    %163 = vector.shape_cast %162 : vector<16xf32> to vector<16x1xf32>
    %164 = vector.broadcast %163 : vector<16x1xf32> to vector<16x16xf32>
    %165 = arith.divf %161, %164 : vector<16x16xf32>
    %cst_86 = arith.constant dense<0.000000e+00> : vector<16x16xf32>
    %166 = tpu.matmul %165, %153, %cst_86 {dimension_numbers = #tpu.dot_dimension_numbers<[1], [0], [0], [1], [0, 0, 1, 1], [], []>} : vector<16x16xf32>, vector<16x16xf32>, vector<16x16xf32> -> vector<16x16xf32>
    %167 = vector.extract_strided_slice %113 {offsets = [0, 8], sizes = [16, 8], strides = [1, 1]} : vector<16x16xf32> to vector<16x8xf32>
    %168 = vector.extract_strided_slice %116 {offsets = [0, 8], sizes = [16, 8], strides = [1, 1]} : vector<16x16xf32> to vector<16x8xf32>
    %169 = vector.extract_strided_slice %117 {offsets = [0, 16], sizes = [16, 16], strides = [1, 1]} : vector<16x32xf32> to vector<16x16xf32>
    "tpu.trace_start"() <{level = 10 : i32, message = "ic,jc->ij"}> : () -> ()
    %cst_87 = arith.constant dense<0.000000e+00> : vector<16x16xf32>
    %170 = tpu.matmul %167, %168, %cst_87 {dimension_numbers = #tpu.dot_dimension_numbers<[1], [1], [0], [0], [0, 0, 1, 0], [], []>} : vector<16x8xf32>, vector<16x8xf32>, vector<16x16xf32> -> vector<16x16xf32>
    "tpu.trace_stop"() : () -> ()
    %cst_88 = arith.constant 0.353553385 : f32
    %171 = vector.broadcast %cst_88 : f32 to vector<16x16xf32>
    %172 = arith.mulf %170, %171 : vector<16x16xf32>
    %cst_89 = arith.constant dense<0xFF800000> : vector<16xf32>
    %173 = vector.multi_reduction <maximumf>, %172, %cst_89 [1] : vector<16x16xf32> to vector<16xf32>
    %174 = vector.shape_cast %173 : vector<16xf32> to vector<16x1xf32>
    %175 = vector.broadcast %174 : vector<16x1xf32> to vector<16x16xf32>
    %176 = arith.subf %172, %175 : vector<16x16xf32>
    %177 = math.exp %176 : vector<16x16xf32>
    %cst_90 = arith.constant dense<0.000000e+00> : vector<16xf32>
    %178 = vector.multi_reduction <add>, %177, %cst_90 [1] : vector<16x16xf32> to vector<16xf32>
    %179 = vector.shape_cast %178 : vector<16xf32> to vector<16x1xf32>
    %180 = vector.broadcast %179 : vector<16x1xf32> to vector<16x16xf32>
    %181 = arith.divf %177, %180 : vector<16x16xf32>
    %cst_91 = arith.constant dense<0.000000e+00> : vector<16x16xf32>
    %182 = tpu.matmul %181, %169, %cst_91 {dimension_numbers = #tpu.dot_dimension_numbers<[1], [0], [0], [1], [0, 0, 1, 1], [], []>} : vector<16x16xf32>, vector<16x16xf32>, vector<16x16xf32> -> vector<16x16xf32>
    %183 = tpu.concatenate %166, %182 in 1 : vector<16x16xf32>, vector<16x16xf32> -> vector<16x32xf32>
    %cst_92 = arith.constant 0.000000e+00 : f32
    %184 = vector.broadcast %cst_92 : f32 to vector<16x32xf32>
    %185 = arith.maximumf %150, %184 : vector<16x32xf32>
    %c0_93 = arith.constant 0 : index
    %c0_94 = arith.constant 0 : index
    %186 = vector.load %arg12[%c0_93, %c0_94] : memref<32x32xf32, #tpu.memory_space<vmem>>, vector<32x32xf32>
    %cst_95 = arith.constant dense<0.000000e+00> : vector<16x32xf32>
    %187 = tpu.matmul %185, %186, %cst_95 {dimension_numbers = #tpu.dot_dimension_numbers<[1], [0], [0], [1], [0, 0, 1, 1], [], []>} : vector<16x32xf32>, vector<32x32xf32>, vector<16x32xf32> -> vector<16x32xf32>
    %c0_96 = arith.constant 0 : index
    %c0_97 = arith.constant 0 : index
    %188 = vector.load %arg13[%c0_96, %c0_97] : memref<1x32xf32, #tpu.memory_space<vmem>>, vector<1x32xf32>
    %189 = vector.shape_cast %188 : vector<1x32xf32> to vector<32xf32>
    %190 = vector.shape_cast %189 : vector<32xf32> to vector<1x32xf32>
    %191 = vector.broadcast %190 : vector<1x32xf32> to vector<16x32xf32>
    %192 = arith.addf %187, %191 : vector<16x32xf32>
    %cst_98 = arith.constant 0.000000e+00 : f32
    %193 = vector.broadcast %cst_98 : f32 to vector<16x32xf32>
    %194 = arith.maximumf %183, %193 : vector<16x32xf32>
    %c0_99 = arith.constant 0 : index
    %c0_100 = arith.constant 0 : index
    %195 = vector.load %arg14[%c0_99, %c0_100] : memref<32x32xf32, #tpu.memory_space<vmem>>, vector<32x32xf32>
    %cst_101 = arith.constant dense<0.000000e+00> : vector<16x32xf32>
    %196 = tpu.matmul %194, %195, %cst_101 {dimension_numbers = #tpu.dot_dimension_numbers<[1], [0], [0], [1], [0, 0, 1, 1], [], []>} : vector<16x32xf32>, vector<32x32xf32>, vector<16x32xf32> -> vector<16x32xf32>
    %c0_102 = arith.constant 0 : index
    %c0_103 = arith.constant 0 : index
    %197 = vector.load %arg15[%c0_102, %c0_103] : memref<1x32xf32, #tpu.memory_space<vmem>>, vector<1x32xf32>
    %198 = vector.shape_cast %197 : vector<1x32xf32> to vector<32xf32>
    %199 = vector.shape_cast %198 : vector<32xf32> to vector<1x32xf32>
    %200 = vector.broadcast %199 : vector<1x32xf32> to vector<16x32xf32>
    %201 = arith.addf %196, %200 : vector<16x32xf32>
    %202 = vector.extract_strided_slice %10 {offsets = [0, 0, 32], sizes = [16, 16, 32], strides = [1, 1, 1]} : vector<16x16x64xf32> to vector<16x16x32xf32>
    %203 = vector.shape_cast %192 : vector<16x32xf32> to vector<16x1x32xf32>
    %204 = vector.broadcast %203 : vector<16x1x32xf32> to vector<16x16x32xf32>
    %205 = arith.addf %202, %204 : vector<16x16x32xf32>
    %206 = vector.shape_cast %201 : vector<16x32xf32> to vector<1x16x32xf32>
    %207 = vector.broadcast %206 : vector<1x16x32xf32> to vector<16x16x32xf32>
    %208 = arith.addf %205, %207 : vector<16x16x32xf32>
    %cst_104 = arith.constant 0.000000e+00 : f32
    %209 = vector.broadcast %cst_104 : f32 to vector<16x16x32xf32>
    %210 = arith.maximumf %208, %209 : vector<16x16x32xf32>
    %211 = vector.shape_cast %210 : vector<16x16x32xf32> to vector<256x32xf32>
    %c0_105 = arith.constant 0 : index
    %c0_106 = arith.constant 0 : index
    %212 = vector.load %arg16[%c0_105, %c0_106] : memref<32x16xf32, #tpu.memory_space<vmem>>, vector<32x16xf32>
    %cst_107 = arith.constant dense<0.000000e+00> : vector<256x16xf32>
    %213 = tpu.matmul %211, %212, %cst_107 {dimension_numbers = #tpu.dot_dimension_numbers<[1], [0], [0], [1], [0, 0, 1, 1], [], []>} : vector<256x32xf32>, vector<32x16xf32>, vector<256x16xf32> -> vector<256x16xf32>
    %c0_108 = arith.constant 0 : index
    %c0_109 = arith.constant 0 : index
    %214 = vector.load %arg17[%c0_108, %c0_109] : memref<1x16xf32, #tpu.memory_space<vmem>>, vector<1x16xf32>
    %215 = vector.shape_cast %214 : vector<1x16xf32> to vector<16xf32>
    %216 = vector.shape_cast %215 : vector<16xf32> to vector<1x16xf32>
    %217 = vector.broadcast %216 : vector<1x16xf32> to vector<256x16xf32>
    %218 = arith.addf %213, %217 : vector<256x16xf32>
    %cst_110 = arith.constant 3.000000e+00 : f32
    %219 = vector.broadcast %cst_110 : f32 to vector<256x16xf32>
    %220 = arith.addf %218, %219 : vector<256x16xf32>
    %cst_111 = arith.constant 0.000000e+00 : f32
    %cst_112 = arith.constant 6.000000e+00 : f32
    %221 = vector.broadcast %cst_111 : f32 to vector<256x16xf32>
    %222 = arith.maximumf %221, %220 : vector<256x16xf32>
    %223 = vector.broadcast %cst_112 : f32 to vector<256x16xf32>
    %224 = arith.minimumf %223, %222 : vector<256x16xf32>
    %cst_113 = arith.constant 0.166666672 : f32
    %225 = vector.broadcast %cst_113 : f32 to vector<256x16xf32>
    %226 = arith.mulf %224, %225 : vector<256x16xf32>
    %227 = arith.mulf %226, %97 : vector<256x16xf32>
    %228 = vector.shape_cast %227 : vector<256x16xf32> to vector<1x16x16x16xf32>
    %c0_114 = arith.constant 0 : index
    %c0_115 = arith.constant 0 : index
    %c0_116 = arith.constant 0 : index
    %c0_117 = arith.constant 0 : index
    %229 = vector.load %arg18[%c0_114, %c0_115, %c0_116, %c0_117] : memref<1x16x16x16xf32, #tpu.memory_space<vmem>>, vector<1x16x16x16xf32>
    tpu.vector_store %arg18[%c0_114, %c0_115, %c0_116, %c0_117], %228 {strides = array<i32>} : memref<1x16x16x16xf32, #tpu.memory_space<vmem>>, vector<1x16x16x16xf32>,
    return
  }
  func.func @transform_0(%arg0: i32) -> (i32, i32, i32, i32) {
    %c0_i32 = arith.constant 0 : i32
    %c0_i32_0 = arith.constant 0 : i32
    %c0_i32_1 = arith.constant 0 : i32
    %c0_i32_2 = arith.constant 0 : i32
    return %arg0, %c0_i32, %c0_i32_0, %c0_i32_1 : i32, i32, i32, i32
  }
  func.func @transform_1(%arg0: i32) -> (i32, i32) {
    %c0_i32 = arith.constant 0 : i32
    %c0_i32_0 = arith.constant 0 : i32
    %c0_i32_1 = arith.constant 0 : i32
    return %c0_i32, %c0_i32_0 : i32, i32
  }
  func.func @transform_2(%arg0: i32) -> (i32, i32) {
    %c0_i32 = arith.constant 0 : i32
    %c0_i32_0 = arith.constant 0 : i32
    %c0_i32_1 = arith.constant 0 : i32
    return %c0_i32, %c0_i32_0 : i32, i32
  }
  func.func @transform_3(%arg0: i32) -> (i32, i32, i32) {
    %c0_i32 = arith.constant 0 : i32
    %c0_i32_0 = arith.constant 0 : i32
    %c0_i32_1 = arith.constant 0 : i32
    %c0_i32_2 = arith.constant 0 : i32
    return %c0_i32, %c0_i32_0, %c0_i32_1 : i32, i32, i32
  }
  func.func @transform_4(%arg0: i32) -> (i32, i32) {
    %c0_i32 = arith.constant 0 : i32
    %c0_i32_0 = arith.constant 0 : i32
    %c0_i32_1 = arith.constant 0 : i32
    return %c0_i32, %c0_i32_0 : i32, i32
  }
  func.func @transform_5(%arg0: i32) -> (i32, i32) {
    %c0_i32 = arith.constant 0 : i32
    %c0_i32_0 = arith.constant 0 : i32
    %c0_i32_1 = arith.constant 0 : i32
    return %c0_i32, %c0_i32_0 : i32, i32
  }
  func.func @transform_6(%arg0: i32) -> (i32, i32) {
    %c0_i32 = arith.constant 0 : i32
    %c0_i32_0 = arith.constant 0 : i32
    %c0_i32_1 = arith.constant 0 : i32
    return %c0_i32, %c0_i32_0 : i32, i32
  }
  func.func @transform_7(%arg0: i32) -> (i32, i32) {
    %c0_i32 = arith.constant 0 : i32
    %c0_i32_0 = arith.constant 0 : i32
    %c0_i32_1 = arith.constant 0 : i32
    return %c0_i32, %c0_i32_0 : i32, i32
  }
  func.func @transform_8(%arg0: i32) -> (i32, i32) {
    %c0_i32 = arith.constant 0 : i32
    %c0_i32_0 = arith.constant 0 : i32
    %c0_i32_1 = arith.constant 0 : i32
    return %c0_i32, %c0_i32_0 : i32, i32
  }
  func.func @transform_9(%arg0: i32) -> (i32, i32) {
    %c0_i32 = arith.constant 0 : i32
    %c0_i32_0 = arith.constant 0 : i32
    %c0_i32_1 = arith.constant 0 : i32
    return %c0_i32, %c0_i32_0 : i32, i32
  }
  func.func @transform_10(%arg0: i32) -> (i32, i32) {
    %c0_i32 = arith.constant 0 : i32
    %c0_i32_0 = arith.constant 0 : i32
    %c0_i32_1 = arith.constant 0 : i32
    return %c0_i32, %c0_i32_0 : i32, i32
  }
  func.func @transform_11(%arg0: i32) -> (i32, i32) {
    %c0_i32 = arith.constant 0 : i32
    %c0_i32_0 = arith.constant 0 : i32
    %c0_i32_1 = arith.constant 0 : i32
    return %c0_i32, %c0_i32_0 : i32, i32
  }
  func.func @transform_12(%arg0: i32) -> (i32, i32) {
    %c0_i32 = arith.constant 0 : i32
    %c0_i32_0 = arith.constant 0 : i32
    %c0_i32_1 = arith.constant 0 : i32
    return %c0_i32, %c0_i32_0 : i32, i32
  }
  func.func @transform_13(%arg0: i32) -> (i32, i32) {
    %c0_i32 = arith.constant 0 : i32
    %c0_i32_0 = arith.constant 0 : i32
    %c0_i32_1 = arith.constant 0 : i32
    return %c0_i32, %c0_i32_0 : i32, i32
  }
  func.func @transform_14(%arg0: i32) -> (i32, i32) {
    %c0_i32 = arith.constant 0 : i32
    %c0_i32_0 = arith.constant 0 : i32
    %c0_i32_1 = arith.constant 0 : i32
    return %c0_i32, %c0_i32_0 : i32, i32
  }
  func.func @transform_15(%arg0: i32) -> (i32, i32) {
    %c0_i32 = arith.constant 0 : i32
    %c0_i32_0 = arith.constant 0 : i32
    %c0_i32_1 = arith.constant 0 : i32
    return %c0_i32, %c0_i32_0 : i32, i32
  }
  func.func @transform_16(%arg0: i32) -> (i32, i32) {
    %c0_i32 = arith.constant 0 : i32
    %c0_i32_0 = arith.constant 0 : i32
    %c0_i32_1 = arith.constant 0 : i32
    return %c0_i32, %c0_i32_0 : i32, i32
  }
  func.func @transform_17(%arg0: i32) -> (i32, i32, i32, i32) {
    %c0_i32 = arith.constant 0 : i32
    %c0_i32_0 = arith.constant 0 : i32
    %c0_i32_1 = arith.constant 0 : i32
    %c0_i32_2 = arith.constant 0 : i32
    return %arg0, %c0_i32, %c0_i32_0, %c0_i32_1 : i32, i32, i32, i32
  }
}

</mosaic_0001>

<llo_original>
// kernel: tpu_custom_call.1
$region0: #{tpu_custom_call.1}
  #allocation0 [shape = 'u32[]', space=smem, size = 0x4, offset = 0x4, fixed_abs, tag = 'smem constant byte address 0x4 - core index']
  #allocation1 [shape = 'u32[144,128]{1,0:T(1,128)}', space=vmem, size = 0x12000, scoped, tag = 'internal scratch']
  #allocation2 [shape = 'f32[18,18,64]{2,1,0:T(8,128)}', space=vmem, size = 0x36000, scoped, tag = 'scratch operand']
  %s0 = inlined_call_operand.hbm [shape: f32[2,16,16,16], index: 0, kind: input, shape index: {}]
  %s1 = inlined_call_operand.vmem [shape: f32[16,64], index: 1, kind: input, shape index: {}]
  %s2 = inlined_call_operand.vmem [shape: f32[1,64], index: 2, kind: input, shape index: {}]
  %s3 = inlined_call_operand.hbm [shape: f32[3,3,64], index: 3, kind: input, shape index: {}]
  %s4 = inlined_call_operand.vmem [shape: f32[1,64], index: 4, kind: input, shape index: {}]
  %s5 = inlined_call_operand.vmem [shape: f32[64,16], index: 5, kind: input, shape index: {}]
  %s6 = inlined_call_operand.hbm [shape: f32[1,16], index: 6, kind: input, shape index: {}]
  %s7 = inlined_call_operand.vmem [shape: f32[16,16], index: 7, kind: input, shape index: {}]
  %s8 = inlined_call_operand.vmem [shape: f32[16,16], index: 8, kind: input, shape index: {}]
  %s9 = inlined_call_operand.vmem [shape: f32[16,16], index: 9, kind: input, shape index: {}]
  %s10 = inlined_call_operand.vmem [shape: f32[16,16], index: 10, kind: input, shape index: {}]
  %s11 = inlined_call_operand.vmem [shape: f32[32,32], index: 11, kind: input, shape index: {}]
  %s12 = inlined_call_operand.vmem [shape: f32[1,32], index: 12, kind: input, shape index: {}]
  %s13 = inlined_call_operand.vmem [shape: f32[32,32], index: 13, kind: input, shape index: {}]
  %s14 = inlined_call_operand.vmem [shape: f32[1,32], index: 14, kind: input, shape index: {}]
  %s15 = inlined_call_operand.vmem [shape: f32[32,16], index: 15, kind: input, shape index: {}]
  %s16 = inlined_call_operand.vmem [shape: f32[1,16], index: 16, kind: input, shape index: {}]
  %s17 = inlined_call_operand.hbm [shape: f32[2,16,16,16], index: 17, kind: output, shape index: {}]
  %s18 = sld [smem:[#allocation0]]
  $region113: #{tpu_custom_call.1} parent=0
    _
  %s20 = ssub.s32 1, %s18
  %s21 = scalar_select 0, %s20, %s18
  $region1: #{tpu_custom_call.1} parent=0
    #allocation3 [shape = 'u8[262144]{0}', space=vmem, size = 0x40000, scoped, tag = 'input window, operand 0']
    #allocation4 [shape = 's32[2]{0}', space=sflag, size = 0x8, scoped, tag = 'scoped memory for tpu_custom_call.1']
    #allocation5 [shape = 's32[2]{0}', space=sflag, size = 0x8, scoped, tag = 'scoped memory for tpu_custom_call.1']
    #allocation6 [shape = 'u8[6144]{0}', space=vmem, size = 0x1800, scoped, tag = 'input window, operand 3, single buffered']
    #allocation7 [shape = 's32[1]{0}', space=sflag, size = 0x4, scoped, tag = 'scoped memory for tpu_custom_call.1']
    #allocation8 [shape = 'u8[512]{0}', space=vmem, size = 0x400, scoped, tag = 'input window, operand 6, single buffered']
    #allocation9 [shape = 'u8[262144]{0}', space=vmem, size = 0x40000, scoped, tag = 'output window, operand 0']
    %22 = vsyncpa [#allocation4], 0
    %s23 = scalar_lea.sflag [#allocation4], 1
    %24 = vsyncpa %s23, 0
    %25 = vsyncpa [#allocation7], 0
    %26 = vsyncpa [#allocation5], 0
    %s27 = scalar_lea.sflag [#allocation5], 1
    %28 = vsyncpa %s27, 0
    loop: start=0, step=1, limit=4
    $region2: #{tpu_custom_call.1} parent=1 // loop_pre_header
      _
    $region3: #{tpu_custom_call.1} parent=1 // loop_header
      %s30 = sphi 0, %s34
      %p31 = scmp.ge.s32.totalorder %s30, 4
      %s40 = sphi 0, %s42
      %s43 = sphi 0, %s40
      %s44 = sphi 0, %s43
      %s60 = sphi 0, %s44
      %s64 = sphi 0, %s64
      %s66 = sphi 0, %s64
      %s67 = sphi 0, %s66
      %s81 = sphi 0, %s67
      %s85 = sphi 0, %s85
      %s87 = sphi 0, %s85
      %s88 = sphi 0, %s87
      %s102 = sphi 0, %s88
      %s106 = sphi 0, %s106
      %s108 = sphi 0, %s106
      %s109 = sphi 0, %s108
      %s123 = sphi 0, %s109
      %s127 = sphi 0, %s127
      %s129 = sphi 0, %s127
      %s130 = sphi 0, %s129
      %s144 = sphi 0, %s130
      %s148 = sphi 0, %s148
      %s150 = sphi 0, %s148
      %s151 = sphi 0, %s150
      %s165 = sphi 0, %s151
      %s169 = sphi 0, %s169
      %s171 = sphi 0, %s169
      %s172 = sphi 0, %s171
      %s186 = sphi 0, %s172
      %s190 = sphi 0, %s190
      %s192 = sphi 0, %s190
      %s193 = sphi 0, %s192
      %s207 = sphi 0, %s193
      %s211 = sphi 0, %s211
      %s213 = sphi 0, %s211
      %s214 = sphi 0, %s213
      %s228 = sphi 0, %s214
      %s232 = sphi 0, %s232
      %s234 = sphi 0, %s232
      %s235 = sphi 0, %s234
      %s249 = sphi 0, %s235
      %s253 = sphi 0, %s253
      %s255 = sphi 0, %s253
      %s256 = sphi 0, %s255
      %s270 = sphi 0, %s256
      %s274 = sphi 0, %s274
      %s276 = sphi 0, %s274
      %s277 = sphi 0, %s276
      %s291 = sphi 0, %s277
      %s295 = sphi 0, %s295
      %s297 = sphi 0, %s295
      %s298 = sphi 0, %s297
      %s312 = sphi 0, %s298
      %s316 = sphi 0, %s316
      %s318 = sphi 0, %s316
      %s319 = sphi 0, %s318
      %s333 = sphi 0, %s319
      %s337 = sphi 0, %s337
      %s339 = sphi 0, %s337
      %s340 = sphi 0, %s339
      %s354 = sphi 0, %s340
      %s358 = sphi 0, %s358
      %s360 = sphi 0, %s358
      %s361 = sphi 0, %s360
      %s375 = sphi 0, %s361
      %s379 = sphi 0, %s379
      %s381 = sphi 0, %s379
      %s382 = sphi 0, %s381
      %s396 = sphi 0, %s382
      %s402 = sphi 0, %s404
      %s405 = sphi 0, %s402
      %s406 = sphi 0, %s405
      %s422 = sphi 0, %s406
    $region4: #{tpu_custom_call.1} parent=1 // loop_header_branch
      %33 = sbr.rel (%p31) target = $region8
    $region5: #{tpu_custom_call.1} parent=1 // loop_body
      %s35 = ssub.s32 %s30, 1
      %s36 = ssub.s32 %s30, 2
      %s37 = sadd.s32 %s30, 1
      %s38 = ssub.s32 %s30, %s37
      %p39 = scmp.eq.s32.totalorder %s38, 0
      %s41 = sadd.s32 %s40, 1
      %s42 = scalar_select %p39, %s40, %s41
      %p45 = pneg %p39
      %p46 = scmp.eq.s32.totalorder %s30, 1
      %p47 = por %p45, %p46
      %p48 = scmp.ne.s32.totalorder %s40, %s43
      %p49 = scmp.eq.s32.totalorder %s30, 0
      %p50 = por %p48, %p49
      %p51 = scmp.ne.s32.totalorder %s40, %s43
      %p52 = scmp.eq.s32.totalorder %s35, 1
      %p53 = por %p51, %p52
      %p54 = scmp.ne.s32.totalorder %s43, %s44
      %p55 = scmp.eq.s32.totalorder %s35, 0
      %p56 = por %p54, %p55
      %p57 = scmp.ne.s32.totalorder %s43, %s44
      %p58 = scmp.eq.s32.totalorder %s36, 1
      %p59 = por %p57, %p58
      %p61 = scmp.ne.s32.totalorder %s44, %s60
      %p62 = scmp.eq.s32.totalorder %s36, 0
      %p63 = por %p61, %p62
      %s65 = sadd.s32 %s64, 1
      %p68 = scmp.eq.s32.totalorder %s30, 1
      %p69 = scmp.ne.s32.totalorder %s64, %s66
      %p70 = scmp.eq.s32.totalorder %s30, 0
      %p71 = por %p69, %p70
      %p72 = scmp.ne.s32.totalorder %s64, %s66
      %p73 = scmp.eq.s32.totalorder %s35, 1
      %p74 = por %p72, %p73
      %p75 = scmp.ne.s32.totalorder %s66, %s67
      %p76 = scmp.eq.s32.totalorder %s35, 0
      %p77 = por %p75, %p76
      %p78 = scmp.ne.s32.totalorder %s66, %s67
      %p79 = scmp.eq.s32.totalorder %s36, 1
      %p80 = por %p78, %p79
      %p82 = scmp.ne.s32.totalorder %s67, %s81
      %p83 = scmp.eq.s32.totalorder %s36, 0
      %p84 = por %p82, %p83
      %s86 = sadd.s32 %s85, 1
      %p89 = scmp.eq.s32.totalorder %s30, 1
      %p90 = scmp.ne.s32.totalorder %s85, %s87
      %p91 = scmp.eq.s32.totalorder %s30, 0
      %p92 = por %p90, %p91
      %p93 = scmp.ne.s32.totalorder %s85, %s87
      %p94 = scmp.eq.s32.totalorder %s35, 1
      %p95 = por %p93, %p94
      %p96 = scmp.ne.s32.totalorder %s87, %s88
      %p97 = scmp.eq.s32.totalorder %s35, 0
      %p98 = por %p96, %p97
      %p99 = scmp.ne.s32.totalorder %s87, %s88
      %p100 = scmp.eq.s32.totalorder %s36, 1
      %p101 = por %p99, %p100
      %p103 = scmp.ne.s32.totalorder %s88, %s102
      %p104 = scmp.eq.s32.totalorder %s36, 0
      %p105 = por %p103, %p104
      %s107 = sadd.s32 %s106, 1
      %p110 = scmp.eq.s32.totalorder %s30, 1
      %p111 = scmp.ne.s32.totalorder %s106, %s108
      %p112 = scmp.eq.s32.totalorder %s30, 0
      %p113 = por %p111, %p112
      %p114 = scmp.ne.s32.totalorder %s106, %s108
      %p115 = scmp.eq.s32.totalorder %s35, 1
      %p116 = por %p114, %p115
      %p117 = scmp.ne.s32.totalorder %s108, %s109
      %p118 = scmp.eq.s32.totalorder %s35, 0
      %p119 = por %p117, %p118
      %p120 = scmp.ne.s32.totalorder %s108, %s109
      %p121 = scmp.eq.s32.totalorder %s36, 1
      %p122 = por %p120, %p121
      %p124 = scmp.ne.s32.totalorder %s109, %s123
      %p125 = scmp.eq.s32.totalorder %s36, 0
      %p126 = por %p124, %p125
      %s128 = sadd.s32 %s127, 1
      %p131 = scmp.eq.s32.totalorder %s30, 1
      %p132 = scmp.ne.s32.totalorder %s127, %s129
      %p133 = scmp.eq.s32.totalorder %s30, 0
      %p134 = por %p132, %p133
      %p135 = scmp.ne.s32.totalorder %s127, %s129
      %p136 = scmp.eq.s32.totalorder %s35, 1
      %p137 = por %p135, %p136
      %p138 = scmp.ne.s32.totalorder %s129, %s130
      %p139 = scmp.eq.s32.totalorder %s35, 0
      %p140 = por %p138, %p139
      %p141 = scmp.ne.s32.totalorder %s129, %s130
      %p142 = scmp.eq.s32.totalorder %s36, 1
      %p143 = por %p141, %p142
      %p145 = scmp.ne.s32.totalorder %s130, %s144
      %p146 = scmp.eq.s32.totalorder %s36, 0
      %p147 = por %p145, %p146
      %s149 = sadd.s32 %s148, 1
      %p152 = scmp.eq.s32.totalorder %s30, 1
      %p153 = scmp.ne.s32.totalorder %s148, %s150
      %p154 = scmp.eq.s32.totalorder %s30, 0
      %p155 = por %p153, %p154
      %p156 = scmp.ne.s32.totalorder %s148, %s150
      %p157 = scmp.eq.s32.totalorder %s35, 1
      %p158 = por %p156, %p157
      %p159 = scmp.ne.s32.totalorder %s150, %s151
      %p160 = scmp.eq.s32.totalorder %s35, 0
      %p161 = por %p159, %p160
      %p162 = scmp.ne.s32.totalorder %s150, %s151
      %p163 = scmp.eq.s32.totalorder %s36, 1
      %p164 = por %p162, %p163
      %p166 = scmp.ne.s32.totalorder %s151, %s165
      %p167 = scmp.eq.s32.totalorder %s36, 0
      %p168 = por %p166, %p167
      %s170 = sadd.s32 %s169, 1
      %p173 = scmp.eq.s32.totalorder %s30, 1
      %p174 = scmp.ne.s32.totalorder %s169, %s171
      %p175 = scmp.eq.s32.totalorder %s30, 0
      %p176 = por %p174, %p175
      %p177 = scmp.ne.s32.totalorder %s169, %s171
      %p178 = scmp.eq.s32.totalorder %s35, 1
      %p179 = por %p177, %p178
      %p180 = scmp.ne.s32.totalorder %s171, %s172
      %p181 = scmp.eq.s32.totalorder %s35, 0
      %p182 = por %p180, %p181
      %p183 = scmp.ne.s32.totalorder %s171, %s172
      %p184 = scmp.eq.s32.totalorder %s36, 1
      %p185 = por %p183, %p184
      %p187 = scmp.ne.s32.totalorder %s172, %s186
      %p188 = scmp.eq.s32.totalorder %s36, 0
      %p189 = por %p187, %p188
      %s191 = sadd.s32 %s190, 1
      %p194 = scmp.eq.s32.totalorder %s30, 1
      %p195 = scmp.ne.s32.totalorder %s190, %s192
      %p196 = scmp.eq.s32.totalorder %s30, 0
      %p197 = por %p195, %p196
      %p198 = scmp.ne.s32.totalorder %s190, %s192
      %p199 = scmp.eq.s32.totalorder %s35, 1
      %p200 = por %p198, %p199
      %p201 = scmp.ne.s32.totalorder %s192, %s193
      %p202 = scmp.eq.s32.totalorder %s35, 0
      %p203 = por %p201, %p202
      %p204 = scmp.ne.s32.totalorder %s192, %s193
      %p205 = scmp.eq.s32.totalorder %s36, 1
      %p206 = por %p204, %p205
      %p208 = scmp.ne.s32.totalorder %s193, %s207
      %p209 = scmp.eq.s32.totalorder %s36, 0
      %p210 = por %p208, %p209
      %s212 = sadd.s32 %s211, 1
      %p215 = scmp.eq.s32.totalorder %s30, 1
      %p216 = scmp.ne.s32.totalorder %s211, %s213
      %p217 = scmp.eq.s32.totalorder %s30, 0
      %p218 = por %p216, %p217
      %p219 = scmp.ne.s32.totalorder %s211, %s213
      %p220 = scmp.eq.s32.totalorder %s35, 1
      %p221 = por %p219, %p220
      %p222 = scmp.ne.s32.totalorder %s213, %s214
      %p223 = scmp.eq.s32.totalorder %s35, 0
      %p224 = por %p222, %p223
      %p225 = scmp.ne.s32.totalorder %s213, %s214
      %p226 = scmp.eq.s32.totalorder %s36, 1
      %p227 = por %p225, %p226
      %p229 = scmp.ne.s32.totalorder %s214, %s228
      %p230 = scmp.eq.s32.totalorder %s36, 0
      %p231 = por %p229, %p230
      %s233 = sadd.s32 %s232, 1
      %p236 = scmp.eq.s32.totalorder %s30, 1
      %p237 = scmp.ne.s32.totalorder %s232, %s234
      %p238 = scmp.eq.s32.totalorder %s30, 0
      %p239 = por %p237, %p238
      %p240 = scmp.ne.s32.totalorder %s232, %s234
      %p241 = scmp.eq.s32.totalorder %s35, 1
      %p242 = por %p240, %p241
      %p243 = scmp.ne.s32.totalorder %s234, %s235
      %p244 = scmp.eq.s32.totalorder %s35, 0
      %p245 = por %p243, %p244
      %p246 = scmp.ne.s32.totalorder %s234, %s235
      %p247 = scmp.eq.s32.totalorder %s36, 1
      %p248 = por %p246, %p247
      %p250 = scmp.ne.s32.totalorder %s235, %s249
      %p251 = scmp.eq.s32.totalorder %s36, 0
      %p252 = por %p250, %p251
      %s254 = sadd.s32 %s253, 1
      %p257 = scmp.eq.s32.totalorder %s30, 1
      %p258 = scmp.ne.s32.totalorder %s253, %s255
      %p259 = scmp.eq.s32.totalorder %s30, 0
      %p260 = por %p258, %p259
      %p261 = scmp.ne.s32.totalorder %s253, %s255
      %p262 = scmp.eq.s32.totalorder %s35, 1
      %p263 = por %p261, %p262
      %p264 = scmp.ne.s32.totalorder %s255, %s256
      %p265 = scmp.eq.s32.totalorder %s35, 0
      %p266 = por %p264, %p265
      %p267 = scmp.ne.s32.totalorder %s255, %s256
      %p268 = scmp.eq.s32.totalorder %s36, 1
      %p269 = por %p267, %p268
      %p271 = scmp.ne.s32.totalorder %s256, %s270
      %p272 = scmp.eq.s32.totalorder %s36, 0
      %p273 = por %p271, %p272
      %s275 = sadd.s32 %s274, 1
      %p278 = scmp.eq.s32.totalorder %s30, 1
      %p279 = scmp.ne.s32.totalorder %s274, %s276
      %p280 = scmp.eq.s32.totalorder %s30, 0
      %p281 = por %p279, %p280
      %p282 = scmp.ne.s32.totalorder %s274, %s276
      %p283 = scmp.eq.s32.totalorder %s35, 1
      %p284 = por %p282, %p283
      %p285 = scmp.ne.s32.totalorder %s276, %s277
      %p286 = scmp.eq.s32.totalorder %s35, 0
      %p287 = por %p285, %p286
      %p288 = scmp.ne.s32.totalorder %s276, %s277
      %p289 = scmp.eq.s32.totalorder %s36, 1
      %p290 = por %p288, %p289
      %p292 = scmp.ne.s32.totalorder %s277, %s291
      %p293 = scmp.eq.s32.totalorder %s36, 0
      %p294 = por %p292, %p293
      %s296 = sadd.s32 %s295, 1
      %p299 = scmp.eq.s32.totalorder %s30, 1
      %p300 = scmp.ne.s32.totalorder %s295, %s297
      %p301 = scmp.eq.s32.totalorder %s30, 0
      %p302 = por %p300, %p301
      %p303 = scmp.ne.s32.totalorder %s295, %s297
      %p304 = scmp.eq.s32.totalorder %s35, 1
      %p305 = por %p303, %p304
      %p306 = scmp.ne.s32.totalorder %s297, %s298
      %p307 = scmp.eq.s32.totalorder %s35, 0
      %p308 = por %p306, %p307
      %p309 = scmp.ne.s32.totalorder %s297, %s298
      %p310 = scmp.eq.s32.totalorder %s36, 1
      %p311 = por %p309, %p310
      %p313 = scmp.ne.s32.totalorder %s298, %s312
      %p314 = scmp.eq.s32.totalorder %s36, 0
      %p315 = por %p313, %p314
      %s317 = sadd.s32 %s316, 1
      %p320 = scmp.eq.s32.totalorder %s30, 1
      %p321 = scmp.ne.s32.totalorder %s316, %s318
      %p322 = scmp.eq.s32.totalorder %s30, 0
      %p323 = por %p321, %p322
      %p324 = scmp.ne.s32.totalorder %s316, %s318
      %p325 = scmp.eq.s32.totalorder %s35, 1
      %p326 = por %p324, %p325
      %p327 = scmp.ne.s32.totalorder %s318, %s319
      %p328 = scmp.eq.s32.totalorder %s35, 0
      %p329 = por %p327, %p328
      %p330 = scmp.ne.s32.totalorder %s318, %s319
      %p331 = scmp.eq.s32.totalorder %s36, 1
      %p332 = por %p330, %p331
      %p334 = scmp.ne.s32.totalorder %s319, %s333
      %p335 = scmp.eq.s32.totalorder %s36, 0
      %p336 = por %p334, %p335
      %s338 = sadd.s32 %s337, 1
      %p341 = scmp.eq.s32.totalorder %s30, 1
      %p342 = scmp.ne.s32.totalorder %s337, %s339
      %p343 = scmp.eq.s32.totalorder %s30, 0
      %p344 = por %p342, %p343
      %p345 = scmp.ne.s32.totalorder %s337, %s339
      %p346 = scmp.eq.s32.totalorder %s35, 1
      %p347 = por %p345, %p346
      %p348 = scmp.ne.s32.totalorder %s339, %s340
      %p349 = scmp.eq.s32.totalorder %s35, 0
      %p350 = por %p348, %p349
      %p351 = scmp.ne.s32.totalorder %s339, %s340
      %p352 = scmp.eq.s32.totalorder %s36, 1
      %p353 = por %p351, %p352
      %p355 = scmp.ne.s32.totalorder %s340, %s354
      %p356 = scmp.eq.s32.totalorder %s36, 0
      %p357 = por %p355, %p356
      %s359 = sadd.s32 %s358, 1
      %p362 = scmp.eq.s32.totalorder %s30, 1
      %p363 = scmp.ne.s32.totalorder %s358, %s360
      %p364 = scmp.eq.s32.totalorder %s30, 0
      %p365 = por %p363, %p364
      %p366 = scmp.ne.s32.totalorder %s358, %s360
      %p367 = scmp.eq.s32.totalorder %s35, 1
      %p368 = por %p366, %p367
      %p369 = scmp.ne.s32.totalorder %s360, %s361
      %p370 = scmp.eq.s32.totalorder %s35, 0
      %p371 = por %p369, %p370
      %p372 = scmp.ne.s32.totalorder %s360, %s361
      %p373 = scmp.eq.s32.totalorder %s36, 1
      %p374 = por %p372, %p373
      %p376 = scmp.ne.s32.totalorder %s361, %s375
      %p377 = scmp.eq.s32.totalorder %s36, 0
      %p378 = por %p376, %p377
      %s380 = sadd.s32 %s379, 1
      %p383 = scmp.eq.s32.totalorder %s30, 1
      %p384 = scmp.ne.s32.totalorder %s379, %s381
      %p385 = scmp.eq.s32.totalorder %s30, 0
      %p386 = por %p384, %p385
      %p387 = scmp.ne.s32.totalorder %s379, %s381
      %p388 = scmp.eq.s32.totalorder %s35, 1
      %p389 = por %p387, %p388
      %p390 = scmp.ne.s32.totalorder %s381, %s382
      %p391 = scmp.eq.s32.totalorder %s35, 0
      %p392 = por %p390, %p391
      %p393 = scmp.ne.s32.totalorder %s381, %s382
      %p394 = scmp.eq.s32.totalorder %s36, 1
      %p395 = por %p393, %p394
      %p397 = scmp.ne.s32.totalorder %s382, %s396
      %p398 = scmp.eq.s32.totalorder %s36, 0
      %p399 = por %p397, %p398
      %s400 = ssub.s32 %s30, %s37
      %p401 = scmp.eq.s32.totalorder %s400, 0
      %s403 = sadd.s32 %s402, 1
      %s404 = scalar_select %p401, %s402, %s403
      %p407 = pneg %p401
      %p408 = scmp.eq.s32.totalorder %s30, 1
      %p409 = por %p407, %p408
      %p410 = scmp.ne.s32.totalorder %s402, %s405
      %p411 = scmp.eq.s32.totalorder %s30, 0
      %p412 = por %p410, %p411
      %p413 = scmp.ne.s32.totalorder %s402, %s405
      %p414 = scmp.eq.s32.totalorder %s35, 1
      %p415 = por %p413, %p414
      %p416 = scmp.ne.s32.totalorder %s405, %s406
      %p417 = scmp.eq.s32.totalorder %s35, 0
      %p418 = por %p416, %p417
      %p419 = scmp.ne.s32.totalorder %s405, %s406
      %p420 = scmp.eq.s32.totalorder %s36, 1
      %p421 = por %p419, %p420
      %p423 = scmp.ne.s32.totalorder %s406, %s422
      %p424 = scmp.eq.s32.totalorder %s36, 0
      %p425 = por %p423, %p424
      %p426 = scmp.le.s32.totalorder 1, %s30
      %p427 = scmp.lt.s32.totalorder %s30, 3
      %p428 = pnand %p426, %p427
      %p429 = pneg %p428
      // Predicated region
      $region9: #{tpu_custom_call.1} parent=5 // pred_check
        _
      $region10: #{tpu_custom_call.1} parent=5 // pred_check_branch
        %431 = sbr.rel (%p428) target = $region12
      $region11: #{tpu_custom_call.1} parent=5 // pred_region
        %s432 = ssub.s32 %s30, 1
        // Predicated region
        $region13: #{tpu_custom_call.1} parent=11 // pred_check
          %p433 = pneg %p77
        $region14: #{tpu_custom_call.1} parent=11 // pred_check_branch
          %435 = sbr.rel (%p433) target = $region16
        $region15: #{tpu_custom_call.1} parent=11 // pred_region
          _
        $region16: #{tpu_custom_call.1} parent=11 // pred_fallthru
          _
        // Predicated region
        $region17: #{tpu_custom_call.1} parent=11 // pred_check
          %p436 = pneg %p98
        $region18: #{tpu_custom_call.1} parent=11 // pred_check_branch
          %438 = sbr.rel (%p436) target = $region20
        $region19: #{tpu_custom_call.1} parent=11 // pred_region
          _
        $region20: #{tpu_custom_call.1} parent=11 // pred_fallthru
          _
        // Predicated region
        $region21: #{tpu_custom_call.1} parent=11 // pred_check
          %p439 = pneg %p119
        $region22: #{tpu_custom_call.1} parent=11 // pred_check_branch
          %441 = sbr.rel (%p439) target = $region24
        $region23: #{tpu_custom_call.1} parent=11 // pred_region
          %s443 = ssub.s32 192, 192
          %444 = vsyncadd [#allocation7], %s443
          %s445 = sshll.u32 [#allocation6], 4
          %s446 = int_to_ptr.vmem [resolvable:$true] %s445
          %451 = dma.hbm_to_vmem [thread:$0]  %s3, 192, %s446, [#allocation7], 64, 64, 4
        $region24: #{tpu_custom_call.1} parent=11 // pred_fallthru
          _
        // Predicated region
        $region25: #{tpu_custom_call.1} parent=11 // pred_check
          %p452 = pneg %p140
        $region26: #{tpu_custom_call.1} parent=11 // pred_check_branch
          %454 = sbr.rel (%p452) target = $region28
        $region27: #{tpu_custom_call.1} parent=11 // pred_region
          _
        $region28: #{tpu_custom_call.1} parent=11 // pred_fallthru
          _
        // Predicated region
        $region29: #{tpu_custom_call.1} parent=11 // pred_check
          %p455 = pneg %p161
        $region30: #{tpu_custom_call.1} parent=11 // pred_check_branch
          %457 = sbr.rel (%p455) target = $region32
        $region31: #{tpu_custom_call.1} parent=11 // pred_region
          _
        $region32: #{tpu_custom_call.1} parent=11 // pred_fallthru
          _
        // Predicated region
        $region33: #{tpu_custom_call.1} parent=11 // pred_check
          %p458 = pneg %p182
        $region34: #{tpu_custom_call.1} parent=11 // pred_check_branch
          %460 = sbr.rel (%p458) target = $region36
        $region35: #{tpu_custom_call.1} parent=11 // pred_region
          %s462 = ssub.s32 16, 16
          %463 = vsyncadd [#allocation7], %s462
          %s465 = sshll.u32 [#allocation8], 4
          %s466 = int_to_ptr.vmem [resolvable:$true] %s465
          %468 = dma.hbm_to_vmem [thread:$0]  %s6, 16, %s466, [#allocation7]
        $region36: #{tpu_custom_call.1} parent=11 // pred_fallthru
          _
        // Predicated region
        $region37: #{tpu_custom_call.1} parent=11 // pred_check
          %p469 = pneg %p203
        $region38: #{tpu_custom_call.1} parent=11 // pred_check_branch
          %471 = sbr.rel (%p469) target = $region40
        $region39: #{tpu_custom_call.1} parent=11 // pred_region
          _
        $region40: #{tpu_custom_call.1} parent=11 // pred_fallthru
          _
        // Predicated region
        $region41: #{tpu_custom_call.1} parent=11 // pred_check
          %p472 = pneg %p224
        $region42: #{tpu_custom_call.1} parent=11 // pred_check_branch
          %474 = sbr.rel (%p472) target = $region44
        $region43: #{tpu_custom_call.1} parent=11 // pred_region
          _
        $region44: #{tpu_custom_call.1} parent=11 // pred_fallthru
          _
        // Predicated region
        $region45: #{tpu_custom_call.1} parent=11 // pred_check
          %p475 = pneg %p245
        $region46: #{tpu_custom_call.1} parent=11 // pred_check_branch
          %477 = sbr.rel (%p475) target = $region48
        $region47: #{tpu_custom_call.1} parent=11 // pred_region
          _
        $region48: #{tpu_custom_call.1} parent=11 // pred_fallthru
          _
        // Predicated region
        $region49: #{tpu_custom_call.1} parent=11 // pred_check
          %p478 = pneg %p266
        $region50: #{tpu_custom_call.1} parent=11 // pred_check_branch
          %480 = sbr.rel (%p478) target = $region52
        $region51: #{tpu_custom_call.1} parent=11 // pred_region
          _
        $region52: #{tpu_custom_call.1} parent=11 // pred_fallthru
          _
        // Predicated region
        $region53: #{tpu_custom_call.1} parent=11 // pred_check
          %p481 = pneg %p287
        $region54: #{tpu_custom_call.1} parent=11 // pred_check_branch
          %483 = sbr.rel (%p481) target = $region56
        $region55: #{tpu_custom_call.1} parent=11 // pred_region
          _
        $region56: #{tpu_custom_call.1} parent=11 // pred_fallthru
          _
        // Predicated region
        $region57: #{tpu_custom_call.1} parent=11 // pred_check
          %p484 = pneg %p308
        $region58: #{tpu_custom_call.1} parent=11 // pred_check_branch
          %486 = sbr.rel (%p484) target = $region60
        $region59: #{tpu_custom_call.1} parent=11 // pred_region
          _
        $region60: #{tpu_custom_call.1} parent=11 // pred_fallthru
          _
        // Predicated region
        $region61: #{tpu_custom_call.1} parent=11 // pred_check
          %p487 = pneg %p329
        $region62: #{tpu_custom_call.1} parent=11 // pred_check_branch
          %489 = sbr.rel (%p487) target = $region64
        $region63: #{tpu_custom_call.1} parent=11 // pred_region
          _
        $region64: #{tpu_custom_call.1} parent=11 // pred_fallthru
          _
        // Predicated region
        $region65: #{tpu_custom_call.1} parent=11 // pred_check
          %p490 = pneg %p350
        $region66: #{tpu_custom_call.1} parent=11 // pred_check_branch
          %492 = sbr.rel (%p490) target = $region68
        $region67: #{tpu_custom_call.1} parent=11 // pred_region
          _
        $region68: #{tpu_custom_call.1} parent=11 // pred_fallthru
          _
        // Predicated region
        $region69: #{tpu_custom_call.1} parent=11 // pred_check
          %p493 = pneg %p371
        $region70: #{tpu_custom_call.1} parent=11 // pred_check_branch
          %495 = sbr.rel (%p493) target = $region72
        $region71: #{tpu_custom_call.1} parent=11 // pred_region
          _
        $region72: #{tpu_custom_call.1} parent=11 // pred_fallthru
          _
        // Predicated region
        $region73: #{tpu_custom_call.1} parent=11 // pred_check
          %p496 = pneg %p392
        $region74: #{tpu_custom_call.1} parent=11 // pred_check_branch
          %498 = sbr.rel (%p496) target = $region76
        $region75: #{tpu_custom_call.1} parent=11 // pred_region
          _
        $region76: #{tpu_custom_call.1} parent=11 // pred_fallthru
          _
      $region12: #{tpu_custom_call.1} parent=5 // pred_fallthru
        _
      %p499 = scmp.lt.s32.totalorder %s30, 2
      // Predicated region
      $region77: #{tpu_custom_call.1} parent=5 // pred_check
        %p500 = pneg %p499
      $region78: #{tpu_custom_call.1} parent=5 // pred_check_branch
        %502 = sbr.rel (%p500) target = $region80
      $region79: #{tpu_custom_call.1} parent=5 // pred_region
        // Predicated region
        $region81: #{tpu_custom_call.1} parent=79 // pred_check
          %p503 = pneg %p50
        $region82: #{tpu_custom_call.1} parent=79 // pred_check_branch
          %505 = sbr.rel (%p503) target = $region84
        $region83: #{tpu_custom_call.1} parent=79 // pred_region
          %s506 = sand.u32 %s40, 1
          %s507 = scalar_lea.sflag [#allocation4], %s506
          %s508 = sand.u32 %s40, 1
          %s509 = smul.addr %s508, 256
          %s510 = scalar_lea.vmem [#allocation3], %s509
          %s512 = ssub.s32 4096, 4096
          %513 = vsyncadd %s507, %s512
          %s514 = smul.addr %s30, 32
          %s515 = smul.addr %s514, 128
          %s516 = scalar_lea.hbm %s0, %s515
          %s517 = sshll.u32 %s510, 4
          %s518 = int_to_ptr.vmem [resolvable:$true] %s517
          %523 = dma.hbm_to_vmem [thread:$0]  %s516, 4096, %s518, %s507, 128, 128, 8
        $region84: #{tpu_custom_call.1} parent=79 // pred_fallthru
          _
      $region80: #{tpu_custom_call.1} parent=5 // pred_fallthru
        _
      %p524 = scmp.le.s32.totalorder 1, %s30
      %p525 = scmp.lt.s32.totalorder %s30, 3
      %p526 = pnand %p524, %p525
      %p527 = pneg %p526
      // Predicated region
      $region85: #{tpu_custom_call.1} parent=5 // pred_check
        _
      $region86: #{tpu_custom_call.1} parent=5 // pred_check_branch
        %529 = sbr.rel (%p526) target = $region88
      $region87: #{tpu_custom_call.1} parent=5 // pred_region
        %s530 = ssub.s32 %s30, 1
        %s531 = sand.u32 %s43, 1
        %s532 = scalar_lea.sflag [#allocation4], %s531
        %s533 = sand.u32 %s43, 1
        %s534 = smul.addr %s533, 256
        %s535 = scalar_lea.vmem [#allocation3], %s534
        // Predicated region
        $region89: #{tpu_custom_call.1} parent=87 // pred_check
          %p536 = pneg %p56
        $region90: #{tpu_custom_call.1} parent=87 // pred_check_branch
          %538 = sbr.rel (%p536) target = $region92
        $region91: #{tpu_custom_call.1} parent=87 // pred_region
          %539 = dma.done %s532, 4096
        $region92: #{tpu_custom_call.1} parent=87 // pred_fallthru
          _
        // Predicated region
        $region93: #{tpu_custom_call.1} parent=87 // pred_check
          %p540 = pneg %p119
        $region94: #{tpu_custom_call.1} parent=87 // pred_check_branch
          %542 = sbr.rel (%p540) target = $region96
        $region95: #{tpu_custom_call.1} parent=87 // pred_region
          %543 = dma.done [#allocation7], 192
        $region96: #{tpu_custom_call.1} parent=87 // pred_fallthru
          _
        // Predicated region
        $region97: #{tpu_custom_call.1} parent=87 // pred_check
          %p544 = pneg %p182
        $region98: #{tpu_custom_call.1} parent=87 // pred_check_branch
          %546 = sbr.rel (%p544) target = $region100
        $region99: #{tpu_custom_call.1} parent=87 // pred_region
          %547 = dma.done [#allocation7], 16
        $region100: #{tpu_custom_call.1} parent=87 // pred_fallthru
          _
        %s548 = sand.u32 %s43, 1
        %s549 = scalar_lea.sflag [#allocation4], %s548
        %s550 = sand.u32 %s43, 1
        %s551 = smul.addr %s550, 256
        %s552 = scalar_lea.vmem [#allocation3], %s551
        %p553 = pneg %p56
        %p554 = pneg %p53
        %p555 = pneg %p77
        %p556 = pneg %p74
        %p557 = pneg %p98
        %p558 = pneg %p95
        %p559 = pneg %p119
        %p560 = pneg %p116
        %p561 = pneg %p140
        %p562 = pneg %p137
        %p563 = pneg %p161
        %p564 = pneg %p158
        %p565 = pneg %p182
        %p566 = pneg %p179
        %p567 = pneg %p203
        %p568 = pneg %p200
        %p569 = pneg %p224
        %p570 = pneg %p221
        %p571 = pneg %p245
        %p572 = pneg %p242
        %p573 = pneg %p266
        %p574 = pneg %p263
        %p575 = pneg %p287
        %p576 = pneg %p284
        %p577 = pneg %p308
        %p578 = pneg %p305
        %p579 = pneg %p329
        %p580 = pneg %p326
        %p581 = pneg %p350
        %p582 = pneg %p347
        %p583 = pneg %p371
        %p584 = pneg %p368
        %p585 = pneg %p392
        %p586 = pneg %p389
        %p587 = pneg %p418
        %p588 = pneg %p415
        %s589 = sand.u32 %s405, 1
        %s590 = scalar_lea.sflag [#allocation5], %s589
        %s591 = sand.u32 %s405, 1
        %s592 = smul.addr %s591, 256
        %s593 = scalar_lea.vmem [#allocation9], %s592
        %v594 = vld [vmem:[%s535] sm:$0xff]
        %v595 = vld [vmem:[%s535 + $0x8] sm:$0xff]
        %v596 = vld [vmem:[%s535 + $0x10] sm:$0xff]
        %v597 = vld [vmem:[%s535 + $0x18] sm:$0xff]
        %v598 = vld [vmem:[%s535 + $0x20] sm:$0xff]
        %v599 = vld [vmem:[%s535 + $0x28] sm:$0xff]
        %v600 = vld [vmem:[%s535 + $0x30] sm:$0xff]
        %v601 = vld [vmem:[%s535 + $0x38] sm:$0xff]
        %v602 = vld [vmem:[%s535 + $0x40] sm:$0xff]
        %v603 = vld [vmem:[%s535 + $0x48] sm:$0xff]
        %v604 = vld [vmem:[%s535 + $0x50] sm:$0xff]
        %v605 = vld [vmem:[%s535 + $0x58] sm:$0xff]
        %v606 = vld [vmem:[%s535 + $0x60] sm:$0xff]
        %v607 = vld [vmem:[%s535 + $0x68] sm:$0xff]
        %v608 = vld [vmem:[%s535 + $0x70] sm:$0xff]
        %v609 = vld [vmem:[%s535 + $0x78] sm:$0xff]
        %v610 = vld [vmem:[%s535 + $0x80] sm:$0xff]
        %v611 = vld [vmem:[%s535 + $0x88] sm:$0xff]
        %v612 = vld [vmem:[%s535 + $0x90] sm:$0xff]
        %v613 = vld [vmem:[%s535 + $0x98] sm:$0xff]
        %v614 = vld [vmem:[%s535 + $0xa0] sm:$0xff]
        %v615 = vld [vmem:[%s535 + $0xa8] sm:$0xff]
        %v616 = vld [vmem:[%s535 + $0xb0] sm:$0xff]
        %v617 = vld [vmem:[%s535 + $0xb8] sm:$0xff]
        %v618 = vld [vmem:[%s535 + $0xc0] sm:$0xff]
        %v619 = vld [vmem:[%s535 + $0xc8] sm:$0xff]
        %v620 = vld [vmem:[%s535 + $0xd0] sm:$0xff]
        %v621 = vld [vmem:[%s535 + $0xd8] sm:$0xff]
        %v622 = vld [vmem:[%s535 + $0xe0] sm:$0xff]
        %v623 = vld [vmem:[%s535 + $0xe8] sm:$0xff]
        %v624 = vld [vmem:[%s535 + $0xf0] sm:$0xff]
        %v625 = vld [vmem:[%s535 + $0xf8] sm:$0xff]
        %v626 = vld [vmem:[%s1] sm:$0xff]
        %v627 = vld [vmem:[%s1 + $0x8] sm:$0xff]
        %v628 = vld [vmem:[%s2] sm:$0x1]
        %v630 = vlaneseq
        %v631 = vshrl.u32 %v630, 7
        %v632 = vsub.s32 0, %v631
        %v633 = vrot.slane %v628, %v632
        %vm635 = vcmask 130048
        %v637 = vsel %vm635, %v594, 0
        %v640 = vsel %vm635, %v595, 0
        %v643 = vsel %vm635, %v596, 0
        %v646 = vsel %vm635, %v597, 0
        %v649 = vsel %vm635, %v598, 0
        %v652 = vsel %vm635, %v599, 0
        %v655 = vsel %vm635, %v600, 0
        %v658 = vsel %vm635, %v601, 0
        %v661 = vsel %vm635, %v602, 0
        %v664 = vsel %vm635, %v603, 0
        %v667 = vsel %vm635, %v604, 0
        %v670 = vsel %vm635, %v605, 0
        %v673 = vsel %vm635, %v606, 0
        %v676 = vsel %vm635, %v607, 0
        %v679 = vsel %vm635, %v608, 0
        %v682 = vsel %vm635, %v609, 0
        %v685 = vsel %vm635, %v610, 0
        %v688 = vsel %vm635, %v611, 0
        %v691 = vsel %vm635, %v612, 0
        %v694 = vsel %vm635, %v613, 0
        %v697 = vsel %vm635, %v614, 0
        %v700 = vsel %vm635, %v615, 0
        %v703 = vsel %vm635, %v616, 0
        %v706 = vsel %vm635, %v617, 0
        %v709 = vsel %vm635, %v618, 0
        %v712 = vsel %vm635, %v619, 0
        %v715 = vsel %vm635, %v620, 0
        %v718 = vsel %vm635, %v621, 0
        %v721 = vsel %vm635, %v622, 0
        %v724 = vsel %vm635, %v623, 0
        %v727 = vsel %vm635, %v624, 0
        %v730 = vsel %vm635, %v625, 0
        %732 = vmatprep.subr.mxu0 0.0
        %733 = vmatpush1.msra.mxu0 %v626
        %734 = vmatprep.subr.mxu0 0.0
        %735 = vmatpush1.msra.mxu0 %v627
        %736 = vmatprep.subr.mxu0 0.0
        %737 = vmatpush1.msra.mxu0 0.0
        %738 = vmatprep.subr.mxu0 0.0
        %739 = vmatpush1.msra.mxu0 0.0
        %740 = vmatprep.subr.mxu0 0.0
        %741 = vmatpush1.msra.mxu0 0.0
        %742 = vmatprep.subr.mxu0 0.0
        %743 = vmatpush1.msra.mxu0 0.0
        %744 = vmatprep.subr.mxu0 0.0
        %745 = vmatpush1.msra.mxu0 0.0
        %746 = vmatprep.subr.mxu0 0.0
        %747 = vmatpush1.msra.mxu0 0.0
        %748 = vmatprep.subr.mxu0 0.0
        %749 = vmatpush1.msra.mxu0 0.0
        %750 = vmatprep.subr.mxu0 0.0
        %751 = vmatpush1.msra.mxu0 0.0
        %752 = vmatprep.subr.mxu0 0.0
        %753 = vmatpush1.msra.mxu0 0.0
        %754 = vmatprep.subr.mxu0 0.0
        %755 = vmatpush1.msra.mxu0 0.0
        %756 = vmatprep.subr.mxu0 0.0
        %757 = vmatpush1.msra.mxu0 0.0
        %758 = vmatprep.subr.mxu0 0.0
        %759 = vmatpush1.msra.mxu0 0.0
        %760 = vmatprep.subr.mxu0 0.0
        %761 = vmatpush1.msra.mxu0 0.0
        %762 = vmatprep.subr.mxu0 0.0
        %763 = vmatpush1.msra.mxu0 0.0
        %764 = vmatprep.subr.mxu0 0.0
        %765 = vmatpush1.msra.mxu0 0.0
        %766 = vmatprep.subr.mxu0 0.0
        %767 = vmatpush1.msra.mxu0 0.0
        %768 = vmatprep.subr.mxu0 0.0
        %769 = vmatpush1.msra.mxu0 0.0
        %770 = vmatprep.subr.mxu0 0.0
        %771 = vmatpush1.msra.mxu0 0.0
        %772 = vmatprep.subr.mxu0 0.0
        %773 = vmatpush1.msra.mxu0 0.0
        %774 = vmatprep.subr.mxu0 0.0
        %775 = vmatpush1.msra.mxu0 0.0
        %776 = vmatprep.subr.mxu0 0.0
        %777 = vmatpush1.msra.mxu0 0.0
        %778 = vmatprep.subr.mxu0 0.0
        %779 = vmatpush1.msra.mxu0 0.0
        %780 = vmatprep.subr.mxu0 0.0
        %781 = vmatpush1.msra.mxu0 0.0
        %782 = vmatprep.subr.mxu0 0.0
        %783 = vmatpush1.msra.mxu0 0.0
        %784 = vmatprep.subr.mxu0 0.0
        %785 = vmatpush1.msra.mxu0 0.0
        %786 = vmatprep.subr.mxu0 0.0
        %787 = vmatpush1.msra.mxu0 0.0
        %788 = vmatprep.subr.mxu0 0.0
        %789 = vmatpush1.msra.mxu0 0.0
        %790 = vmatprep.subr.mxu0 0.0
        %791 = vmatpush1.msra.mxu0 0.0
        %792 = vmatprep.subr.mxu0 0.0
        %793 = vmatpush1.msra.mxu0 0.0
        %794 = vmatprep.subr.mxu0 0.0
        %795 = vmatpush1.msra.mxu0 0.0
        %796 = vmatprep.mubr.f32.mxu0 0.0
        %797 = vmatmul.mubr.f32.gmra.mrb[0].mxu0 %v637
        %v798 = vpop.f32.mrb[0].mxu0
        %v799 = vadd.f32 %v633, %v798
        %v800 = vpop.f32.mrb[0].mxu0
        %801 = vmatprep.mubr.f32.mxu0 0.0
        %802 = vmatmul.mubr.f32.gmra.mrb[0].mxu0 %v640
        %v803 = vpop.f32.mrb[0].mxu0
        %v804 = vadd.f32 %v633, %v803
        %v805 = vpop.f32.mrb[0].mxu0
        %806 = vmatprep.mubr.f32.mxu0 0.0
        %807 = vmatmul.mubr.f32.gmra.mrb[0].mxu0 %v643
        %v808 = vpop.f32.mrb[0].mxu0
        %v809 = vadd.f32 %v633, %v808
        %v810 = vpop.f32.mrb[0].mxu0
        %811 = vmatprep.mubr.f32.mxu0 0.0
        %812 = vmatmul.mubr.f32.gmra.mrb[0].mxu0 %v646
        %v813 = vpop.f32.mrb[0].mxu0
        %v814 = vadd.f32 %v633, %v813
        %v815 = vpop.f32.mrb[0].mxu0
        %816 = vmatprep.mubr.f32.mxu0 0.0
        %817 = vmatmul.mubr.f32.gmra.mrb[0].mxu0 %v649
        %v818 = vpop.f32.mrb[0].mxu0
        %v819 = vadd.f32 %v633, %v818
        %v820 = vpop.f32.mrb[0].mxu0
        %821 = vmatprep.mubr.f32.mxu0 0.0
        %822 = vmatmul.mubr.f32.gmra.mrb[0].mxu0 %v652
        %v823 = vpop.f32.mrb[0].mxu0
        %v824 = vadd.f32 %v633, %v823
        %v825 = vpop.f32.mrb[0].mxu0
        %826 = vmatprep.mubr.f32.mxu0 0.0
        %827 = vmatmul.mubr.f32.gmra.mrb[0].mxu0 %v655
        %v828 = vpop.f32.mrb[0].mxu0
        %v829 = vadd.f32 %v633, %v828
        %v830 = vpop.f32.mrb[0].mxu0
        %831 = vmatprep.mubr.f32.mxu0 0.0
        %832 = vmatmul.mubr.f32.gmra.mrb[0].mxu0 %v658
        %v833 = vpop.f32.mrb[0].mxu0
        %v834 = vadd.f32 %v633, %v833
        %v835 = vpop.f32.mrb[0].mxu0
        %836 = vmatprep.mubr.f32.mxu0 0.0
        %837 = vmatmul.mubr.f32.gmra.mrb[0].mxu0 %v661
        %v838 = vpop.f32.mrb[0].mxu0
        %v839 = vadd.f32 %v633, %v838
        %v840 = vpop.f32.mrb[0].mxu0
        %841 = vmatprep.mubr.f32.mxu0 0.0
        %842 = vmatmul.mubr.f32.gmra.mrb[0].mxu0 %v664
        %v843 = vpop.f32.mrb[0].mxu0
        %v844 = vadd.f32 %v633, %v843
        %v845 = vpop.f32.mrb[0].mxu0
        %846 = vmatprep.mubr.f32.mxu0 0.0
        %847 = vmatmul.mubr.f32.gmra.mrb[0].mxu0 %v667
        %v848 = vpop.f32.mrb[0].mxu0
        %v849 = vadd.f32 %v633, %v848
        %v850 = vpop.f32.mrb[0].mxu0
        %851 = vmatprep.mubr.f32.mxu0 0.0
        %852 = vmatmul.mubr.f32.gmra.mrb[0].mxu0 %v670
        %v853 = vpop.f32.mrb[0].mxu0
        %v854 = vadd.f32 %v633, %v853
        %v855 = vpop.f32.mrb[0].mxu0
        %856 = vmatprep.mubr.f32.mxu0 0.0
        %857 = vmatmul.mubr.f32.gmra.mrb[0].mxu0 %v673
        %v858 = vpop.f32.mrb[0].mxu0
        %v859 = vadd.f32 %v633, %v858
        %v860 = vpop.f32.mrb[0].mxu0
        %861 = vmatprep.mubr.f32.mxu0 0.0
        %862 = vmatmul.mubr.f32.gmra.mrb[0].mxu0 %v676
        %v863 = vpop.f32.mrb[0].mxu0
        %v864 = vadd.f32 %v633, %v863
        %v865 = vpop.f32.mrb[0].mxu0
        %866 = vmatprep.mubr.f32.mxu0 0.0
        %867 = vmatmul.mubr.f32.gmra.mrb[0].mxu0 %v679
        %v868 = vpop.f32.mrb[0].mxu0
        %v869 = vadd.f32 %v633, %v868
        %v870 = vpop.f32.mrb[0].mxu0
        %871 = vmatprep.mubr.f32.mxu0 0.0
        %872 = vmatmul.mubr.f32.gmra.mrb[0].mxu0 %v682
        %v873 = vpop.f32.mrb[0].mxu0
        %v874 = vadd.f32 %v633, %v873
        %v875 = vpop.f32.mrb[0].mxu0
        %876 = vmatprep.mubr.f32.mxu0 0.0
        %877 = vmatmul.mubr.f32.gmra.mrb[0].mxu0 %v685
        %v878 = vpop.f32.mrb[0].mxu0
        %v879 = vadd.f32 %v633, %v878
        %v880 = vpop.f32.mrb[0].mxu0
        %881 = vmatprep.mubr.f32.mxu0 0.0
        %882 = vmatmul.mubr.f32.gmra.mrb[0].mxu0 %v688
        %v883 = vpop.f32.mrb[0].mxu0
        %v884 = vadd.f32 %v633, %v883
        %v885 = vpop.f32.mrb[0].mxu0
        %886 = vmatprep.mubr.f32.mxu0 0.0
        %887 = vmatmul.mubr.f32.gmra.mrb[0].mxu0 %v691
        %v888 = vpop.f32.mrb[0].mxu0
        %v889 = vadd.f32 %v633, %v888
        %v890 = vpop.f32.mrb[0].mxu0
        %891 = vmatprep.mubr.f32.mxu0 0.0
        %892 = vmatmul.mubr.f32.gmra.mrb[0].mxu0 %v694
        %v893 = vpop.f32.mrb[0].mxu0
        %v894 = vadd.f32 %v633, %v893
        %v895 = vpop.f32.mrb[0].mxu0
        %896 = vmatprep.mubr.f32.mxu0 0.0
        %897 = vmatmul.mubr.f32.gmra.mrb[0].mxu0 %v697
        %v898 = vpop.f32.mrb[0].mxu0
        %v899 = vadd.f32 %v633, %v898
        %v900 = vpop.f32.mrb[0].mxu0
        %901 = vmatprep.mubr.f32.mxu0 0.0
        %902 = vmatmul.mubr.f32.gmra.mrb[0].mxu0 %v700
        %v903 = vpop.f32.mrb[0].mxu0
        %v904 = vadd.f32 %v633, %v903
        %v905 = vpop.f32.mrb[0].mxu0
        %906 = vmatprep.mubr.f32.mxu0 0.0
        %907 = vmatmul.mubr.f32.gmra.mrb[0].mxu0 %v703
        %v908 = vpop.f32.mrb[0].mxu0
        %v909 = vadd.f32 %v633, %v908
        %v910 = vpop.f32.mrb[0].mxu0
        %911 = vmatprep.mubr.f32.mxu0 0.0
        %912 = vmatmul.mubr.f32.gmra.mrb[0].mxu0 %v706
        %v913 = vpop.f32.mrb[0].mxu0
        %v914 = vadd.f32 %v633, %v913
        %v915 = vpop.f32.mrb[0].mxu0
        %916 = vmatprep.mubr.f32.mxu0 0.0
        %917 = vmatmul.mubr.f32.gmra.mrb[0].mxu0 %v709
        %v918 = vpop.f32.mrb[0].mxu0
        %v919 = vadd.f32 %v633, %v918
        %v920 = vpop.f32.mrb[0].mxu0
        %921 = vmatprep.mubr.f32.mxu0 0.0
        %922 = vmatmul.mubr.f32.gmra.mrb[0].mxu0 %v712
        %v923 = vpop.f32.mrb[0].mxu0
        %v924 = vadd.f32 %v633, %v923
        %v925 = vpop.f32.mrb[0].mxu0
        %926 = vmatprep.mubr.f32.mxu0 0.0
        %927 = vmatmul.mubr.f32.gmra.mrb[0].mxu0 %v715
        %v928 = vpop.f32.mrb[0].mxu0
        %v929 = vadd.f32 %v633, %v928
        %v930 = vpop.f32.mrb[0].mxu0
        %931 = vmatprep.mubr.f32.mxu0 0.0
        %932 = vmatmul.mubr.f32.gmra.mrb[0].mxu0 %v718
        %v933 = vpop.f32.mrb[0].mxu0
        %v934 = vadd.f32 %v633, %v933
        %v935 = vpop.f32.mrb[0].mxu0
        %936 = vmatprep.mubr.f32.mxu0 0.0
        %937 = vmatmul.mubr.f32.gmra.mrb[0].mxu0 %v721
        %v938 = vpop.f32.mrb[0].mxu0
        %v939 = vadd.f32 %v633, %v938
        %v940 = vpop.f32.mrb[0].mxu0
        %941 = vmatprep.mubr.f32.mxu0 0.0
        %942 = vmatmul.mubr.f32.gmra.mrb[0].mxu0 %v724
        %v943 = vpop.f32.mrb[0].mxu0
        %v944 = vadd.f32 %v633, %v943
        %v945 = vpop.f32.mrb[0].mxu0
        %946 = vmatprep.mubr.f32.mxu0 0.0
        %947 = vmatmul.mubr.f32.gmra.mrb[0].mxu0 %v727
        %v948 = vpop.f32.mrb[0].mxu0
        %v949 = vadd.f32 %v633, %v948
        %v950 = vpop.f32.mrb[0].mxu0
        %951 = vmatprep.mubr.f32.mxu0 0.0
        %952 = vmatmul.mubr.f32.gmra.mrb[0].mxu0 %v730
        %v953 = vpop.f32.mrb[0].mxu0
        %v954 = vadd.f32 %v633, %v953
        %v955 = vpop.f32.mrb[0].mxu0
        %956 = vdwg.mxu0
        %vm957 = vcmask 523264
        %958 = vst.msk [vmem:[#allocation2] sm:$0xff] %vm957, 0.0
        %959 = vst.msk [vmem:[#allocation2 + $0x8] sm:$0xff] %vm957, 0.0
        %vm960 = vcmask 517120
        %961 = vst.msk [vmem:[#allocation2 + $0x10] sm:$0x3] %vm960, 0.0
        %s962 = scalar_lea.vmem [#allocation2], 408
        %963 = vst.msk [vmem:[%s962] sm:$0xff] %vm957, 0.0
        %964 = vst.msk [vmem:[%s962 + $0x8] sm:$0xff] %vm957, 0.0
        %965 = vst.msk [vmem:[%s962 + $0x10] sm:$0x3] %vm960, 0.0
        %vm966 = vcmask 516096
        %967 = vst.msk [vmem:[#allocation2] sm:$0x1] %vm966, 0.0
        %968 = vst.msk [vmem:[#allocation2 + $0x18] sm:$0x1] %vm966, 0.0
        %969 = vst.msk [vmem:[#allocation2 + $0x30] sm:$0x1] %vm966, 0.0
        %970 = vst.msk [vmem:[#allocation2 + $0x48] sm:$0x1] %vm966, 0.0
        %971 = vst.msk [vmem:[#allocation2 + $0x60] sm:$0x1] %vm966, 0.0
        %972 = vst.msk [vmem:[#allocation2 + $0x78] sm:$0x1] %vm966, 0.0
        %973 = vst.msk [vmem:[#allocation2 + $0x90] sm:$0x1] %vm966, 0.0
        %974 = vst.msk [vmem:[#allocation2 + $0xa8] sm:$0x1] %vm966, 0.0
        %975 = vst.msk [vmem:[#allocation2 + $0xc0] sm:$0x1] %vm966, 0.0
        %976 = vst.msk [vmem:[#allocation2 + $0xd8] sm:$0x1] %vm966, 0.0
        %977 = vst.msk [vmem:[#allocation2 + $0xf0] sm:$0x1] %vm966, 0.0
        %978 = vst.msk [vmem:[#allocation2 + $0x108] sm:$0x1] %vm966, 0.0
        %979 = vst.msk [vmem:[#allocation2 + $0x120] sm:$0x1] %vm966, 0.0
        %980 = vst.msk [vmem:[#allocation2 + $0x138] sm:$0x1] %vm966, 0.0
        %981 = vst.msk [vmem:[#allocation2 + $0x150] sm:$0x1] %vm966, 0.0
        %982 = vst.msk [vmem:[#allocation2 + $0x168] sm:$0x1] %vm966, 0.0
        %983 = vst.msk [vmem:[#allocation2 + $0x180] sm:$0x1] %vm966, 0.0
        %984 = vst.msk [vmem:[#allocation2 + $0x198] sm:$0x1] %vm966, 0.0
        %985 = vst.msk [vmem:[#allocation2 + $0x11] sm:$0x1] %vm966, 0.0
        %986 = vst.msk [vmem:[#allocation2 + $0x29] sm:$0x1] %vm966, 0.0
        %987 = vst.msk [vmem:[#allocation2 + $0x41] sm:$0x1] %vm966, 0.0
        %988 = vst.msk [vmem:[#allocation2 + $0x59] sm:$0x1] %vm966, 0.0
        %989 = vst.msk [vmem:[#allocation2 + $0x71] sm:$0x1] %vm966, 0.0
        %990 = vst.msk [vmem:[#allocation2 + $0x89] sm:$0x1] %vm966, 0.0
        %991 = vst.msk [vmem:[#allocation2 + $0xa1] sm:$0x1] %vm966, 0.0
        %992 = vst.msk [vmem:[#allocation2 + $0xb9] sm:$0x1] %vm966, 0.0
        %993 = vst.msk [vmem:[#allocation2 + $0xd1] sm:$0x1] %vm966, 0.0
        %994 = vst.msk [vmem:[#allocation2 + $0xe9] sm:$0x1] %vm966, 0.0
        %995 = vst.msk [vmem:[#allocation2 + $0x101] sm:$0x1] %vm966, 0.0
        %996 = vst.msk [vmem:[#allocation2 + $0x119] sm:$0x1] %vm966, 0.0
        %997 = vst.msk [vmem:[#allocation2 + $0x131] sm:$0x1] %vm966, 0.0
        %998 = vst.msk [vmem:[#allocation2 + $0x149] sm:$0x1] %vm966, 0.0
        %999 = vst.msk [vmem:[#allocation2 + $0x161] sm:$0x1] %vm966, 0.0
        %1000 = vst.msk [vmem:[#allocation2 + $0x179] sm:$0x1] %vm966, 0.0
        %1001 = vst.msk [vmem:[#allocation2 + $0x191] sm:$0x1] %vm966, 0.0
        %1002 = vst.msk [vmem:[#allocation2 + $0x1a9] sm:$0x1] %vm966, 0.0
        %s1003 = scalar_lea.vmem [#allocation2], 24
        %1004 = vst.msk [vmem:[%s1003 + $0x1] sm:$0xff] %vm957, %v799
        %1005 = vst.msk [vmem:[%s1003 + $0x9] sm:$0xff] %vm957, %v804
        %1006 = vst.msk [vmem:[%s1003 + $0x19] sm:$0xff] %vm957, %v809
        %1007 = vst.msk [vmem:[%s1003 + $0x21] sm:$0xff] %vm957, %v814
        %1008 = vst.msk [vmem:[%s1003 + $0x31] sm:$0xff] %vm957, %v819
        %1009 = vst.msk [vmem:[%s1003 + $0x39] sm:$0xff] %vm957, %v824
        %1010 = vst.msk [vmem:[%s1003 + $0x49] sm:$0xff] %vm957, %v829
        %1011 = vst.msk [vmem:[%s1003 + $0x51] sm:$0xff] %vm957, %v834
        %1012 = vst.msk [vmem:[%s1003 + $0x61] sm:$0xff] %vm957, %v839
        %1013 = vst.msk [vmem:[%s1003 + $0x69] sm:$0xff] %vm957, %v844
        %1014 = vst.msk [vmem:[%s1003 + $0x79] sm:$0xff] %vm957, %v849
        %1015 = vst.msk [vmem:[%s1003 + $0x81] sm:$0xff] %vm957, %v854
        %1016 = vst.msk [vmem:[%s1003 + $0x91] sm:$0xff] %vm957, %v859
        %1017 = vst.msk [vmem:[%s1003 + $0x99] sm:$0xff] %vm957, %v864
        %1018 = vst.msk [vmem:[%s1003 + $0xa9] sm:$0xff] %vm957, %v869
        %1019 = vst.msk [vmem:[%s1003 + $0xb1] sm:$0xff] %vm957, %v874
        %1020 = vst.msk [vmem:[%s1003 + $0xc1] sm:$0xff] %vm957, %v879
        %1021 = vst.msk [vmem:[%s1003 + $0xc9] sm:$0xff] %vm957, %v884
        %1022 = vst.msk [vmem:[%s1003 + $0xd9] sm:$0xff] %vm957, %v889
        %1023 = vst.msk [vmem:[%s1003 + $0xe1] sm:$0xff] %vm957, %v894
        %1024 = vst.msk [vmem:[%s1003 + $0xf1] sm:$0xff] %vm957, %v899
        %1025 = vst.msk [vmem:[%s1003 + $0xf9] sm:$0xff] %vm957, %v904
        %1026 = vst.msk [vmem:[%s1003 + $0x109] sm:$0xff] %vm957, %v909
        %1027 = vst.msk [vmem:[%s1003 + $0x111] sm:$0xff] %vm957, %v914
        %1028 = vst.msk [vmem:[%s1003 + $0x121] sm:$0xff] %vm957, %v919
        %1029 = vst.msk [vmem:[%s1003 + $0x129] sm:$0xff] %vm957, %v924
        %1030 = vst.msk [vmem:[%s1003 + $0x139] sm:$0xff] %vm957, %v929
        %1031 = vst.msk [vmem:[%s1003 + $0x141] sm:$0xff] %vm957, %v934
        %1032 = vst.msk [vmem:[%s1003 + $0x151] sm:$0xff] %vm957, %v939
        %1033 = vst.msk [vmem:[%s1003 + $0x159] sm:$0xff] %vm957, %v944
        %1034 = vst.msk [vmem:[%s1003 + $0x169] sm:$0xff] %vm957, %v949
        %1035 = vst.msk [vmem:[%s1003 + $0x171] sm:$0xff] %vm957, %v954
        %v1036 = vld [vmem:[#allocation6] sm:$0x7]
        %v1037 = vld [vmem:[#allocation6 + $0x4] sm:$0x7]
        %v1038 = vld [vmem:[#allocation6 + $0x8] sm:$0x7]
        %v1039 = vld [vmem:[#allocation2] sm:$0xff]
        %v1040 = vld [vmem:[#allocation2 + $0x8] sm:$0xff]
        %v1041 = vld [vmem:[#allocation2 + $0x18] sm:$0xff]
        %v1042 = vld [vmem:[#allocation2 + $0x20] sm:$0xff]
        %v1043 = vld [vmem:[#allocation2 + $0x30] sm:$0xff]
        %v1044 = vld [vmem:[#allocation2 + $0x38] sm:$0xff]
        %v1045 = vld [vmem:[#allocation2 + $0x48] sm:$0xff]
        %v1046 = vld [vmem:[#allocation2 + $0x50] sm:$0xff]
        %v1047 = vld [vmem:[#allocation2 + $0x60] sm:$0xff]
        %v1048 = vld [vmem:[#allocation2 + $0x68] sm:$0xff]
        %v1049 = vld [vmem:[#allocation2 + $0x78] sm:$0xff]
        %v1050 = vld [vmem:[#allocation2 + $0x80] sm:$0xff]
        %v1051 = vld [vmem:[#allocation2 + $0x90] sm:$0xff]
        %v1052 = vld [vmem:[#allocation2 + $0x98] sm:$0xff]
        %v1053 = vld [vmem:[#allocation2 + $0xa8] sm:$0xff]
        %v1054 = vld [vmem:[#allocation2 + $0xb0] sm:$0xff]
        %v1055 = vld [vmem:[#allocation2 + $0xc0] sm:$0xff]
        %v1056 = vld [vmem:[#allocation2 + $0xc8] sm:$0xff]
        %v1057 = vld [vmem:[#allocation2 + $0xd8] sm:$0xff]
        %v1058 = vld [vmem:[#allocation2 + $0xe0] sm:$0xff]
        %v1059 = vld [vmem:[#allocation2 + $0xf0] sm:$0xff]
        %v1060 = vld [vmem:[#allocation2 + $0xf8] sm:$0xff]
        %v1061 = vld [vmem:[#allocation2 + $0x108] sm:$0xff]
        %v1062 = vld [vmem:[#allocation2 + $0x110] sm:$0xff]
        %v1063 = vld [vmem:[#allocation2 + $0x120] sm:$0xff]
        %v1064 = vld [vmem:[#allocation2 + $0x128] sm:$0xff]
        %v1065 = vld [vmem:[#allocation2 + $0x138] sm:$0xff]
        %v1066 = vld [vmem:[#allocation2 + $0x140] sm:$0xff]
        %v1067 = vld [vmem:[#allocation2 + $0x150] sm:$0xff]
        %v1068 = vld [vmem:[#allocation2 + $0x158] sm:$0xff]
        %v1069 = vld [vmem:[#allocation2 + $0x168] sm:$0xff]
        %v1070 = vld [vmem:[#allocation2 + $0x170] sm:$0xff]
        %v1071 = vlaneseq
        %v1072 = vshrl.u32 %v1071, 7
        %v1073 = vsub.s32 0, %v1072
        %v1074 = vrot.slane %v1036, %v1073
        %v1075 = vmul.f32 %v1039, %v1074
        %v1076 = vmul.f32 %v1040, %v1074
        %v1077 = vmul.f32 %v1041, %v1074
        %v1078 = vmul.f32 %v1042, %v1074
        %v1079 = vmul.f32 %v1043, %v1074
        %v1080 = vmul.f32 %v1044, %v1074
        %v1081 = vmul.f32 %v1045, %v1074
        %v1082 = vmul.f32 %v1046, %v1074
        %v1083 = vmul.f32 %v1047, %v1074
        %v1084 = vmul.f32 %v1048, %v1074
        %v1085 = vmul.f32 %v1049, %v1074
        %v1086 = vmul.f32 %v1050, %v1074
        %v1087 = vmul.f32 %v1051, %v1074
        %v1088 = vmul.f32 %v1052, %v1074
        %v1089 = vmul.f32 %v1053, %v1074
        %v1090 = vmul.f32 %v1054, %v1074
        %v1091 = vmul.f32 %v1055, %v1074
        %v1092 = vmul.f32 %v1056, %v1074
        %v1093 = vmul.f32 %v1057, %v1074
        %v1094 = vmul.f32 %v1058, %v1074
        %v1095 = vmul.f32 %v1059, %v1074
        %v1096 = vmul.f32 %v1060, %v1074
        %v1097 = vmul.f32 %v1061, %v1074
        %v1098 = vmul.f32 %v1062, %v1074
        %v1099 = vmul.f32 %v1063, %v1074
        %v1100 = vmul.f32 %v1064, %v1074
        %v1101 = vmul.f32 %v1065, %v1074
        %v1102 = vmul.f32 %v1066, %v1074
        %v1103 = vmul.f32 %v1067, %v1074
        %v1104 = vmul.f32 %v1068, %v1074
        %v1105 = vmul.f32 %v1069, %v1074
        %v1106 = vmul.f32 %v1070, %v1074
        %v1107 = vadd.f32 %v1075, 0.0
        %v1108 = vadd.f32 %v1076, 0.0
        %v1109 = vadd.f32 %v1077, 0.0
        %v1110 = vadd.f32 %v1078, 0.0
        %v1111 = vadd.f32 %v1079, 0.0
        %v1112 = vadd.f32 %v1080, 0.0
        %v1113 = vadd.f32 %v1081, 0.0
        %v1114 = vadd.f32 %v1082, 0.0
        %v1115 = vadd.f32 %v1083, 0.0
        %v1116 = vadd.f32 %v1084, 0.0
        %v1117 = vadd.f32 %v1085, 0.0
        %v1118 = vadd.f32 %v1086, 0.0
        %v1119 = vadd.f32 %v1087, 0.0
        %v1120 = vadd.f32 %v1088, 0.0
        %v1121 = vadd.f32 %v1089, 0.0
        %v1122 = vadd.f32 %v1090, 0.0
        %v1123 = vadd.f32 %v1091, 0.0
        %v1124 = vadd.f32 %v1092, 0.0
        %v1125 = vadd.f32 %v1093, 0.0
        %v1126 = vadd.f32 %v1094, 0.0
        %v1127 = vadd.f32 %v1095, 0.0
        %v1128 = vadd.f32 %v1096, 0.0
        %v1129 = vadd.f32 %v1097, 0.0
        %v1130 = vadd.f32 %v1098, 0.0
        %v1131 = vadd.f32 %v1099, 0.0
        %v1132 = vadd.f32 %v1100, 0.0
        %v1133 = vadd.f32 %v1101, 0.0
        %v1134 = vadd.f32 %v1102, 0.0
        %v1135 = vadd.f32 %v1103, 0.0
        %v1136 = vadd.f32 %v1104, 0.0
        %v1137 = vadd.f32 %v1105, 0.0
        %v1138 = vadd.f32 %v1106, 0.0
        %v1139 = vld [vmem:[#allocation2 + $0x1] sm:$0xff]
        %v1140 = vld [vmem:[#allocation2 + $0x9] sm:$0xff]
        %v1141 = vld [vmem:[#allocation2 + $0x19] sm:$0xff]
        %v1142 = vld [vmem:[#allocation2 + $0x21] sm:$0xff]
        %v1143 = vld [vmem:[#allocation2 + $0x31] sm:$0xff]
        %v1144 = vld [vmem:[#allocation2 + $0x39] sm:$0xff]
        %v1145 = vld [vmem:[#allocation2 + $0x49] sm:$0xff]
        %v1146 = vld [vmem:[#allocation2 + $0x51] sm:$0xff]
        %v1147 = vld [vmem:[#allocation2 + $0x61] sm:$0xff]
        %v1148 = vld [vmem:[#allocation2 + $0x69] sm:$0xff]
        %v1149 = vld [vmem:[#allocation2 + $0x79] sm:$0xff]
        %v1150 = vld [vmem:[#allocation2 + $0x81] sm:$0xff]
        %v1151 = vld [vmem:[#allocation2 + $0x91] sm:$0xff]
        %v1152 = vld [vmem:[#allocation2 + $0x99] sm:$0xff]
        %v1153 = vld [vmem:[#allocation2 + $0xa9] sm:$0xff]
        %v1154 = vld [vmem:[#allocation2 + $0xb1] sm:$0xff]
        %v1155 = vld [vmem:[#allocation2 + $0xc1] sm:$0xff]
        %v1156 = vld [vmem:[#allocation2 + $0xc9] sm:$0xff]
        %v1157 = vld [vmem:[#allocation2 + $0xd9] sm:$0xff]
        %v1158 = vld [vmem:[#allocation2 + $0xe1] sm:$0xff]
        %v1159 = vld [vmem:[#allocation2 + $0xf1] sm:$0xff]
        %v1160 = vld [vmem:[#allocation2 + $0xf9] sm:$0xff]
        %v1161 = vld [vmem:[#allocation2 + $0x109] sm:$0xff]
        %v1162 = vld [vmem:[#allocation2 + $0x111] sm:$0xff]
        %v1163 = vld [vmem:[#allocation2 + $0x121] sm:$0xff]
        %v1164 = vld [vmem:[#allocation2 + $0x129] sm:$0xff]
        %v1165 = vld [vmem:[#allocation2 + $0x139] sm:$0xff]
        %v1166 = vld [vmem:[#allocation2 + $0x141] sm:$0xff]
        %v1167 = vld [vmem:[#allocation2 + $0x151] sm:$0xff]
        %v1168 = vld [vmem:[#allocation2 + $0x159] sm:$0xff]
        %v1169 = vld [vmem:[#allocation2 + $0x169] sm:$0xff]
        %v1170 = vld [vmem:[#allocation2 + $0x171] sm:$0xff]
        %v1171 = vlaneseq
        %v1172 = vshrl.u32 %v1171, 7
        %v1173 = vsub.s32 1, %v1172
        %v1174 = vrot.slane %v1036, %v1173
        %v1175 = vmul.f32 %v1139, %v1174
        %v1176 = vmul.f32 %v1140, %v1174
        %v1177 = vmul.f32 %v1141, %v1174
        %v1178 = vmul.f32 %v1142, %v1174
        %v1179 = vmul.f32 %v1143, %v1174
        %v1180 = vmul.f32 %v1144, %v1174
        %v1181 = vmul.f32 %v1145, %v1174
        %v1182 = vmul.f32 %v1146, %v1174
        %v1183 = vmul.f32 %v1147, %v1174
        %v1184 = vmul.f32 %v1148, %v1174
        %v1185 = vmul.f32 %v1149, %v1174
        %v1186 = vmul.f32 %v1150, %v1174
        %v1187 = vmul.f32 %v1151, %v1174
        %v1188 = vmul.f32 %v1152, %v1174
        %v1189 = vmul.f32 %v1153, %v1174
        %v1190 = vmul.f32 %v1154, %v1174
        %v1191 = vmul.f32 %v1155, %v1174
        %v1192 = vmul.f32 %v1156, %v1174
        %v1193 = vmul.f32 %v1157, %v1174
        %v1194 = vmul.f32 %v1158, %v1174
        %v1195 = vmul.f32 %v1159, %v1174
        %v1196 = vmul.f32 %v1160, %v1174
        %v1197 = vmul.f32 %v1161, %v1174
        %v1198 = vmul.f32 %v1162, %v1174
        %v1199 = vmul.f32 %v1163, %v1174
        %v1200 = vmul.f32 %v1164, %v1174
        %v1201 = vmul.f32 %v1165, %v1174
        %v1202 = vmul.f32 %v1166, %v1174
        %v1203 = vmul.f32 %v1167, %v1174
        %v1204 = vmul.f32 %v1168, %v1174
        %v1205 = vmul.f32 %v1169, %v1174
        %v1206 = vmul.f32 %v1170, %v1174
        %v1207 = vadd.f32 %v1107, %v1175
        %v1208 = vadd.f32 %v1108, %v1176
        %v1209 = vadd.f32 %v1109, %v1177
        %v1210 = vadd.f32 %v1110, %v1178
        %v1211 = vadd.f32 %v1111, %v1179
        %v1212 = vadd.f32 %v1112, %v1180
        %v1213 = vadd.f32 %v1113, %v1181
        %v1214 = vadd.f32 %v1114, %v1182
        %v1215 = vadd.f32 %v1115, %v1183
        %v1216 = vadd.f32 %v1116, %v1184
        %v1217 = vadd.f32 %v1117, %v1185
        %v1218 = vadd.f32 %v1118, %v1186
        %v1219 = vadd.f32 %v1119, %v1187
        %v1220 = vadd.f32 %v1120, %v1188
        %v1221 = vadd.f32 %v1121, %v1189
        %v1222 = vadd.f32 %v1122, %v1190
        %v1223 = vadd.f32 %v1123, %v1191
        %v1224 = vadd.f32 %v1124, %v1192
        %v1225 = vadd.f32 %v1125, %v1193
        %v1226 = vadd.f32 %v1126, %v1194
        %v1227 = vadd.f32 %v1127, %v1195
        %v1228 = vadd.f32 %v1128, %v1196
        %v1229 = vadd.f32 %v1129, %v1197
        %v1230 = vadd.f32 %v1130, %v1198
        %v1231 = vadd.f32 %v1131, %v1199
        %v1232 = vadd.f32 %v1132, %v1200
        %v1233 = vadd.f32 %v1133, %v1201
        %v1234 = vadd.f32 %v1134, %v1202
        %v1235 = vadd.f32 %v1135, %v1203
        %v1236 = vadd.f32 %v1136, %v1204
        %v1237 = vadd.f32 %v1137, %v1205
        %v1238 = vadd.f32 %v1138, %v1206
        %v1239 = vld [vmem:[#allocation2 + $0x2] sm:$0xff]
        %v1240 = vld [vmem:[#allocation2 + $0xa] sm:$0xff]
        %v1241 = vld [vmem:[#allocation2 + $0x1a] sm:$0xff]
        %v1242 = vld [vmem:[#allocation2 + $0x22] sm:$0xff]
        %v1243 = vld [vmem:[#allocation2 + $0x32] sm:$0xff]
        %v1244 = vld [vmem:[#allocation2 + $0x3a] sm:$0xff]
        %v1245 = vld [vmem:[#allocation2 + $0x4a] sm:$0xff]
        %v1246 = vld [vmem:[#allocation2 + $0x52] sm:$0xff]
        %v1247 = vld [vmem:[#allocation2 + $0x62] sm:$0xff]
        %v1248 = vld [vmem:[#allocation2 + $0x6a] sm:$0xff]
        %v1249 = vld [vmem:[#allocation2 + $0x7a] sm:$0xff]
        %v1250 = vld [vmem:[#allocation2 + $0x82] sm:$0xff]
        %v1251 = vld [vmem:[#allocation2 + $0x92] sm:$0xff]
        %v1252 = vld [vmem:[#allocation2 + $0x9a] sm:$0xff]
        %v1253 = vld [vmem:[#allocation2 + $0xaa] sm:$0xff]
        %v1254 = vld [vmem:[#allocation2 + $0xb2] sm:$0xff]
        %v1255 = vld [vmem:[#allocation2 + $0xc2] sm:$0xff]
        %v1256 = vld [vmem:[#allocation2 + $0xca] sm:$0xff]
        %v1257 = vld [vmem:[#allocation2 + $0xda] sm:$0xff]
        %v1258 = vld [vmem:[#allocation2 + $0xe2] sm:$0xff]
        %v1259 = vld [vmem:[#allocation2 + $0xf2] sm:$0xff]
        %v1260 = vld [vmem:[#allocation2 + $0xfa] sm:$0xff]
        %v1261 = vld [vmem:[#allocation2 + $0x10a] sm:$0xff]
        %v1262 = vld [vmem:[#allocation2 + $0x112] sm:$0xff]
        %v1263 = vld [vmem:[#allocation2 + $0x122] sm:$0xff]
        %v1264 = vld [vmem:[#allocation2 + $0x12a] sm:$0xff]
        %v1265 = vld [vmem:[#allocation2 + $0x13a] sm:$0xff]
        %v1266 = vld [vmem:[#allocation2 + $0x142] sm:$0xff]
        %v1267 = vld [vmem:[#allocation2 + $0x152] sm:$0xff]
        %v1268 = vld [vmem:[#allocation2 + $0x15a] sm:$0xff]
        %v1269 = vld [vmem:[#allocation2 + $0x16a] sm:$0xff]
        %v1270 = vld [vmem:[#allocation2 + $0x172] sm:$0xff]
        %v1271 = vlaneseq
        %v1272 = vshrl.u32 %v1271, 7
        %v1273 = vsub.s32 2, %v1272
        %v1274 = vrot.slane %v1036, %v1273
        %v1275 = vmul.f32 %v1239, %v1274
        %v1276 = vmul.f32 %v1240, %v1274
        %v1277 = vmul.f32 %v1241, %v1274
        %v1278 = vmul.f32 %v1242, %v1274
        %v1279 = vmul.f32 %v1243, %v1274
        %v1280 = vmul.f32 %v1244, %v1274
        %v1281 = vmul.f32 %v1245, %v1274
        %v1282 = vmul.f32 %v1246, %v1274
        %v1283 = vmul.f32 %v1247, %v1274
        %v1284 = vmul.f32 %v1248, %v1274
        %v1285 = vmul.f32 %v1249, %v1274
        %v1286 = vmul.f32 %v1250, %v1274
        %v1287 = vmul.f32 %v1251, %v1274
        %v1288 = vmul.f32 %v1252, %v1274
        %v1289 = vmul.f32 %v1253, %v1274
        %v1290 = vmul.f32 %v1254, %v1274
        %v1291 = vmul.f32 %v1255, %v1274
        %v1292 = vmul.f32 %v1256, %v1274
        %v1293 = vmul.f32 %v1257, %v1274
        %v1294 = vmul.f32 %v1258, %v1274
        %v1295 = vmul.f32 %v1259, %v1274
        %v1296 = vmul.f32 %v1260, %v1274
        %v1297 = vmul.f32 %v1261, %v1274
        %v1298 = vmul.f32 %v1262, %v1274
        %v1299 = vmul.f32 %v1263, %v1274
        %v1300 = vmul.f32 %v1264, %v1274
        %v1301 = vmul.f32 %v1265, %v1274
        %v1302 = vmul.f32 %v1266, %v1274
        %v1303 = vmul.f32 %v1267, %v1274
        %v1304 = vmul.f32 %v1268, %v1274
        %v1305 = vmul.f32 %v1269, %v1274
        %v1306 = vmul.f32 %v1270, %v1274
        %v1307 = vadd.f32 %v1207, %v1275
        %v1308 = vadd.f32 %v1208, %v1276
        %v1309 = vadd.f32 %v1209, %v1277
        %v1310 = vadd.f32 %v1210, %v1278
        %v1311 = vadd.f32 %v1211, %v1279
        %v1312 = vadd.f32 %v1212, %v1280
        %v1313 = vadd.f32 %v1213, %v1281
        %v1314 = vadd.f32 %v1214, %v1282
        %v1315 = vadd.f32 %v1215, %v1283
        %v1316 = vadd.f32 %v1216, %v1284
        %v1317 = vadd.f32 %v1217, %v1285
        %v1318 = vadd.f32 %v1218, %v1286
        %v1319 = vadd.f32 %v1219, %v1287
        %v1320 = vadd.f32 %v1220, %v1288
        %v1321 = vadd.f32 %v1221, %v1289
        %v1322 = vadd.f32 %v1222, %v1290
        %v1323 = vadd.f32 %v1223, %v1291
        %v1324 = vadd.f32 %v1224, %v1292
        %v1325 = vadd.f32 %v1225, %v1293
        %v1326 = vadd.f32 %v1226, %v1294
        %v1327 = vadd.f32 %v1227, %v1295
        %v1328 = vadd.f32 %v1228, %v1296
        %v1329 = vadd.f32 %v1229, %v1297
        %v1330 = vadd.f32 %v1230, %v1298
        %v1331 = vadd.f32 %v1231, %v1299
        %v1332 = vadd.f32 %v1232, %v1300
        %v1333 = vadd.f32 %v1233, %v1301
        %v1334 = vadd.f32 %v1234, %v1302
        %v1335 = vadd.f32 %v1235, %v1303
        %v1336 = vadd.f32 %v1236, %v1304
        %v1337 = vadd.f32 %v1237, %v1305
        %v1338 = vadd.f32 %v1238, %v1306
        %v1339 = vld [vmem:[%s1003] sm:$0xff]
        %v1340 = vld [vmem:[%s1003 + $0x8] sm:$0xff]
        %v1341 = vld [vmem:[%s1003 + $0x18] sm:$0xff]
        %v1342 = vld [vmem:[%s1003 + $0x20] sm:$0xff]
        %v1343 = vld [vmem:[%s1003 + $0x30] sm:$0xff]
        %v1344 = vld [vmem:[%s1003 + $0x38] sm:$0xff]
        %v1345 = vld [vmem:[%s1003 + $0x48] sm:$0xff]
        %v1346 = vld [vmem:[%s1003 + $0x50] sm:$0xff]
        %v1347 = vld [vmem:[%s1003 + $0x60] sm:$0xff]
        %v1348 = vld [vmem:[%s1003 + $0x68] sm:$0xff]
        %v1349 = vld [vmem:[%s1003 + $0x78] sm:$0xff]
        %v1350 = vld [vmem:[%s1003 + $0x80] sm:$0xff]
        %v1351 = vld [vmem:[%s1003 + $0x90] sm:$0xff]
        %v1352 = vld [vmem:[%s1003 + $0x98] sm:$0xff]
        %v1353 = vld [vmem:[%s1003 + $0xa8] sm:$0xff]
        %v1354 = vld [vmem:[%s1003 + $0xb0] sm:$0xff]
        %v1355 = vld [vmem:[%s1003 + $0xc0] sm:$0xff]
        %v1356 = vld [vmem:[%s1003 + $0xc8] sm:$0xff]
        %v1357 = vld [vmem:[%s1003 + $0xd8] sm:$0xff]
        %v1358 = vld [vmem:[%s1003 + $0xe0] sm:$0xff]
        %v1359 = vld [vmem:[%s1003 + $0xf0] sm:$0xff]
        %v1360 = vld [vmem:[%s1003 + $0xf8] sm:$0xff]
        %v1361 = vld [vmem:[%s1003 + $0x108] sm:$0xff]
        %v1362 = vld [vmem:[%s1003 + $0x110] sm:$0xff]
        %v1363 = vld [vmem:[%s1003 + $0x120] sm:$0xff]
        %v1364 = vld [vmem:[%s1003 + $0x128] sm:$0xff]
        %v1365 = vld [vmem:[%s1003 + $0x138] sm:$0xff]
        %v1366 = vld [vmem:[%s1003 + $0x140] sm:$0xff]
        %v1367 = vld [vmem:[%s1003 + $0x150] sm:$0xff]
        %v1368 = vld [vmem:[%s1003 + $0x158] sm:$0xff]
        %v1369 = vld [vmem:[%s1003 + $0x168] sm:$0xff]
        %v1370 = vld [vmem:[%s1003 + $0x170] sm:$0xff]
        %v1371 = vlaneseq
        %v1372 = vshrl.u32 %v1371, 7
        %v1373 = vsub.s32 0, %v1372
        %v1374 = vrot.slane %v1037, %v1373
        %v1375 = vmul.f32 %v1339, %v1374
        %v1376 = vmul.f32 %v1340, %v1374
        %v1377 = vmul.f32 %v1341, %v1374
        %v1378 = vmul.f32 %v1342, %v1374
        %v1379 = vmul.f32 %v1343, %v1374
        %v1380 = vmul.f32 %v1344, %v1374
        %v1381 = vmul.f32 %v1345, %v1374
        %v1382 = vmul.f32 %v1346, %v1374
        %v1383 = vmul.f32 %v1347, %v1374
        %v1384 = vmul.f32 %v1348, %v1374
        %v1385 = vmul.f32 %v1349, %v1374
        %v1386 = vmul.f32 %v1350, %v1374
        %v1387 = vmul.f32 %v1351, %v1374
        %v1388 = vmul.f32 %v1352, %v1374
        %v1389 = vmul.f32 %v1353, %v1374
        %v1390 = vmul.f32 %v1354, %v1374
        %v1391 = vmul.f32 %v1355, %v1374
        %v1392 = vmul.f32 %v1356, %v1374
        %v1393 = vmul.f32 %v1357, %v1374
        %v1394 = vmul.f32 %v1358, %v1374
        %v1395 = vmul.f32 %v1359, %v1374
        %v1396 = vmul.f32 %v1360, %v1374
        %v1397 = vmul.f32 %v1361, %v1374
        %v1398 = vmul.f32 %v1362, %v1374
        %v1399 = vmul.f32 %v1363, %v1374
        %v1400 = vmul.f32 %v1364, %v1374
        %v1401 = vmul.f32 %v1365, %v1374
        %v1402 = vmul.f32 %v1366, %v1374
        %v1403 = vmul.f32 %v1367, %v1374
        %v1404 = vmul.f32 %v1368, %v1374
        %v1405 = vmul.f32 %v1369, %v1374
        %v1406 = vmul.f32 %v1370, %v1374
        %v1407 = vadd.f32 %v1307, %v1375
        %v1408 = vadd.f32 %v1308, %v1376
        %v1409 = vadd.f32 %v1309, %v1377
        %v1410 = vadd.f32 %v1310, %v1378
        %v1411 = vadd.f32 %v1311, %v1379
        %v1412 = vadd.f32 %v1312, %v1380
        %v1413 = vadd.f32 %v1313, %v1381
        %v1414 = vadd.f32 %v1314, %v1382
        %v1415 = vadd.f32 %v1315, %v1383
        %v1416 = vadd.f32 %v1316, %v1384
        %v1417 = vadd.f32 %v1317, %v1385
        %v1418 = vadd.f32 %v1318, %v1386
        %v1419 = vadd.f32 %v1319, %v1387
        %v1420 = vadd.f32 %v1320, %v1388
        %v1421 = vadd.f32 %v1321, %v1389
        %v1422 = vadd.f32 %v1322, %v1390
        %v1423 = vadd.f32 %v1323, %v1391
        %v1424 = vadd.f32 %v1324, %v1392
        %v1425 = vadd.f32 %v1325, %v1393
        %v1426 = vadd.f32 %v1326, %v1394
        %v1427 = vadd.f32 %v1327, %v1395
        %v1428 = vadd.f32 %v1328, %v1396
        %v1429 = vadd.f32 %v1329, %v1397
        %v1430 = vadd.f32 %v1330, %v1398
        %v1431 = vadd.f32 %v1331, %v1399
        %v1432 = vadd.f32 %v1332, %v1400
        %v1433 = vadd.f32 %v1333, %v1401
        %v1434 = vadd.f32 %v1334, %v1402
        %v1435 = vadd.f32 %v1335, %v1403
        %v1436 = vadd.f32 %v1336, %v1404
        %v1437 = vadd.f32 %v1337, %v1405
        %v1438 = vadd.f32 %v1338, %v1406
        %v1439 = vld [vmem:[%s1003 + $0x1] sm:$0xff]
        %v1440 = vld [vmem:[%s1003 + $0x9] sm:$0xff]
        %v1441 = vld [vmem:[%s1003 + $0x19] sm:$0xff]
        %v1442 = vld [vmem:[%s1003 + $0x21] sm:$0xff]
        %v1443 = vld [vmem:[%s1003 + $0x31] sm:$0xff]
        %v1444 = vld [vmem:[%s1003 + $0x39] sm:$0xff]
        %v1445 = vld [vmem:[%s1003 + $0x49] sm:$0xff]
        %v1446 = vld [vmem:[%s1003 + $0x51] sm:$0xff]
        %v1447 = vld [vmem:[%s1003 + $0x61] sm:$0xff]
        %v1448 = vld [vmem:[%s1003 + $0x69] sm:$0xff]
        %v1449 = vld [vmem:[%s1003 + $0x79] sm:$0xff]
        %v1450 = vld [vmem:[%s1003 + $0x81] sm:$0xff]
        %v1451 = vld [vmem:[%s1003 + $0x91] sm:$0xff]
        %v1452 = vld [vmem:[%s1003 + $0x99] sm:$0xff]
        %v1453 = vld [vmem:[%s1003 + $0xa9] sm:$0xff]
        %v1454 = vld [vmem:[%s1003 + $0xb1] sm:$0xff]
        %v1455 = vld [vmem:[%s1003 + $0xc1] sm:$0xff]
        %v1456 = vld [vmem:[%s1003 + $0xc9] sm:$0xff]
        %v1457 = vld [vmem:[%s1003 + $0xd9] sm:$0xff]
        %v1458 = vld [vmem:[%s1003 + $0xe1] sm:$0xff]
        %v1459 = vld [vmem:[%s1003 + $0xf1] sm:$0xff]
        %v1460 = vld [vmem:[%s1003 + $0xf9] sm:$0xff]
        %v1461 = vld [vmem:[%s1003 + $0x109] sm:$0xff]
        %v1462 = vld [vmem:[%s1003 + $0x111] sm:$0xff]
        %v1463 = vld [vmem:[%s1003 + $0x121] sm:$0xff]
        %v1464 = vld [vmem:[%s1003 + $0x129] sm:$0xff]
        %v1465 = vld [vmem:[%s1003 + $0x139] sm:$0xff]
        %v1466 = vld [vmem:[%s1003 + $0x141] sm:$0xff]
        %v1467 = vld [vmem:[%s1003 + $0x151] sm:$0xff]
        %v1468 = vld [vmem:[%s1003 + $0x159] sm:$0xff]
        %v1469 = vld [vmem:[%s1003 + $0x169] sm:$0xff]
        %v1470 = vld [vmem:[%s1003 + $0x171] sm:$0xff]
        %v1471 = vlaneseq
        %v1472 = vshrl.u32 %v1471, 7
        %v1473 = vsub.s32 1, %v1472
        %v1474 = vrot.slane %v1037, %v1473
        %v1475 = vmul.f32 %v1439, %v1474
        %v1476 = vmul.f32 %v1440, %v1474
        %v1477 = vmul.f32 %v1441, %v1474
        %v1478 = vmul.f32 %v1442, %v1474
        %v1479 = vmul.f32 %v1443, %v1474
        %v1480 = vmul.f32 %v1444, %v1474
        %v1481 = vmul.f32 %v1445, %v1474
        %v1482 = vmul.f32 %v1446, %v1474
        %v1483 = vmul.f32 %v1447, %v1474
        %v1484 = vmul.f32 %v1448, %v1474
        %v1485 = vmul.f32 %v1449, %v1474
        %v1486 = vmul.f32 %v1450, %v1474
        %v1487 = vmul.f32 %v1451, %v1474
        %v1488 = vmul.f32 %v1452, %v1474
        %v1489 = vmul.f32 %v1453, %v1474
        %v1490 = vmul.f32 %v1454, %v1474
        %v1491 = vmul.f32 %v1455, %v1474
        %v1492 = vmul.f32 %v1456, %v1474
        %v1493 = vmul.f32 %v1457, %v1474
        %v1494 = vmul.f32 %v1458, %v1474
        %v1495 = vmul.f32 %v1459, %v1474
        %v1496 = vmul.f32 %v1460, %v1474
        %v1497 = vmul.f32 %v1461, %v1474
        %v1498 = vmul.f32 %v1462, %v1474
        %v1499 = vmul.f32 %v1463, %v1474
        %v1500 = vmul.f32 %v1464, %v1474
        %v1501 = vmul.f32 %v1465, %v1474
        %v1502 = vmul.f32 %v1466, %v1474
        %v1503 = vmul.f32 %v1467, %v1474
        %v1504 = vmul.f32 %v1468, %v1474
        %v1505 = vmul.f32 %v1469, %v1474
        %v1506 = vmul.f32 %v1470, %v1474
        %v1507 = vadd.f32 %v1407, %v1475
        %v1508 = vadd.f32 %v1408, %v1476
        %v1509 = vadd.f32 %v1409, %v1477
        %v1510 = vadd.f32 %v1410, %v1478
        %v1511 = vadd.f32 %v1411, %v1479
        %v1512 = vadd.f32 %v1412, %v1480
        %v1513 = vadd.f32 %v1413, %v1481
        %v1514 = vadd.f32 %v1414, %v1482
        %v1515 = vadd.f32 %v1415, %v1483
        %v1516 = vadd.f32 %v1416, %v1484
        %v1517 = vadd.f32 %v1417, %v1485
        %v1518 = vadd.f32 %v1418, %v1486
        %v1519 = vadd.f32 %v1419, %v1487
        %v1520 = vadd.f32 %v1420, %v1488
        %v1521 = vadd.f32 %v1421, %v1489
        %v1522 = vadd.f32 %v1422, %v1490
        %v1523 = vadd.f32 %v1423, %v1491
        %v1524 = vadd.f32 %v1424, %v1492
        %v1525 = vadd.f32 %v1425, %v1493
        %v1526 = vadd.f32 %v1426, %v1494
        %v1527 = vadd.f32 %v1427, %v1495
        %v1528 = vadd.f32 %v1428, %v1496
        %v1529 = vadd.f32 %v1429, %v1497
        %v1530 = vadd.f32 %v1430, %v1498
        %v1531 = vadd.f32 %v1431, %v1499
        %v1532 = vadd.f32 %v1432, %v1500
        %v1533 = vadd.f32 %v1433, %v1501
        %v1534 = vadd.f32 %v1434, %v1502
        %v1535 = vadd.f32 %v1435, %v1503
        %v1536 = vadd.f32 %v1436, %v1504
        %v1537 = vadd.f32 %v1437, %v1505
        %v1538 = vadd.f32 %v1438, %v1506
        %v1539 = vld [vmem:[%s1003 + $0x2] sm:$0xff]
        %v1540 = vld [vmem:[%s1003 + $0xa] sm:$0xff]
        %v1541 = vld [vmem:[%s1003 + $0x1a] sm:$0xff]
        %v1542 = vld [vmem:[%s1003 + $0x22] sm:$0xff]
        %v1543 = vld [vmem:[%s1003 + $0x32] sm:$0xff]
        %v1544 = vld [vmem:[%s1003 + $0x3a] sm:$0xff]
        %v1545 = vld [vmem:[%s1003 + $0x4a] sm:$0xff]
        %v1546 = vld [vmem:[%s1003 + $0x52] sm:$0xff]
        %v1547 = vld [vmem:[%s1003 + $0x62] sm:$0xff]
        %v1548 = vld [vmem:[%s1003 + $0x6a] sm:$0xff]
        %v1549 = vld [vmem:[%s1003 + $0x7a] sm:$0xff]
        %v1550 = vld [vmem:[%s1003 + $0x82] sm:$0xff]
        %v1551 = vld [vmem:[%s1003 + $0x92] sm:$0xff]
        %v1552 = vld [vmem:[%s1003 + $0x9a] sm:$0xff]
        %v1553 = vld [vmem:[%s1003 + $0xaa] sm:$0xff]
        %v1554 = vld [vmem:[%s1003 + $0xb2] sm:$0xff]
        %v1555 = vld [vmem:[%s1003 + $0xc2] sm:$0xff]
        %v1556 = vld [vmem:[%s1003 + $0xca] sm:$0xff]
        %v1557 = vld [vmem:[%s1003 + $0xda] sm:$0xff]
        %v1558 = vld [vmem:[%s1003 + $0xe2] sm:$0xff]
        %v1559 = vld [vmem:[%s1003 + $0xf2] sm:$0xff]
        %v1560 = vld [vmem:[%s1003 + $0xfa] sm:$0xff]
        %v1561 = vld [vmem:[%s1003 + $0x10a] sm:$0xff]
        %v1562 = vld [vmem:[%s1003 + $0x112] sm:$0xff]
        %v1563 = vld [vmem:[%s1003 + $0x122] sm:$0xff]
        %v1564 = vld [vmem:[%s1003 + $0x12a] sm:$0xff]
        %v1565 = vld [vmem:[%s1003 + $0x13a] sm:$0xff]
        %v1566 = vld [vmem:[%s1003 + $0x142] sm:$0xff]
        %v1567 = vld [vmem:[%s1003 + $0x152] sm:$0xff]
        %v1568 = vld [vmem:[%s1003 + $0x15a] sm:$0xff]
        %v1569 = vld [vmem:[%s1003 + $0x16a] sm:$0xff]
        %v1570 = vld [vmem:[%s1003 + $0x172] sm:$0xff]
        %v1571 = vlaneseq
        %v1572 = vshrl.u32 %v1571, 7
        %v1573 = vsub.s32 2, %v1572
        %v1574 = vrot.slane %v1037, %v1573
        %v1575 = vmul.f32 %v1539, %v1574
        %v1576 = vmul.f32 %v1540, %v1574
        %v1577 = vmul.f32 %v1541, %v1574
        %v1578 = vmul.f32 %v1542, %v1574
        %v1579 = vmul.f32 %v1543, %v1574
        %v1580 = vmul.f32 %v1544, %v1574
        %v1581 = vmul.f32 %v1545, %v1574
        %v1582 = vmul.f32 %v1546, %v1574
        %v1583 = vmul.f32 %v1547, %v1574
        %v1584 = vmul.f32 %v1548, %v1574
        %v1585 = vmul.f32 %v1549, %v1574
        %v1586 = vmul.f32 %v1550, %v1574
        %v1587 = vmul.f32 %v1551, %v1574
        %v1588 = vmul.f32 %v1552, %v1574
        %v1589 = vmul.f32 %v1553, %v1574
        %v1590 = vmul.f32 %v1554, %v1574
        %v1591 = vmul.f32 %v1555, %v1574
        %v1592 = vmul.f32 %v1556, %v1574
        %v1593 = vmul.f32 %v1557, %v1574
        %v1594 = vmul.f32 %v1558, %v1574
        %v1595 = vmul.f32 %v1559, %v1574
        %v1596 = vmul.f32 %v1560, %v1574
        %v1597 = vmul.f32 %v1561, %v1574
        %v1598 = vmul.f32 %v1562, %v1574
        %v1599 = vmul.f32 %v1563, %v1574
        %v1600 = vmul.f32 %v1564, %v1574
        %v1601 = vmul.f32 %v1565, %v1574
        %v1602 = vmul.f32 %v1566, %v1574
        %v1603 = vmul.f32 %v1567, %v1574
        %v1604 = vmul.f32 %v1568, %v1574
        %v1605 = vmul.f32 %v1569, %v1574
        %v1606 = vmul.f32 %v1570, %v1574
        %v1607 = vadd.f32 %v1507, %v1575
        %v1608 = vadd.f32 %v1508, %v1576
        %v1609 = vadd.f32 %v1509, %v1577
        %v1610 = vadd.f32 %v1510, %v1578
        %v1611 = vadd.f32 %v1511, %v1579
        %v1612 = vadd.f32 %v1512, %v1580
        %v1613 = vadd.f32 %v1513, %v1581
        %v1614 = vadd.f32 %v1514, %v1582
        %v1615 = vadd.f32 %v1515, %v1583
        %v1616 = vadd.f32 %v1516, %v1584
        %v1617 = vadd.f32 %v1517, %v1585
        %v1618 = vadd.f32 %v1518, %v1586
        %v1619 = vadd.f32 %v1519, %v1587
        %v1620 = vadd.f32 %v1520, %v1588
        %v1621 = vadd.f32 %v1521, %v1589
        %v1622 = vadd.f32 %v1522, %v1590
        %v1623 = vadd.f32 %v1523, %v1591
        %v1624 = vadd.f32 %v1524, %v1592
        %v1625 = vadd.f32 %v1525, %v1593
        %v1626 = vadd.f32 %v1526, %v1594
        %v1627 = vadd.f32 %v1527, %v1595
        %v1628 = vadd.f32 %v1528, %v1596
        %v1629 = vadd.f32 %v1529, %v1597
        %v1630 = vadd.f32 %v1530, %v1598
        %v1631 = vadd.f32 %v1531, %v1599
        %v1632 = vadd.f32 %v1532, %v1600
        %v1633 = vadd.f32 %v1533, %v1601
        %v1634 = vadd.f32 %v1534, %v1602
        %v1635 = vadd.f32 %v1535, %v1603
        %v1636 = vadd.f32 %v1536, %v1604
        %v1637 = vadd.f32 %v1537, %v1605
        %v1638 = vadd.f32 %v1538, %v1606
        %s1639 = scalar_lea.vmem [#allocation2], 48
        %v1640 = vld [vmem:[%s1639] sm:$0xff]
        %v1641 = vld [vmem:[%s1639 + $0x8] sm:$0xff]
        %v1642 = vld [vmem:[%s1639 + $0x18] sm:$0xff]
        %v1643 = vld [vmem:[%s1639 + $0x20] sm:$0xff]
        %v1644 = vld [vmem:[%s1639 + $0x30] sm:$0xff]
        %v1645 = vld [vmem:[%s1639 + $0x38] sm:$0xff]
        %v1646 = vld [vmem:[%s1639 + $0x48] sm:$0xff]
        %v1647 = vld [vmem:[%s1639 + $0x50] sm:$0xff]
        %v1648 = vld [vmem:[%s1639 + $0x60] sm:$0xff]
        %v1649 = vld [vmem:[%s1639 + $0x68] sm:$0xff]
        %v1650 = vld [vmem:[%s1639 + $0x78] sm:$0xff]
        %v1651 = vld [vmem:[%s1639 + $0x80] sm:$0xff]
        %v1652 = vld [vmem:[%s1639 + $0x90] sm:$0xff]
        %v1653 = vld [vmem:[%s1639 + $0x98] sm:$0xff]
        %v1654 = vld [vmem:[%s1639 + $0xa8] sm:$0xff]
        %v1655 = vld [vmem:[%s1639 + $0xb0] sm:$0xff]
        %v1656 = vld [vmem:[%s1639 + $0xc0] sm:$0xff]
        %v1657 = vld [vmem:[%s1639 + $0xc8] sm:$0xff]
        %v1658 = vld [vmem:[%s1639 + $0xd8] sm:$0xff]
        %v1659 = vld [vmem:[%s1639 + $0xe0] sm:$0xff]
        %v1660 = vld [vmem:[%s1639 + $0xf0] sm:$0xff]
        %v1661 = vld [vmem:[%s1639 + $0xf8] sm:$0xff]
        %v1662 = vld [vmem:[%s1639 + $0x108] sm:$0xff]
        %v1663 = vld [vmem:[%s1639 + $0x110] sm:$0xff]
        %v1664 = vld [vmem:[%s1639 + $0x120] sm:$0xff]
        %v1665 = vld [vmem:[%s1639 + $0x128] sm:$0xff]
        %v1666 = vld [vmem:[%s1639 + $0x138] sm:$0xff]
        %v1667 = vld [vmem:[%s1639 + $0x140] sm:$0xff]
        %v1668 = vld [vmem:[%s1639 + $0x150] sm:$0xff]
        %v1669 = vld [vmem:[%s1639 + $0x158] sm:$0xff]
        %v1670 = vld [vmem:[%s1639 + $0x168] sm:$0xff]
        %v1671 = vld [vmem:[%s1639 + $0x170] sm:$0xff]
        %v1672 = vlaneseq
        %v1673 = vshrl.u32 %v1672, 7
        %v1674 = vsub.s32 0, %v1673
        %v1675 = vrot.slane %v1038, %v1674
        %v1676 = vmul.f32 %v1640, %v1675
        %v1677 = vmul.f32 %v1641, %v1675
        %v1678 = vmul.f32 %v1642, %v1675
        %v1679 = vmul.f32 %v1643, %v1675
        %v1680 = vmul.f32 %v1644, %v1675
        %v1681 = vmul.f32 %v1645, %v1675
        %v1682 = vmul.f32 %v1646, %v1675
        %v1683 = vmul.f32 %v1647, %v1675
        %v1684 = vmul.f32 %v1648, %v1675
        %v1685 = vmul.f32 %v1649, %v1675
        %v1686 = vmul.f32 %v1650, %v1675
        %v1687 = vmul.f32 %v1651, %v1675
        %v1688 = vmul.f32 %v1652, %v1675
        %v1689 = vmul.f32 %v1653, %v1675
        %v1690 = vmul.f32 %v1654, %v1675
        %v1691 = vmul.f32 %v1655, %v1675
        %v1692 = vmul.f32 %v1656, %v1675
        %v1693 = vmul.f32 %v1657, %v1675
        %v1694 = vmul.f32 %v1658, %v1675
        %v1695 = vmul.f32 %v1659, %v1675
        %v1696 = vmul.f32 %v1660, %v1675
        %v1697 = vmul.f32 %v1661, %v1675
        %v1698 = vmul.f32 %v1662, %v1675
        %v1699 = vmul.f32 %v1663, %v1675
        %v1700 = vmul.f32 %v1664, %v1675
        %v1701 = vmul.f32 %v1665, %v1675
        %v1702 = vmul.f32 %v1666, %v1675
        %v1703 = vmul.f32 %v1667, %v1675
        %v1704 = vmul.f32 %v1668, %v1675
        %v1705 = vmul.f32 %v1669, %v1675
        %v1706 = vmul.f32 %v1670, %v1675
        %v1707 = vmul.f32 %v1671, %v1675
        %v1708 = vadd.f32 %v1607, %v1676
        %v1709 = vadd.f32 %v1608, %v1677
        %v1710 = vadd.f32 %v1609, %v1678
        %v1711 = vadd.f32 %v1610, %v1679
        %v1712 = vadd.f32 %v1611, %v1680
        %v1713 = vadd.f32 %v1612, %v1681
        %v1714 = vadd.f32 %v1613, %v1682
        %v1715 = vadd.f32 %v1614, %v1683
        %v1716 = vadd.f32 %v1615, %v1684
        %v1717 = vadd.f32 %v1616, %v1685
        %v1718 = vadd.f32 %v1617, %v1686
        %v1719 = vadd.f32 %v1618, %v1687
        %v1720 = vadd.f32 %v1619, %v1688
        %v1721 = vadd.f32 %v1620, %v1689
        %v1722 = vadd.f32 %v1621, %v1690
        %v1723 = vadd.f32 %v1622, %v1691
        %v1724 = vadd.f32 %v1623, %v1692
        %v1725 = vadd.f32 %v1624, %v1693
        %v1726 = vadd.f32 %v1625, %v1694
        %v1727 = vadd.f32 %v1626, %v1695
        %v1728 = vadd.f32 %v1627, %v1696
        %v1729 = vadd.f32 %v1628, %v1697
        %v1730 = vadd.f32 %v1629, %v1698
        %v1731 = vadd.f32 %v1630, %v1699
        %v1732 = vadd.f32 %v1631, %v1700
        %v1733 = vadd.f32 %v1632, %v1701
        %v1734 = vadd.f32 %v1633, %v1702
        %v1735 = vadd.f32 %v1634, %v1703
        %v1736 = vadd.f32 %v1635, %v1704
        %v1737 = vadd.f32 %v1636, %v1705
        %v1738 = vadd.f32 %v1637, %v1706
        %v1739 = vadd.f32 %v1638, %v1707
        %v1740 = vld [vmem:[%s1639 + $0x1] sm:$0xff]
        %v1741 = vld [vmem:[%s1639 + $0x9] sm:$0xff]
        %v1742 = vld [vmem:[%s1639 + $0x19] sm:$0xff]
        %v1743 = vld [vmem:[%s1639 + $0x21] sm:$0xff]
        %v1744 = vld [vmem:[%s1639 + $0x31] sm:$0xff]
        %v1745 = vld [vmem:[%s1639 + $0x39] sm:$0xff]
        %v1746 = vld [vmem:[%s1639 + $0x49] sm:$0xff]
        %v1747 = vld [vmem:[%s1639 + $0x51] sm:$0xff]
        %v1748 = vld [vmem:[%s1639 + $0x61] sm:$0xff]
        %v1749 = vld [vmem:[%s1639 + $0x69] sm:$0xff]
        %v1750 = vld [vmem:[%s1639 + $0x79] sm:$0xff]
        %v1751 = vld [vmem:[%s1639 + $0x81] sm:$0xff]
        %v1752 = vld [vmem:[%s1639 + $0x91] sm:$0xff]
        %v1753 = vld [vmem:[%s1639 + $0x99] sm:$0xff]
        %v1754 = vld [vmem:[%s1639 + $0xa9] sm:$0xff]
        %v1755 = vld [vmem:[%s1639 + $0xb1] sm:$0xff]
        %v1756 = vld [vmem:[%s1639 + $0xc1] sm:$0xff]
        %v1757 = vld [vmem:[%s1639 + $0xc9] sm:$0xff]
        %v1758 = vld [vmem:[%s1639 + $0xd9] sm:$0xff]
        %v1759 = vld [vmem:[%s1639 + $0xe1] sm:$0xff]
        %v1760 = vld [vmem:[%s1639 + $0xf1] sm:$0xff]
        %v1761 = vld [vmem:[%s1639 + $0xf9] sm:$0xff]
        %v1762 = vld [vmem:[%s1639 + $0x109] sm:$0xff]
        %v1763 = vld [vmem:[%s1639 + $0x111] sm:$0xff]
        %v1764 = vld [vmem:[%s1639 + $0x121] sm:$0xff]
        %v1765 = vld [vmem:[%s1639 + $0x129] sm:$0xff]
        %v1766 = vld [vmem:[%s1639 + $0x139] sm:$0xff]
        %v1767 = vld [vmem:[%s1639 + $0x141] sm:$0xff]
        %v1768 = vld [vmem:[%s1639 + $0x151] sm:$0xff]
        %v1769 = vld [vmem:[%s1639 + $0x159] sm:$0xff]
        %v1770 = vld [vmem:[%s1639 + $0x169] sm:$0xff]
        %v1771 = vld [vmem:[%s1639 + $0x171] sm:$0xff]
        %v1772 = vlaneseq
        %v1773 = vshrl.u32 %v1772, 7
        %v1774 = vsub.s32 1, %v1773
        %v1775 = vrot.slane %v1038, %v1774
        %v1776 = vmul.f32 %v1740, %v1775
        %v1777 = vmul.f32 %v1741, %v1775
        %v1778 = vmul.f32 %v1742, %v1775
        %v1779 = vmul.f32 %v1743, %v1775
        %v1780 = vmul.f32 %v1744, %v1775
        %v1781 = vmul.f32 %v1745, %v1775
        %v1782 = vmul.f32 %v1746, %v1775
        %v1783 = vmul.f32 %v1747, %v1775
        %v1784 = vmul.f32 %v1748, %v1775
        %v1785 = vmul.f32 %v1749, %v1775
        %v1786 = vmul.f32 %v1750, %v1775
        %v1787 = vmul.f32 %v1751, %v1775
        %v1788 = vmul.f32 %v1752, %v1775
        %v1789 = vmul.f32 %v1753, %v1775
        %v1790 = vmul.f32 %v1754, %v1775
        %v1791 = vmul.f32 %v1755, %v1775
        %v1792 = vmul.f32 %v1756, %v1775
        %v1793 = vmul.f32 %v1757, %v1775
        %v1794 = vmul.f32 %v1758, %v1775
        %v1795 = vmul.f32 %v1759, %v1775
        %v1796 = vmul.f32 %v1760, %v1775
        %v1797 = vmul.f32 %v1761, %v1775
        %v1798 = vmul.f32 %v1762, %v1775
        %v1799 = vmul.f32 %v1763, %v1775
        %v1800 = vmul.f32 %v1764, %v1775
        %v1801 = vmul.f32 %v1765, %v1775
        %v1802 = vmul.f32 %v1766, %v1775
        %v1803 = vmul.f32 %v1767, %v1775
        %v1804 = vmul.f32 %v1768, %v1775
        %v1805 = vmul.f32 %v1769, %v1775
        %v1806 = vmul.f32 %v1770, %v1775
        %v1807 = vmul.f32 %v1771, %v1775
        %v1808 = vadd.f32 %v1708, %v1776
        %v1809 = vadd.f32 %v1709, %v1777
        %v1810 = vadd.f32 %v1710, %v1778
        %v1811 = vadd.f32 %v1711, %v1779
        %v1812 = vadd.f32 %v1712, %v1780
        %v1813 = vadd.f32 %v1713, %v1781
        %v1814 = vadd.f32 %v1714, %v1782
        %v1815 = vadd.f32 %v1715, %v1783
        %v1816 = vadd.f32 %v1716, %v1784
        %v1817 = vadd.f32 %v1717, %v1785
        %v1818 = vadd.f32 %v1718, %v1786
        %v1819 = vadd.f32 %v1719, %v1787
        %v1820 = vadd.f32 %v1720, %v1788
        %v1821 = vadd.f32 %v1721, %v1789
        %v1822 = vadd.f32 %v1722, %v1790
        %v1823 = vadd.f32 %v1723, %v1791
        %v1824 = vadd.f32 %v1724, %v1792
        %v1825 = vadd.f32 %v1725, %v1793
        %v1826 = vadd.f32 %v1726, %v1794
        %v1827 = vadd.f32 %v1727, %v1795
        %v1828 = vadd.f32 %v1728, %v1796
        %v1829 = vadd.f32 %v1729, %v1797
        %v1830 = vadd.f32 %v1730, %v1798
        %v1831 = vadd.f32 %v1731, %v1799
        %v1832 = vadd.f32 %v1732, %v1800
        %v1833 = vadd.f32 %v1733, %v1801
        %v1834 = vadd.f32 %v1734, %v1802
        %v1835 = vadd.f32 %v1735, %v1803
        %v1836 = vadd.f32 %v1736, %v1804
        %v1837 = vadd.f32 %v1737, %v1805
        %v1838 = vadd.f32 %v1738, %v1806
        %v1839 = vadd.f32 %v1739, %v1807
        %v1840 = vld [vmem:[%s1639 + $0x2] sm:$0xff]
        %v1841 = vld [vmem:[%s1639 + $0xa] sm:$0xff]
        %v1842 = vld [vmem:[%s1639 + $0x1a] sm:$0xff]
        %v1843 = vld [vmem:[%s1639 + $0x22] sm:$0xff]
        %v1844 = vld [vmem:[%s1639 + $0x32] sm:$0xff]
        %v1845 = vld [vmem:[%s1639 + $0x3a] sm:$0xff]
        %v1846 = vld [vmem:[%s1639 + $0x4a] sm:$0xff]
        %v1847 = vld [vmem:[%s1639 + $0x52] sm:$0xff]
        %v1848 = vld [vmem:[%s1639 + $0x62] sm:$0xff]
        %v1849 = vld [vmem:[%s1639 + $0x6a] sm:$0xff]
        %v1850 = vld [vmem:[%s1639 + $0x7a] sm:$0xff]
        %v1851 = vld [vmem:[%s1639 + $0x82] sm:$0xff]
        %v1852 = vld [vmem:[%s1639 + $0x92] sm:$0xff]
        %v1853 = vld [vmem:[%s1639 + $0x9a] sm:$0xff]
        %v1854 = vld [vmem:[%s1639 + $0xaa] sm:$0xff]
        %v1855 = vld [vmem:[%s1639 + $0xb2] sm:$0xff]
        %v1856 = vld [vmem:[%s1639 + $0xc2] sm:$0xff]
        %v1857 = vld [vmem:[%s1639 + $0xca] sm:$0xff]
        %v1858 = vld [vmem:[%s1639 + $0xda] sm:$0xff]
        %v1859 = vld [vmem:[%s1639 + $0xe2] sm:$0xff]
        %v1860 = vld [vmem:[%s1639 + $0xf2] sm:$0xff]
        %v1861 = vld [vmem:[%s1639 + $0xfa] sm:$0xff]
        %v1862 = vld [vmem:[%s1639 + $0x10a] sm:$0xff]
        %v1863 = vld [vmem:[%s1639 + $0x112] sm:$0xff]
        %v1864 = vld [vmem:[%s1639 + $0x122] sm:$0xff]
        %v1865 = vld [vmem:[%s1639 + $0x12a] sm:$0xff]
        %v1866 = vld [vmem:[%s1639 + $0x13a] sm:$0xff]
        %v1867 = vld [vmem:[%s1639 + $0x142] sm:$0xff]
        %v1868 = vld [vmem:[%s1639 + $0x152] sm:$0xff]
        %v1869 = vld [vmem:[%s1639 + $0x15a] sm:$0xff]
        %v1870 = vld [vmem:[%s1639 + $0x16a] sm:$0xff]
        %v1871 = vld [vmem:[%s1639 + $0x172] sm:$0xff]
        %v1872 = vlaneseq
        %v1873 = vshrl.u32 %v1872, 7
        %v1874 = vsub.s32 2, %v1873
        %v1875 = vrot.slane %v1038, %v1874
        %v1876 = vmul.f32 %v1840, %v1875
        %v1877 = vmul.f32 %v1841, %v1875
        %v1878 = vmul.f32 %v1842, %v1875
        %v1879 = vmul.f32 %v1843, %v1875
        %v1880 = vmul.f32 %v1844, %v1875
        %v1881 = vmul.f32 %v1845, %v1875
        %v1882 = vmul.f32 %v1846, %v1875
        %v1883 = vmul.f32 %v1847, %v1875
        %v1884 = vmul.f32 %v1848, %v1875
        %v1885 = vmul.f32 %v1849, %v1875
        %v1886 = vmul.f32 %v1850, %v1875
        %v1887 = vmul.f32 %v1851, %v1875
        %v1888 = vmul.f32 %v1852, %v1875
        %v1889 = vmul.f32 %v1853, %v1875
        %v1890 = vmul.f32 %v1854, %v1875
        %v1891 = vmul.f32 %v1855, %v1875
        %v1892 = vmul.f32 %v1856, %v1875
        %v1893 = vmul.f32 %v1857, %v1875
        %v1894 = vmul.f32 %v1858, %v1875
        %v1895 = vmul.f32 %v1859, %v1875
        %v1896 = vmul.f32 %v1860, %v1875
        %v1897 = vmul.f32 %v1861, %v1875
        %v1898 = vmul.f32 %v1862, %v1875
        %v1899 = vmul.f32 %v1863, %v1875
        %v1900 = vmul.f32 %v1864, %v1875
        %v1901 = vmul.f32 %v1865, %v1875
        %v1902 = vmul.f32 %v1866, %v1875
        %v1903 = vmul.f32 %v1867, %v1875
        %v1904 = vmul.f32 %v1868, %v1875
        %v1905 = vmul.f32 %v1869, %v1875
        %v1906 = vmul.f32 %v1870, %v1875
        %v1907 = vmul.f32 %v1871, %v1875
        %v1908 = vadd.f32 %v1808, %v1876
        %v1909 = vadd.f32 %v1809, %v1877
        %v1910 = vadd.f32 %v1810, %v1878
        %v1911 = vadd.f32 %v1811, %v1879
        %v1912 = vadd.f32 %v1812, %v1880
        %v1913 = vadd.f32 %v1813, %v1881
        %v1914 = vadd.f32 %v1814, %v1882
        %v1915 = vadd.f32 %v1815, %v1883
        %v1916 = vadd.f32 %v1816, %v1884
        %v1917 = vadd.f32 %v1817, %v1885
        %v1918 = vadd.f32 %v1818, %v1886
        %v1919 = vadd.f32 %v1819, %v1887
        %v1920 = vadd.f32 %v1820, %v1888
        %v1921 = vadd.f32 %v1821, %v1889
        %v1922 = vadd.f32 %v1822, %v1890
        %v1923 = vadd.f32 %v1823, %v1891
        %v1924 = vadd.f32 %v1824, %v1892
        %v1925 = vadd.f32 %v1825, %v1893
        %v1926 = vadd.f32 %v1826, %v1894
        %v1927 = vadd.f32 %v1827, %v1895
        %v1928 = vadd.f32 %v1828, %v1896
        %v1929 = vadd.f32 %v1829, %v1897
        %v1930 = vadd.f32 %v1830, %v1898
        %v1931 = vadd.f32 %v1831, %v1899
        %v1932 = vadd.f32 %v1832, %v1900
        %v1933 = vadd.f32 %v1833, %v1901
        %v1934 = vadd.f32 %v1834, %v1902
        %v1935 = vadd.f32 %v1835, %v1903
        %v1936 = vadd.f32 %v1836, %v1904
        %v1937 = vadd.f32 %v1837, %v1905
        %v1938 = vadd.f32 %v1838, %v1906
        %v1939 = vadd.f32 %v1839, %v1907
        %v1940 = vld [vmem:[%s4] sm:$0x1]
        %v1942 = vlaneseq
        %v1943 = vshrl.u32 %v1942, 7
        %v1944 = vsub.s32 0, %v1943
        %v1945 = vrot.slane %v1940, %v1944
        %v1947 = vadd.f32 %v1908, %v1945
        %v1948 = vadd.f32 %v1909, %v1945
        %v1949 = vadd.f32 %v1910, %v1945
        %v1950 = vadd.f32 %v1911, %v1945
        %v1951 = vadd.f32 %v1912, %v1945
        %v1952 = vadd.f32 %v1913, %v1945
        %v1953 = vadd.f32 %v1914, %v1945
        %v1954 = vadd.f32 %v1915, %v1945
        %v1955 = vadd.f32 %v1916, %v1945
        %v1956 = vadd.f32 %v1917, %v1945
        %v1957 = vadd.f32 %v1918, %v1945
        %v1958 = vadd.f32 %v1919, %v1945
        %v1959 = vadd.f32 %v1920, %v1945
        %v1960 = vadd.f32 %v1921, %v1945
        %v1961 = vadd.f32 %v1922, %v1945
        %v1962 = vadd.f32 %v1923, %v1945
        %v1963 = vadd.f32 %v1924, %v1945
        %v1964 = vadd.f32 %v1925, %v1945
        %v1965 = vadd.f32 %v1926, %v1945
        %v1966 = vadd.f32 %v1927, %v1945
        %v1967 = vadd.f32 %v1928, %v1945
        %v1968 = vadd.f32 %v1929, %v1945
        %v1969 = vadd.f32 %v1930, %v1945
        %v1970 = vadd.f32 %v1931, %v1945
        %v1971 = vadd.f32 %v1932, %v1945
        %v1972 = vadd.f32 %v1933, %v1945
        %v1973 = vadd.f32 %v1934, %v1945
        %v1974 = vadd.f32 %v1935, %v1945
        %v1975 = vadd.f32 %v1936, %v1945
        %v1976 = vadd.f32 %v1937, %v1945
        %v1977 = vadd.f32 %v1938, %v1945
        %v1978 = vadd.f32 %v1939, %v1945
        %v1979 = vmax.f32 %v1947, 0.0
        %v1980 = vmax.f32 %v1948, 0.0
        %v1981 = vmax.f32 %v1949, 0.0
        %v1982 = vmax.f32 %v1950, 0.0
        %v1983 = vmax.f32 %v1951, 0.0
        %v1984 = vmax.f32 %v1952, 0.0
        %v1985 = vmax.f32 %v1953, 0.0
        %v1986 = vmax.f32 %v1954, 0.0
        %v1987 = vmax.f32 %v1955, 0.0
        %v1988 = vmax.f32 %v1956, 0.0
        %v1989 = vmax.f32 %v1957, 0.0
        %v1990 = vmax.f32 %v1958, 0.0
        %v1991 = vmax.f32 %v1959, 0.0
        %v1992 = vmax.f32 %v1960, 0.0
        %v1993 = vmax.f32 %v1961, 0.0
        %v1994 = vmax.f32 %v1962, 0.0
        %v1995 = vmax.f32 %v1963, 0.0
        %v1996 = vmax.f32 %v1964, 0.0
        %v1997 = vmax.f32 %v1965, 0.0
        %v1998 = vmax.f32 %v1966, 0.0
        %v1999 = vmax.f32 %v1967, 0.0
        %v2000 = vmax.f32 %v1968, 0.0
        %v2001 = vmax.f32 %v1969, 0.0
        %v2002 = vmax.f32 %v1970, 0.0
        %v2003 = vmax.f32 %v1971, 0.0
        %v2004 = vmax.f32 %v1972, 0.0
        %v2005 = vmax.f32 %v1973, 0.0
        %v2006 = vmax.f32 %v1974, 0.0
        %v2007 = vmax.f32 %v1975, 0.0
        %v2008 = vmax.f32 %v1976, 0.0
        %v2009 = vmax.f32 %v1977, 0.0
        %v2010 = vmax.f32 %v1978, 0.0
        %v2011 = vld [vmem:[%s5] sm:$0xff]
        %v2012 = vld [vmem:[%s5 + $0x8] sm:$0xff]
        %v2013 = vld [vmem:[%s5 + $0x10] sm:$0xff]
        %v2014 = vld [vmem:[%s5 + $0x18] sm:$0xff]
        %v2015 = vld [vmem:[%s5 + $0x20] sm:$0xff]
        %v2016 = vld [vmem:[%s5 + $0x28] sm:$0xff]
        %v2017 = vld [vmem:[%s5 + $0x30] sm:$0xff]
        %v2018 = vld [vmem:[%s5 + $0x38] sm:$0xff]
        %v2019 = vld [vmem:[#allocation8] sm:$0x1]
        %v2021 = vlaneseq
        %v2022 = vshrl.u32 %v2021, 7
        %v2023 = vsub.s32 0, %v2022
        %v2024 = vrot.slane %v2019, %v2023
        %v2027 = vsel %vm957, %v1979, 0
        %v2030 = vsel %vm957, %v1980, 0
        %v2033 = vsel %vm957, %v1981, 0
        %v2036 = vsel %vm957, %v1982, 0
        %v2039 = vsel %vm957, %v1983, 0
        %v2042 = vsel %vm957, %v1984, 0
        %v2045 = vsel %vm957, %v1985, 0
        %v2048 = vsel %vm957, %v1986, 0
        %v2051 = vsel %vm957, %v1987, 0
        %v2054 = vsel %vm957, %v1988, 0
        %v2057 = vsel %vm957, %v1989, 0
        %v2060 = vsel %vm957, %v1990, 0
        %v2063 = vsel %vm957, %v1991, 0
        %v2066 = vsel %vm957, %v1992, 0
        %v2069 = vsel %vm957, %v1993, 0
        %v2072 = vsel %vm957, %v1994, 0
        %v2075 = vsel %vm957, %v1995, 0
        %v2078 = vsel %vm957, %v1996, 0
        %v2081 = vsel %vm957, %v1997, 0
        %v2084 = vsel %vm957, %v1998, 0
        %v2087 = vsel %vm957, %v1999, 0
        %v2090 = vsel %vm957, %v2000, 0
        %v2093 = vsel %vm957, %v2001, 0
        %v2096 = vsel %vm957, %v2002, 0
        %v2099 = vsel %vm957, %v2003, 0
        %v2102 = vsel %vm957, %v2004, 0
        %v2105 = vsel %vm957, %v2005, 0
        %v2108 = vsel %vm957, %v2006, 0
        %v2111 = vsel %vm957, %v2007, 0
        %v2114 = vsel %vm957, %v2008, 0
        %v2117 = vsel %vm957, %v2009, 0
        %v2120 = vsel %vm957, %v2010, 0
        %2122 = vmatprep.subr.mxu0 0.0
        %2123 = vmatpush1.msra.mxu0 %v2011
        %2124 = vmatprep.subr.mxu0 0.0
        %2125 = vmatpush1.msra.mxu0 %v2012
        %2126 = vmatprep.subr.mxu0 0.0
        %2127 = vmatpush1.msra.mxu0 %v2013
        %2128 = vmatprep.subr.mxu0 0.0
        %2129 = vmatpush1.msra.mxu0 %v2014
        %2130 = vmatprep.subr.mxu0 0.0
        %2131 = vmatpush1.msra.mxu0 %v2015
        %2132 = vmatprep.subr.mxu0 0.0
        %2133 = vmatpush1.msra.mxu0 %v2016
        %2134 = vmatprep.subr.mxu0 0.0
        %2135 = vmatpush1.msra.mxu0 %v2017
        %2136 = vmatprep.subr.mxu0 0.0
        %2137 = vmatpush1.msra.mxu0 %v2018
        %2138 = vmatprep.subr.mxu0 0.0
        %2139 = vmatpush1.msra.mxu0 0.0
        %2140 = vmatprep.subr.mxu0 0.0
        %2141 = vmatpush1.msra.mxu0 0.0
        %2142 = vmatprep.subr.mxu0 0.0
        %2143 = vmatpush1.msra.mxu0 0.0
        %2144 = vmatprep.subr.mxu0 0.0
        %2145 = vmatpush1.msra.mxu0 0.0
        %2146 = vmatprep.subr.mxu0 0.0
        %2147 = vmatpush1.msra.mxu0 0.0
        %2148 = vmatprep.subr.mxu0 0.0
        %2149 = vmatpush1.msra.mxu0 0.0
        %2150 = vmatprep.subr.mxu0 0.0
        %2151 = vmatpush1.msra.mxu0 0.0
        %2152 = vmatprep.subr.mxu0 0.0
        %2153 = vmatpush1.msra.mxu0 0.0
        %2154 = vmatprep.subr.mxu0 0.0
        %2155 = vmatpush1.msra.mxu0 0.0
        %2156 = vmatprep.subr.mxu0 0.0
        %2157 = vmatpush1.msra.mxu0 0.0
        %2158 = vmatprep.subr.mxu0 0.0
        %2159 = vmatpush1.msra.mxu0 0.0
        %2160 = vmatprep.subr.mxu0 0.0
        %2161 = vmatpush1.msra.mxu0 0.0
        %2162 = vmatprep.subr.mxu0 0.0
        %2163 = vmatpush1.msra.mxu0 0.0
        %2164 = vmatprep.subr.mxu0 0.0
        %2165 = vmatpush1.msra.mxu0 0.0
        %2166 = vmatprep.subr.mxu0 0.0
        %2167 = vmatpush1.msra.mxu0 0.0
        %2168 = vmatprep.subr.mxu0 0.0
        %2169 = vmatpush1.msra.mxu0 0.0
        %2170 = vmatprep.subr.mxu0 0.0
        %2171 = vmatpush1.msra.mxu0 0.0
        %2172 = vmatprep.subr.mxu0 0.0
        %2173 = vmatpush1.msra.mxu0 0.0
        %2174 = vmatprep.subr.mxu0 0.0
        %2175 = vmatpush1.msra.mxu0 0.0
        %2176 = vmatprep.subr.mxu0 0.0
        %2177 = vmatpush1.msra.mxu0 0.0
        %2178 = vmatprep.subr.mxu0 0.0
        %2179 = vmatpush1.msra.mxu0 0.0
        %2180 = vmatprep.subr.mxu0 0.0
        %2181 = vmatpush1.msra.mxu0 0.0
        %2182 = vmatprep.subr.mxu0 0.0
        %2183 = vmatpush1.msra.mxu0 0.0
        %2184 = vmatprep.subr.mxu0 0.0
        %2185 = vmatpush1.msra.mxu0 0.0
        %2186 = vmatprep.mubr.f32.mxu0 0.0
        %2187 = vmatmul.mubr.f32.gmra.mrb[0].mxu0 %v2027
        %v2188 = vpop.f32.mrb[0].mxu0
        %v2189 = vadd.f32 %v2024, %v2188
        %v2190 = vpop.f32.mrb[0].mxu0
        %2191 = vmatprep.mubr.f32.mxu0 0.0
        %2192 = vmatmul.mubr.f32.gmra.mrb[0].mxu0 %v2030
        %v2193 = vpop.f32.mrb[0].mxu0
        %v2194 = vadd.f32 %v2024, %v2193
        %v2195 = vpop.f32.mrb[0].mxu0
        %2196 = vmatprep.mubr.f32.mxu0 0.0
        %2197 = vmatmul.mubr.f32.gmra.mrb[0].mxu0 %v2033
        %v2198 = vpop.f32.mrb[0].mxu0
        %v2199 = vadd.f32 %v2024, %v2198
        %v2200 = vpop.f32.mrb[0].mxu0
        %2201 = vmatprep.mubr.f32.mxu0 0.0
        %2202 = vmatmul.mubr.f32.gmra.mrb[0].mxu0 %v2036
        %v2203 = vpop.f32.mrb[0].mxu0
        %v2204 = vadd.f32 %v2024, %v2203
        %v2205 = vpop.f32.mrb[0].mxu0
        %2206 = vmatprep.mubr.f32.mxu0 0.0
        %2207 = vmatmul.mubr.f32.gmra.mrb[0].mxu0 %v2039
        %v2208 = vpop.f32.mrb[0].mxu0
        %v2209 = vadd.f32 %v2024, %v2208
        %v2210 = vpop.f32.mrb[0].mxu0
        %2211 = vmatprep.mubr.f32.mxu0 0.0
        %2212 = vmatmul.mubr.f32.gmra.mrb[0].mxu0 %v2042
        %v2213 = vpop.f32.mrb[0].mxu0
        %v2214 = vadd.f32 %v2024, %v2213
        %v2215 = vpop.f32.mrb[0].mxu0
        %2216 = vmatprep.mubr.f32.mxu0 0.0
        %2217 = vmatmul.mubr.f32.gmra.mrb[0].mxu0 %v2045
        %v2218 = vpop.f32.mrb[0].mxu0
        %v2219 = vadd.f32 %v2024, %v2218
        %v2220 = vpop.f32.mrb[0].mxu0
        %2221 = vmatprep.mubr.f32.mxu0 0.0
        %2222 = vmatmul.mubr.f32.gmra.mrb[0].mxu0 %v2048
        %v2223 = vpop.f32.mrb[0].mxu0
        %v2224 = vadd.f32 %v2024, %v2223
        %v2225 = vpop.f32.mrb[0].mxu0
        %2226 = vmatprep.mubr.f32.mxu0 0.0
        %2227 = vmatmul.mubr.f32.gmra.mrb[0].mxu0 %v2051
        %v2228 = vpop.f32.mrb[0].mxu0
        %v2229 = vadd.f32 %v2024, %v2228
        %v2230 = vpop.f32.mrb[0].mxu0
        %2231 = vmatprep.mubr.f32.mxu0 0.0
        %2232 = vmatmul.mubr.f32.gmra.mrb[0].mxu0 %v2054
        %v2233 = vpop.f32.mrb[0].mxu0
        %v2234 = vadd.f32 %v2024, %v2233
        %v2235 = vpop.f32.mrb[0].mxu0
        %2236 = vmatprep.mubr.f32.mxu0 0.0
        %2237 = vmatmul.mubr.f32.gmra.mrb[0].mxu0 %v2057
        %v2238 = vpop.f32.mrb[0].mxu0
        %v2239 = vadd.f32 %v2024, %v2238
        %v2240 = vpop.f32.mrb[0].mxu0
        %2241 = vmatprep.mubr.f32.mxu0 0.0
        %2242 = vmatmul.mubr.f32.gmra.mrb[0].mxu0 %v2060
        %v2243 = vpop.f32.mrb[0].mxu0
        %v2244 = vadd.f32 %v2024, %v2243
        %v2245 = vpop.f32.mrb[0].mxu0
        %2246 = vmatprep.mubr.f32.mxu0 0.0
        %2247 = vmatmul.mubr.f32.gmra.mrb[0].mxu0 %v2063
        %v2248 = vpop.f32.mrb[0].mxu0
        %v2249 = vadd.f32 %v2024, %v2248
        %v2250 = vpop.f32.mrb[0].mxu0
        %2251 = vmatprep.mubr.f32.mxu0 0.0
        %2252 = vmatmul.mubr.f32.gmra.mrb[0].mxu0 %v2066
        %v2253 = vpop.f32.mrb[0].mxu0
        %v2254 = vadd.f32 %v2024, %v2253
        %v2255 = vpop.f32.mrb[0].mxu0
        %2256 = vmatprep.mubr.f32.mxu0 0.0
        %2257 = vmatmul.mubr.f32.gmra.mrb[0].mxu0 %v2069
        %v2258 = vpop.f32.mrb[0].mxu0
        %v2259 = vadd.f32 %v2024, %v2258
        %v2260 = vpop.f32.mrb[0].mxu0
        %2261 = vmatprep.mubr.f32.mxu0 0.0
        %2262 = vmatmul.mubr.f32.gmra.mrb[0].mxu0 %v2072
        %v2263 = vpop.f32.mrb[0].mxu0
        %v2264 = vadd.f32 %v2024, %v2263
        %v2265 = vpop.f32.mrb[0].mxu0
        %2266 = vmatprep.mubr.f32.mxu0 0.0
        %2267 = vmatmul.mubr.f32.gmra.mrb[0].mxu0 %v2075
        %v2268 = vpop.f32.mrb[0].mxu0
        %v2269 = vadd.f32 %v2024, %v2268
        %v2270 = vpop.f32.mrb[0].mxu0
        %2271 = vmatprep.mubr.f32.mxu0 0.0
        %2272 = vmatmul.mubr.f32.gmra.mrb[0].mxu0 %v2078
        %v2273 = vpop.f32.mrb[0].mxu0
        %v2274 = vadd.f32 %v2024, %v2273
        %v2275 = vpop.f32.mrb[0].mxu0
        %2276 = vmatprep.mubr.f32.mxu0 0.0
        %2277 = vmatmul.mubr.f32.gmra.mrb[0].mxu0 %v2081
        %v2278 = vpop.f32.mrb[0].mxu0
        %v2279 = vadd.f32 %v2024, %v2278
        %v2280 = vpop.f32.mrb[0].mxu0
        %2281 = vmatprep.mubr.f32.mxu0 0.0
        %2282 = vmatmul.mubr.f32.gmra.mrb[0].mxu0 %v2084
        %v2283 = vpop.f32.mrb[0].mxu0
        %v2284 = vadd.f32 %v2024, %v2283
        %v2285 = vpop.f32.mrb[0].mxu0
        %2286 = vmatprep.mubr.f32.mxu0 0.0
        %2287 = vmatmul.mubr.f32.gmra.mrb[0].mxu0 %v2087
        %v2288 = vpop.f32.mrb[0].mxu0
        %v2289 = vadd.f32 %v2024, %v2288
        %v2290 = vpop.f32.mrb[0].mxu0
        %2291 = vmatprep.mubr.f32.mxu0 0.0
        %2292 = vmatmul.mubr.f32.gmra.mrb[0].mxu0 %v2090
        %v2293 = vpop.f32.mrb[0].mxu0
        %v2294 = vadd.f32 %v2024, %v2293
        %v2295 = vpop.f32.mrb[0].mxu0
        %2296 = vmatprep.mubr.f32.mxu0 0.0
        %2297 = vmatmul.mubr.f32.gmra.mrb[0].mxu0 %v2093
        %v2298 = vpop.f32.mrb[0].mxu0
        %v2299 = vadd.f32 %v2024, %v2298
        %v2300 = vpop.f32.mrb[0].mxu0
        %2301 = vmatprep.mubr.f32.mxu0 0.0
        %2302 = vmatmul.mubr.f32.gmra.mrb[0].mxu0 %v2096
        %v2303 = vpop.f32.mrb[0].mxu0
        %v2304 = vadd.f32 %v2024, %v2303
        %v2305 = vpop.f32.mrb[0].mxu0
        %2306 = vmatprep.mubr.f32.mxu0 0.0
        %2307 = vmatmul.mubr.f32.gmra.mrb[0].mxu0 %v2099
        %v2308 = vpop.f32.mrb[0].mxu0
        %v2309 = vadd.f32 %v2024, %v2308
        %v2310 = vpop.f32.mrb[0].mxu0
        %2311 = vmatprep.mubr.f32.mxu0 0.0
        %2312 = vmatmul.mubr.f32.gmra.mrb[0].mxu0 %v2102
        %v2313 = vpop.f32.mrb[0].mxu0
        %v2314 = vadd.f32 %v2024, %v2313
        %v2315 = vpop.f32.mrb[0].mxu0
        %2316 = vmatprep.mubr.f32.mxu0 0.0
        %2317 = vmatmul.mubr.f32.gmra.mrb[0].mxu0 %v2105
        %v2318 = vpop.f32.mrb[0].mxu0
        %v2319 = vadd.f32 %v2024, %v2318
        %v2320 = vpop.f32.mrb[0].mxu0
        %2321 = vmatprep.mubr.f32.mxu0 0.0
        %2322 = vmatmul.mubr.f32.gmra.mrb[0].mxu0 %v2108
        %v2323 = vpop.f32.mrb[0].mxu0
        %v2324 = vadd.f32 %v2024, %v2323
        %v2325 = vpop.f32.mrb[0].mxu0
        %2326 = vmatprep.mubr.f32.mxu0 0.0
        %2327 = vmatmul.mubr.f32.gmra.mrb[0].mxu0 %v2111
        %v2328 = vpop.f32.mrb[0].mxu0
        %v2329 = vadd.f32 %v2024, %v2328
        %v2330 = vpop.f32.mrb[0].mxu0
        %2331 = vmatprep.mubr.f32.mxu0 0.0
        %2332 = vmatmul.mubr.f32.gmra.mrb[0].mxu0 %v2114
        %v2333 = vpop.f32.mrb[0].mxu0
        %v2334 = vadd.f32 %v2024, %v2333
        %v2335 = vpop.f32.mrb[0].mxu0
        %2336 = vmatprep.mubr.f32.mxu0 0.0
        %2337 = vmatmul.mubr.f32.gmra.mrb[0].mxu0 %v2117
        %v2338 = vpop.f32.mrb[0].mxu0
        %v2339 = vadd.f32 %v2024, %v2338
        %v2340 = vpop.f32.mrb[0].mxu0
        %2341 = vmatprep.mubr.f32.mxu0 0.0
        %2342 = vmatmul.mubr.f32.gmra.mrb[0].mxu0 %v2120
        %v2343 = vpop.f32.mrb[0].mxu0
        %v2344 = vadd.f32 %v2024, %v2343
        %v2345 = vpop.f32.mrb[0].mxu0
        %2346 = vdwg.mxu0
        %v2347 = vsel %vm957, %v799, 0.0
        %v2348 = vsel %vm957, %v804, 0.0
        %v2349 = vadd.f32 %v2347, %v2348
        %v2350 = vrot.slane %v2349, 4
        %v2351 = vadd.f32 %v2349, %v2350
        %v2352 = vrot.slane %v2351, 2
        %v2353 = vadd.f32 %v2351, %v2352
        %v2354 = vrot.slane %v2353, 1
        %v2355 = vadd.f32 %v2353, %v2354
        %v2356 = vsel %vm957, %v809, 0.0
        %v2357 = vsel %vm957, %v814, 0.0
        %v2358 = vadd.f32 %v2356, %v2357
        %v2359 = vrot.slane %v2358, 4
        %v2360 = vadd.f32 %v2358, %v2359
        %v2361 = vrot.slane %v2360, 2
        %v2362 = vadd.f32 %v2360, %v2361
        %v2363 = vrot.slane %v2362, 1
        %v2364 = vadd.f32 %v2362, %v2363
        %v2365 = vsel %vm957, %v819, 0.0
        %v2366 = vsel %vm957, %v824, 0.0
        %v2367 = vadd.f32 %v2365, %v2366
        %v2368 = vrot.slane %v2367, 4
        %v2369 = vadd.f32 %v2367, %v2368
        %v2370 = vrot.slane %v2369, 2
        %v2371 = vadd.f32 %v2369, %v2370
        %v2372 = vrot.slane %v2371, 1
        %v2373 = vadd.f32 %v2371, %v2372
        %v2374 = vsel %vm957, %v829, 0.0
        %v2375 = vsel %vm957, %v834, 0.0
        %v2376 = vadd.f32 %v2374, %v2375
        %v2377 = vrot.slane %v2376, 4
        %v2378 = vadd.f32 %v2376, %v2377
        %v2379 = vrot.slane %v2378, 2
        %v2380 = vadd.f32 %v2378, %v2379
        %v2381 = vrot.slane %v2380, 1
        %v2382 = vadd.f32 %v2380, %v2381
        %v2383 = vsel %vm957, %v839, 0.0
        %v2384 = vsel %vm957, %v844, 0.0
        %v2385 = vadd.f32 %v2383, %v2384
        %v2386 = vrot.slane %v2385, 4
        %v2387 = vadd.f32 %v2385, %v2386
        %v2388 = vrot.slane %v2387, 2
        %v2389 = vadd.f32 %v2387, %v2388
        %v2390 = vrot.slane %v2389, 1
        %v2391 = vadd.f32 %v2389, %v2390
        %v2392 = vsel %vm957, %v849, 0.0
        %v2393 = vsel %vm957, %v854, 0.0
        %v2394 = vadd.f32 %v2392, %v2393
        %v2395 = vrot.slane %v2394, 4
        %v2396 = vadd.f32 %v2394, %v2395
        %v2397 = vrot.slane %v2396, 2
        %v2398 = vadd.f32 %v2396, %v2397
        %v2399 = vrot.slane %v2398, 1
        %v2400 = vadd.f32 %v2398, %v2399
        %v2401 = vsel %vm957, %v859, 0.0
        %v2402 = vsel %vm957, %v864, 0.0
        %v2403 = vadd.f32 %v2401, %v2402
        %v2404 = vrot.slane %v2403, 4
        %v2405 = vadd.f32 %v2403, %v2404
        %v2406 = vrot.slane %v2405, 2
        %v2407 = vadd.f32 %v2405, %v2406
        %v2408 = vrot.slane %v2407, 1
        %v2409 = vadd.f32 %v2407, %v2408
        %v2410 = vsel %vm957, %v869, 0.0
        %v2411 = vsel %vm957, %v874, 0.0
        %v2412 = vadd.f32 %v2410, %v2411
        %v2413 = vrot.slane %v2412, 4
        %v2414 = vadd.f32 %v2412, %v2413
        %v2415 = vrot.slane %v2414, 2
        %v2416 = vadd.f32 %v2414, %v2415
        %v2417 = vrot.slane %v2416, 1
        %v2418 = vadd.f32 %v2416, %v2417
        %v2419 = vsel %vm957, %v879, 0.0
        %v2420 = vsel %vm957, %v884, 0.0
        %v2421 = vadd.f32 %v2419, %v2420
        %v2422 = vrot.slane %v2421, 4
        %v2423 = vadd.f32 %v2421, %v2422
        %v2424 = vrot.slane %v2423, 2
        %v2425 = vadd.f32 %v2423, %v2424
        %v2426 = vrot.slane %v2425, 1
        %v2427 = vadd.f32 %v2425, %v2426
        %v2428 = vsel %vm957, %v889, 0.0
        %v2429 = vsel %vm957, %v894, 0.0
        %v2430 = vadd.f32 %v2428, %v2429
        %v2431 = vrot.slane %v2430, 4
        %v2432 = vadd.f32 %v2430, %v2431
        %v2433 = vrot.slane %v2432, 2
        %v2434 = vadd.f32 %v2432, %v2433
        %v2435 = vrot.slane %v2434, 1
        %v2436 = vadd.f32 %v2434, %v2435
        %v2437 = vsel %vm957, %v899, 0.0
        %v2438 = vsel %vm957, %v904, 0.0
        %v2439 = vadd.f32 %v2437, %v2438
        %v2440 = vrot.slane %v2439, 4
        %v2441 = vadd.f32 %v2439, %v2440
        %v2442 = vrot.slane %v2441, 2
        %v2443 = vadd.f32 %v2441, %v2442
        %v2444 = vrot.slane %v2443, 1
        %v2445 = vadd.f32 %v2443, %v2444
        %v2446 = vsel %vm957, %v909, 0.0
        %v2447 = vsel %vm957, %v914, 0.0
        %v2448 = vadd.f32 %v2446, %v2447
        %v2449 = vrot.slane %v2448, 4
        %v2450 = vadd.f32 %v2448, %v2449
        %v2451 = vrot.slane %v2450, 2
        %v2452 = vadd.f32 %v2450, %v2451
        %v2453 = vrot.slane %v2452, 1
        %v2454 = vadd.f32 %v2452, %v2453
        %v2455 = vsel %vm957, %v919, 0.0
        %v2456 = vsel %vm957, %v924, 0.0
        %v2457 = vadd.f32 %v2455, %v2456
        %v2458 = vrot.slane %v2457, 4
        %v2459 = vadd.f32 %v2457, %v2458
        %v2460 = vrot.slane %v2459, 2
        %v2461 = vadd.f32 %v2459, %v2460
        %v2462 = vrot.slane %v2461, 1
        %v2463 = vadd.f32 %v2461, %v2462
        %v2464 = vsel %vm957, %v929, 0.0
        %v2465 = vsel %vm957, %v934, 0.0
        %v2466 = vadd.f32 %v2464, %v2465
        %v2467 = vrot.slane %v2466, 4
        %v2468 = vadd.f32 %v2466, %v2467
        %v2469 = vrot.slane %v2468, 2
        %v2470 = vadd.f32 %v2468, %v2469
        %v2471 = vrot.slane %v2470, 1
        %v2472 = vadd.f32 %v2470, %v2471
        %v2473 = vsel %vm957, %v939, 0.0
        %v2474 = vsel %vm957, %v944, 0.0
        %v2475 = vadd.f32 %v2473, %v2474
        %v2476 = vrot.slane %v2475, 4
        %v2477 = vadd.f32 %v2475, %v2476
        %v2478 = vrot.slane %v2477, 2
        %v2479 = vadd.f32 %v2477, %v2478
        %v2480 = vrot.slane %v2479, 1
        %v2481 = vadd.f32 %v2479, %v2480
        %v2482 = vsel %vm957, %v949, 0.0
        %v2483 = vsel %vm957, %v954, 0.0
        %v2484 = vadd.f32 %v2482, %v2483
        %v2485 = vrot.slane %v2484, 4
        %v2486 = vadd.f32 %v2484, %v2485
        %v2487 = vrot.slane %v2486, 2
        %v2488 = vadd.f32 %v2486, %v2487
        %v2489 = vrot.slane %v2488, 1
        %v2490 = vadd.f32 %v2488, %v2489
        %v2491 = vrcp.pop 16.0
        %v2492 = vmul.f32 %v2355, %v2491
        %v2493 = vmul.f32 %v2364, %v2491
        %v2494 = vmul.f32 %v2373, %v2491
        %v2495 = vmul.f32 %v2382, %v2491
        %v2496 = vmul.f32 %v2391, %v2491
        %v2497 = vmul.f32 %v2400, %v2491
        %v2498 = vmul.f32 %v2409, %v2491
        %v2499 = vmul.f32 %v2418, %v2491
        %v2500 = vmul.f32 %v2427, %v2491
        %v2501 = vmul.f32 %v2436, %v2491
        %v2502 = vmul.f32 %v2445, %v2491
        %v2503 = vmul.f32 %v2454, %v2491
        %v2504 = vmul.f32 %v2463, %v2491
        %v2505 = vmul.f32 %v2472, %v2491
        %v2506 = vmul.f32 %v2481, %v2491
        %v2507 = vmul.f32 %v2490, %v2491
        %v2508 = vadd.f32 %v2347, %v2356
        %v2509 = vadd.f32 %v2508, %v2365
        %v2510 = vadd.f32 %v2509, %v2374
        %v2511 = vadd.f32 %v2510, %v2383
        %v2512 = vadd.f32 %v2511, %v2392
        %v2513 = vadd.f32 %v2512, %v2401
        %v2514 = vadd.f32 %v2513, %v2410
        %v2515 = vadd.f32 %v2514, %v2419
        %v2516 = vadd.f32 %v2515, %v2428
        %v2517 = vadd.f32 %v2516, %v2437
        %v2518 = vadd.f32 %v2517, %v2446
        %v2519 = vadd.f32 %v2518, %v2455
        %v2520 = vadd.f32 %v2519, %v2464
        %v2521 = vadd.f32 %v2520, %v2473
        %v2522 = vadd.f32 %v2521, %v2482
        %v2523 = vadd.f32 %v2348, %v2357
        %v2524 = vadd.f32 %v2523, %v2366
        %v2525 = vadd.f32 %v2524, %v2375
        %v2526 = vadd.f32 %v2525, %v2384
        %v2527 = vadd.f32 %v2526, %v2393
        %v2528 = vadd.f32 %v2527, %v2402
        %v2529 = vadd.f32 %v2528, %v2411
        %v2530 = vadd.f32 %v2529, %v2420
        %v2531 = vadd.f32 %v2530, %v2429
        %v2532 = vadd.f32 %v2531, %v2438
        %v2533 = vadd.f32 %v2532, %v2447
        %v2534 = vadd.f32 %v2533, %v2456
        %v2535 = vadd.f32 %v2534, %v2465
        %v2536 = vadd.f32 %v2535, %v2474
        %v2537 = vadd.f32 %v2536, %v2483
        %v2538 = vmul.f32 %v2522, %v2491
        %v2539 = vmul.f32 %v2537, %v2491
        %v2540 = vld [vmem:[%s7] sm:$0xff]
        %v2541 = vld [vmem:[%s7 + $0x8] sm:$0xff]
        %v2544 = vrot.slane %v2540, 1
        %v2545 = vrot.slane %v2540, 2
        %v2546 = vrot.slane %v2540, 3
        %v2547 = vrot.slane %v2540, 4
        %v2548 = vrot.slane %v2540, 5
        %v2549 = vrot.slane %v2540, 6
        %v2550 = vrot.slane %v2540, 7
        %v2551 = vrot.slane %v2541, 1
        %v2552 = vrot.slane %v2541, 2
        %v2553 = vrot.slane %v2541, 3
        %v2554 = vrot.slane %v2541, 4
        %v2555 = vrot.slane %v2541, 5
        %v2556 = vrot.slane %v2541, 6
        %v2557 = vrot.slane %v2541, 7
        %v2574 = vadd.f32 %v2492, %v2540
        %v2575 = vadd.f32 %v2493, %v2544
        %v2576 = vadd.f32 %v2494, %v2545
        %v2577 = vadd.f32 %v2495, %v2546
        %v2578 = vadd.f32 %v2496, %v2547
        %v2579 = vadd.f32 %v2497, %v2548
        %v2580 = vadd.f32 %v2498, %v2549
        %v2581 = vadd.f32 %v2499, %v2550
        %v2582 = vadd.f32 %v2500, %v2541
        %v2583 = vadd.f32 %v2501, %v2551
        %v2584 = vadd.f32 %v2502, %v2552
        %v2585 = vadd.f32 %v2503, %v2553
        %v2586 = vadd.f32 %v2504, %v2554
        %v2587 = vadd.f32 %v2505, %v2555
        %v2588 = vadd.f32 %v2506, %v2556
        %v2589 = vadd.f32 %v2507, %v2557
        %v2590 = vld [vmem:[%s8] sm:$0xff]
        %v2591 = vld [vmem:[%s8 + $0x8] sm:$0xff]
        %v2594 = vrot.slane %v2590, 1
        %v2595 = vrot.slane %v2590, 2
        %v2596 = vrot.slane %v2590, 3
        %v2597 = vrot.slane %v2590, 4
        %v2598 = vrot.slane %v2590, 5
        %v2599 = vrot.slane %v2590, 6
        %v2600 = vrot.slane %v2590, 7
        %v2601 = vrot.slane %v2591, 1
        %v2602 = vrot.slane %v2591, 2
        %v2603 = vrot.slane %v2591, 3
        %v2604 = vrot.slane %v2591, 4
        %v2605 = vrot.slane %v2591, 5
        %v2606 = vrot.slane %v2591, 6
        %v2607 = vrot.slane %v2591, 7
        %2608 = vrot.lane.b32.xlu0 %v2590, 16
        %v2609 = vpop.permute.xlu0 %2608
        %2610 = vrot.lane.b32.xlu0 %v2594, 16
        %v2611 = vpop.permute.xlu0 %2610
        %2612 = vrot.lane.b32.xlu0 %v2595, 16
        %v2613 = vpop.permute.xlu0 %2612
        %2614 = vrot.lane.b32.xlu0 %v2596, 16
        %v2615 = vpop.permute.xlu0 %2614
        %2616 = vrot.lane.b32.xlu0 %v2597, 16
        %v2617 = vpop.permute.xlu0 %2616
        %2618 = vrot.lane.b32.xlu0 %v2598, 16
        %v2619 = vpop.permute.xlu0 %2618
        %2620 = vrot.lane.b32.xlu0 %v2599, 16
        %v2621 = vpop.permute.xlu0 %2620
        %2622 = vrot.lane.b32.xlu0 %v2600, 16
        %v2623 = vpop.permute.xlu0 %2622
        %2624 = vrot.lane.b32.xlu0 %v2591, 16
        %v2625 = vpop.permute.xlu0 %2624
        %2626 = vrot.lane.b32.xlu0 %v2601, 16
        %v2627 = vpop.permute.xlu0 %2626
        %2628 = vrot.lane.b32.xlu0 %v2602, 16
        %v2629 = vpop.permute.xlu0 %2628
        %2630 = vrot.lane.b32.xlu0 %v2603, 16
        %v2631 = vpop.permute.xlu0 %2630
        %2632 = vrot.lane.b32.xlu0 %v2604, 16
        %v2633 = vpop.permute.xlu0 %2632
        %2634 = vrot.lane.b32.xlu0 %v2605, 16
        %v2635 = vpop.permute.xlu0 %2634
        %2636 = vrot.lane.b32.xlu0 %v2606, 16
        %v2637 = vpop.permute.xlu0 %2636
        %2638 = vrot.lane.b32.xlu0 %v2607, 16
        %v2639 = vpop.permute.xlu0 %2638
        %v2656 = vadd.f32 %v2492, %v2609
        %v2657 = vadd.f32 %v2493, %v2611
        %v2658 = vadd.f32 %v2494, %v2613
        %v2659 = vadd.f32 %v2495, %v2615
        %v2660 = vadd.f32 %v2496, %v2617
        %v2661 = vadd.f32 %v2497, %v2619
        %v2662 = vadd.f32 %v2498, %v2621
        %v2663 = vadd.f32 %v2499, %v2623
        %v2664 = vadd.f32 %v2500, %v2625
        %v2665 = vadd.f32 %v2501, %v2627
        %v2666 = vadd.f32 %v2502, %v2629
        %v2667 = vadd.f32 %v2503, %v2631
        %v2668 = vadd.f32 %v2504, %v2633
        %v2669 = vadd.f32 %v2505, %v2635
        %v2670 = vadd.f32 %v2506, %v2637
        %v2671 = vadd.f32 %v2507, %v2639
        %v2672 = vld [vmem:[%s9] sm:$0xff]
        %v2673 = vld [vmem:[%s9 + $0x8] sm:$0xff]
        %v2674 = vadd.f32 %v2538, %v2672
        %v2675 = vadd.f32 %v2539, %v2673
        %v2676 = vld [vmem:[%s10] sm:$0xff]
        %v2677 = vld [vmem:[%s10 + $0x8] sm:$0xff]
        %2680 = vrot.lane.b32.xlu0 %v2676, 16
        %v2681 = vpop.permute.xlu0 %2680
        %2682 = vrot.lane.b32.xlu0 %v2677, 16
        %v2683 = vpop.permute.xlu0 %2682
        %v2686 = vadd.f32 %v2538, %v2681
        %v2687 = vadd.f32 %v2539, %v2683
        %v2704 = vrot.slane %v2575, 7
        %vm2705 = vcmask 1041409
        %v2706 = vsel %vm2705, %v2704, %v2574
        %v2707 = vrot.slane %v2576, 6
        %vm2708 = vcmask 1042434
        %v2709 = vsel %vm2708, %v2707, %v2706
        %v2710 = vrot.slane %v2577, 5
        %vm2711 = vcmask 1043459
        %v2712 = vsel %vm2711, %v2710, %v2709
        %v2713 = vrot.slane %v2578, 4
        %vm2714 = vcmask 1044484
        %v2715 = vsel %vm2714, %v2713, %v2712
        %v2716 = vrot.slane %v2579, 3
        %vm2717 = vcmask 1045509
        %v2718 = vsel %vm2717, %v2716, %v2715
        %v2719 = vrot.slane %v2580, 2
        %vm2720 = vcmask 1046534
        %v2721 = vsel %vm2720, %v2719, %v2718
        %v2722 = vrot.slane %v2581, 1
        %vm2723 = vcmask 1047559
        %v2724 = vsel %vm2723, %v2722, %v2721
        %v2725 = vrot.slane %v2583, 7
        %v2726 = vsel %vm2705, %v2725, %v2582
        %v2727 = vrot.slane %v2584, 6
        %v2728 = vsel %vm2708, %v2727, %v2726
        %v2729 = vrot.slane %v2585, 5
        %v2730 = vsel %vm2711, %v2729, %v2728
        %v2731 = vrot.slane %v2586, 4
        %v2732 = vsel %vm2714, %v2731, %v2730
        %v2733 = vrot.slane %v2587, 3
        %v2734 = vsel %vm2717, %v2733, %v2732
        %v2735 = vrot.slane %v2588, 2
        %v2736 = vsel %vm2720, %v2735, %v2734
        %v2737 = vrot.slane %v2589, 1
        %v2738 = vsel %vm2723, %v2737, %v2736
        %v2755 = vrot.slane %v2657, 7
        %v2756 = vsel %vm2705, %v2755, %v2656
        %v2757 = vrot.slane %v2658, 6
        %v2758 = vsel %vm2708, %v2757, %v2756
        %v2759 = vrot.slane %v2659, 5
        %v2760 = vsel %vm2711, %v2759, %v2758
        %v2761 = vrot.slane %v2660, 4
        %v2762 = vsel %vm2714, %v2761, %v2760
        %v2763 = vrot.slane %v2661, 3
        %v2764 = vsel %vm2717, %v2763, %v2762
        %v2765 = vrot.slane %v2662, 2
        %v2766 = vsel %vm2720, %v2765, %v2764
        %v2767 = vrot.slane %v2663, 1
        %v2768 = vsel %vm2723, %v2767, %v2766
        %v2769 = vrot.slane %v2665, 7
        %v2770 = vsel %vm2705, %v2769, %v2664
        %v2771 = vrot.slane %v2666, 6
        %v2772 = vsel %vm2708, %v2771, %v2770
        %v2773 = vrot.slane %v2667, 5
        %v2774 = vsel %vm2711, %v2773, %v2772
        %v2775 = vrot.slane %v2668, 4
        %v2776 = vsel %vm2714, %v2775, %v2774
        %v2777 = vrot.slane %v2669, 3
        %v2778 = vsel %vm2717, %v2777, %v2776
        %v2779 = vrot.slane %v2670, 2
        %v2780 = vsel %vm2720, %v2779, %v2778
        %v2781 = vrot.slane %v2671, 1
        %v2782 = vsel %vm2723, %v2781, %v2780
        %2783 = vrot.lane.b32.xlu0 %v2768, 112
        %v2784 = vpop.permute.xlu0 %2783
        %2785 = vrot.lane.b32.xlu0 %v2782, 112
        %v2786 = vpop.permute.xlu0 %2785
        %vm2787 = vcmask 64512
        %v2788 = vsel %vm2787, %v2724, 0
        %v2790 = vsel %vm2787, %v2738, 0
        %v2792 = vsel %vm2787, %v2784, 0
        %v2794 = vsel %vm2787, %v2786, 0
        %2796 = vmatprep.subr.mxu0 0.0
        %2797 = vmatpush1.xpose.msra.mxu0 %v2792
        %2798 = vmatprep.subr.mxu0 0.0
        %2799 = vmatpush1.xpose.msra.mxu0 %v2794
        %2800 = vmatprep.subr.mxu0 0.0
        %2801 = vmatpush1.xpose.msra.mxu0 0.0
        %2802 = vmatprep.subr.mxu0 0.0
        %2803 = vmatpush1.xpose.msra.mxu0 0.0
        %2804 = vmatprep.subr.mxu0 0.0
        %2805 = vmatpush1.xpose.msra.mxu0 0.0
        %2806 = vmatprep.subr.mxu0 0.0
        %2807 = vmatpush1.xpose.msra.mxu0 0.0
        %2808 = vmatprep.subr.mxu0 0.0
        %2809 = vmatpush1.xpose.msra.mxu0 0.0
        %2810 = vmatprep.subr.mxu0 0.0
        %2811 = vmatpush1.xpose.msra.mxu0 0.0
        %2812 = vmatprep.subr.mxu0 0.0
        %2813 = vmatpush1.xpose.msra.mxu0 0.0
        %2814 = vmatprep.subr.mxu0 0.0
        %2815 = vmatpush1.xpose.msra.mxu0 0.0
        %2816 = vmatprep.subr.mxu0 0.0
        %2817 = vmatpush1.xpose.msra.mxu0 0.0
        %2818 = vmatprep.subr.mxu0 0.0
        %2819 = vmatpush1.xpose.msra.mxu0 0.0
        %2820 = vmatprep.subr.mxu0 0.0
        %2821 = vmatpush1.xpose.msra.mxu0 0.0
        %2822 = vmatprep.subr.mxu0 0.0
        %2823 = vmatpush1.xpose.msra.mxu0 0.0
        %2824 = vmatprep.subr.mxu0 0.0
        %2825 = vmatpush1.xpose.msra.mxu0 0.0
        %2826 = vmatprep.subr.mxu0 0.0
        %2827 = vmatpush1.xpose.msra.mxu0 0.0
        %2828 = vmatprep.subr.mxu0 0.0
        %2829 = vmatpush1.xpose.msra.mxu0 0.0
        %2830 = vmatprep.subr.mxu0 0.0
        %2831 = vmatpush1.xpose.msra.mxu0 0.0
        %2832 = vmatprep.subr.mxu0 0.0
        %2833 = vmatpush1.xpose.msra.mxu0 0.0
        %2834 = vmatprep.subr.mxu0 0.0
        %2835 = vmatpush1.xpose.msra.mxu0 0.0
        %2836 = vmatprep.subr.mxu0 0.0
        %2837 = vmatpush1.xpose.msra.mxu0 0.0
        %2838 = vmatprep.subr.mxu0 0.0
        %2839 = vmatpush1.xpose.msra.mxu0 0.0
        %2840 = vmatprep.subr.mxu0 0.0
        %2841 = vmatpush1.xpose.msra.mxu0 0.0
        %2842 = vmatprep.subr.mxu0 0.0
        %2843 = vmatpush1.xpose.msra.mxu0 0.0
        %2844 = vmatprep.subr.mxu0 0.0
        %2845 = vmatpush1.xpose.msra.mxu0 0.0
        %2846 = vmatprep.subr.mxu0 0.0
        %2847 = vmatpush1.xpose.msra.mxu0 0.0
        %2848 = vmatprep.subr.mxu0 0.0
        %2849 = vmatpush1.xpose.msra.mxu0 0.0
        %2850 = vmatprep.subr.mxu0 0.0
        %2851 = vmatpush1.xpose.msra.mxu0 0.0
        %2852 = vmatprep.subr.mxu0 0.0
        %2853 = vmatpush1.xpose.msra.mxu0 0.0
        %2854 = vmatprep.subr.mxu0 0.0
        %2855 = vmatpush1.xpose.msra.mxu0 0.0
        %2856 = vmatprep.subr.mxu0 0.0
        %2857 = vmatpush1.xpose.msra.mxu0 0.0
        %2858 = vmatprep.subr.mxu0 0.0
        %2859 = vmatpush1.xpose.msra.mxu0 0.0
        %2860 = vmatprep.mubr.f32.mxu0 0.0
        %2861 = vmatmul.mubr.f32.gmra.mrb[0].mxu0 %v2788
        %v2862 = vpop.f32.mrb[0].mxu0
        %v2863 = vadd.f32 0.0, %v2862
        %v2864 = vpop.f32.mrb[0].mxu0
        %2865 = vmatprep.mubr.f32.mxu0 0.0
        %2866 = vmatmul.mubr.f32.gmra.mrb[0].mxu0 %v2790
        %v2867 = vpop.f32.mrb[0].mxu0
        %v2868 = vadd.f32 0.0, %v2867
        %v2869 = vpop.f32.mrb[0].mxu0
        %2870 = vdwg.mxu0
        %v2871 = vmul.f32 %v2863, 0.35355338
        %v2872 = vmul.f32 %v2868, 0.35355338
        %v2873 = vsel %vm635, %v2871, -inf
        %2874 = vmax.xlane.f32.xlu0 %v2873
        %v2875 = vpop.xlane.xlu0 %2874
        %v2876 = vsel %vm635, %v2872, -inf
        %2877 = vmax.xlane.f32.xlu0 %v2876
        %v2878 = vpop.xlane.xlu0 %2877
        %v2879 = vsub.f32 %v2871, %v2875
        %v2880 = vsub.f32 %v2872, %v2878
        %v2881 = vmul.f32 %v2879, 1.442695
        %v2882 = vpow.pop %v2881
        %v2883 = vmul.f32 %v2880, 1.442695
        %v2884 = vpow.pop %v2883
        %v2885 = vsel %vm635, %v2882, 0.0
        %2886 = vadd.xlane.f32.xlu0 %v2885
        %v2887 = vpop.xlane.xlu0 %2886
        %v2888 = vsel %vm635, %v2884, 0.0
        %2889 = vadd.xlane.f32.xlu0 %v2888
        %v2890 = vpop.xlane.xlu0 %2889
        %v2891 = vrcp.pop %v2887
        %v2892 = vmul.f32 %v2882, %v2891
        %v2893 = vrcp.pop %v2890
        %v2894 = vmul.f32 %v2884, %v2893
        %v2911 = vsel %vm2705, %v2493, %v2492
        %v2912 = vsel %vm2708, %v2494, %v2911
        %v2913 = vsel %vm2711, %v2495, %v2912
        %v2914 = vsel %vm2714, %v2496, %v2913
        %v2915 = vsel %vm2717, %v2497, %v2914
        %v2916 = vsel %vm2720, %v2498, %v2915
        %v2917 = vsel %vm2723, %v2499, %v2916
        %v2918 = vsel %vm2705, %v2501, %v2500
        %v2919 = vsel %vm2708, %v2502, %v2918
        %v2920 = vsel %vm2711, %v2503, %v2919
        %v2921 = vsel %vm2714, %v2504, %v2920
        %v2922 = vsel %vm2717, %v2505, %v2921
        %v2923 = vsel %vm2720, %v2506, %v2922
        %v2924 = vsel %vm2723, %v2507, %v2923
        %2925 = vrot.lane.b32.xlu0 %v2917, 96
        %v2926 = vpop.permute.xlu0 %2925
        %2927 = vrot.lane.b32.xlu0 %v2924, 96
        %v2928 = vpop.permute.xlu0 %2927
        %v2932 = vsel %vm635, %v2892, 0
        %v2935 = vsel %vm635, %v2894, 0
        %2937 = vmatprep.subr.mxu0 0.0
        %2938 = vmatpush1.msra.mxu0 %v2926
        %2939 = vmatprep.subr.mxu0 0.0
        %2940 = vmatpush1.msra.mxu0 %v2928
        %2941 = vmatprep.subr.mxu0 0.0
        %2942 = vmatpush1.msra.mxu0 0.0
        %2943 = vmatprep.subr.mxu0 0.0
        %2944 = vmatpush1.msra.mxu0 0.0
        %2945 = vmatprep.subr.mxu0 0.0
        %2946 = vmatpush1.msra.mxu0 0.0
        %2947 = vmatprep.subr.mxu0 0.0
        %2948 = vmatpush1.msra.mxu0 0.0
        %2949 = vmatprep.subr.mxu0 0.0
        %2950 = vmatpush1.msra.mxu0 0.0
        %2951 = vmatprep.subr.mxu0 0.0
        %2952 = vmatpush1.msra.mxu0 0.0
        %2953 = vmatprep.subr.mxu0 0.0
        %2954 = vmatpush1.msra.mxu0 0.0
        %2955 = vmatprep.subr.mxu0 0.0
        %2956 = vmatpush1.msra.mxu0 0.0
        %2957 = vmatprep.subr.mxu0 0.0
        %2958 = vmatpush1.msra.mxu0 0.0
        %2959 = vmatprep.subr.mxu0 0.0
        %2960 = vmatpush1.msra.mxu0 0.0
        %2961 = vmatprep.subr.mxu0 0.0
        %2962 = vmatpush1.msra.mxu0 0.0
        %2963 = vmatprep.subr.mxu0 0.0
        %2964 = vmatpush1.msra.mxu0 0.0
        %2965 = vmatprep.subr.mxu0 0.0
        %2966 = vmatpush1.msra.mxu0 0.0
        %2967 = vmatprep.subr.mxu0 0.0
        %2968 = vmatpush1.msra.mxu0 0.0
        %2969 = vmatprep.subr.mxu0 0.0
        %2970 = vmatpush1.msra.mxu0 0.0
        %2971 = vmatprep.subr.mxu0 0.0
        %2972 = vmatpush1.msra.mxu0 0.0
        %2973 = vmatprep.subr.mxu0 0.0
        %2974 = vmatpush1.msra.mxu0 0.0
        %2975 = vmatprep.subr.mxu0 0.0
        %2976 = vmatpush1.msra.mxu0 0.0
        %2977 = vmatprep.subr.mxu0 0.0
        %2978 = vmatpush1.msra.mxu0 0.0
        %2979 = vmatprep.subr.mxu0 0.0
        %2980 = vmatpush1.msra.mxu0 0.0
        %2981 = vmatprep.subr.mxu0 0.0
        %2982 = vmatpush1.msra.mxu0 0.0
        %2983 = vmatprep.subr.mxu0 0.0
        %2984 = vmatpush1.msra.mxu0 0.0
        %2985 = vmatprep.subr.mxu0 0.0
        %2986 = vmatpush1.msra.mxu0 0.0
        %2987 = vmatprep.subr.mxu0 0.0
        %2988 = vmatpush1.msra.mxu0 0.0
        %2989 = vmatprep.subr.mxu0 0.0
        %2990 = vmatpush1.msra.mxu0 0.0
        %2991 = vmatprep.subr.mxu0 0.0
        %2992 = vmatpush1.msra.mxu0 0.0
        %2993 = vmatprep.subr.mxu0 0.0
        %2994 = vmatpush1.msra.mxu0 0.0
        %2995 = vmatprep.subr.mxu0 0.0
        %2996 = vmatpush1.msra.mxu0 0.0
        %2997 = vmatprep.subr.mxu0 0.0
        %2998 = vmatpush1.msra.mxu0 0.0
        %2999 = vmatprep.subr.mxu0 0.0
        %3000 = vmatpush1.msra.mxu0 0.0
        %3001 = vmatprep.mubr.f32.mxu0 0.0
        %3002 = vmatmul.mubr.f32.gmra.mrb[0].mxu0 %v2932
        %v3003 = vpop.f32.mrb[0].mxu0
        %v3004 = vadd.f32 0.0, %v3003
        %v3005 = vpop.f32.mrb[0].mxu0
        %3006 = vmatprep.mubr.f32.mxu0 0.0
        %3007 = vmatmul.mubr.f32.gmra.mrb[0].mxu0 %v2935
        %v3008 = vpop.f32.mrb[0].mxu0
        %v3009 = vadd.f32 0.0, %v3008
        %v3010 = vpop.f32.mrb[0].mxu0
        %3011 = vdwg.mxu0
        %3012 = vrot.lane.b32.xlu0 %v2724, 120
        %v3013 = vpop.permute.xlu0 %3012
        %3014 = vrot.lane.b32.xlu0 %v2738, 120
        %v3015 = vpop.permute.xlu0 %3014
        %3016 = vrot.lane.b32.xlu0 %v2768, 104
        %v3017 = vpop.permute.xlu0 %3016
        %3018 = vrot.lane.b32.xlu0 %v2782, 104
        %v3019 = vpop.permute.xlu0 %3018
        %v3020 = vsel %vm2787, %v3013, 0
        %v3022 = vsel %vm2787, %v3015, 0
        %v3024 = vsel %vm2787, %v3017, 0
        %v3026 = vsel %vm2787, %v3019, 0
        %3028 = vmatprep.subr.mxu0 0.0
        %3029 = vmatpush1.xpose.msra.mxu0 %v3024
        %3030 = vmatprep.subr.mxu0 0.0
        %3031 = vmatpush1.xpose.msra.mxu0 %v3026
        %3032 = vmatprep.subr.mxu0 0.0
        %3033 = vmatpush1.xpose.msra.mxu0 0.0
        %3034 = vmatprep.subr.mxu0 0.0
        %3035 = vmatpush1.xpose.msra.mxu0 0.0
        %3036 = vmatprep.subr.mxu0 0.0
        %3037 = vmatpush1.xpose.msra.mxu0 0.0
        %3038 = vmatprep.subr.mxu0 0.0
        %3039 = vmatpush1.xpose.msra.mxu0 0.0
        %3040 = vmatprep.subr.mxu0 0.0
        %3041 = vmatpush1.xpose.msra.mxu0 0.0
        %3042 = vmatprep.subr.mxu0 0.0
        %3043 = vmatpush1.xpose.msra.mxu0 0.0
        %3044 = vmatprep.subr.mxu0 0.0
        %3045 = vmatpush1.xpose.msra.mxu0 0.0
        %3046 = vmatprep.subr.mxu0 0.0
        %3047 = vmatpush1.xpose.msra.mxu0 0.0
        %3048 = vmatprep.subr.mxu0 0.0
        %3049 = vmatpush1.xpose.msra.mxu0 0.0
        %3050 = vmatprep.subr.mxu0 0.0
        %3051 = vmatpush1.xpose.msra.mxu0 0.0
        %3052 = vmatprep.subr.mxu0 0.0
        %3053 = vmatpush1.xpose.msra.mxu0 0.0
        %3054 = vmatprep.subr.mxu0 0.0
        %3055 = vmatpush1.xpose.msra.mxu0 0.0
        %3056 = vmatprep.subr.mxu0 0.0
        %3057 = vmatpush1.xpose.msra.mxu0 0.0
        %3058 = vmatprep.subr.mxu0 0.0
        %3059 = vmatpush1.xpose.msra.mxu0 0.0
        %3060 = vmatprep.subr.mxu0 0.0
        %3061 = vmatpush1.xpose.msra.mxu0 0.0
        %3062 = vmatprep.subr.mxu0 0.0
        %3063 = vmatpush1.xpose.msra.mxu0 0.0
        %3064 = vmatprep.subr.mxu0 0.0
        %3065 = vmatpush1.xpose.msra.mxu0 0.0
        %3066 = vmatprep.subr.mxu0 0.0
        %3067 = vmatpush1.xpose.msra.mxu0 0.0
        %3068 = vmatprep.subr.mxu0 0.0
        %3069 = vmatpush1.xpose.msra.mxu0 0.0
        %3070 = vmatprep.subr.mxu0 0.0
        %3071 = vmatpush1.xpose.msra.mxu0 0.0
        %3072 = vmatprep.subr.mxu0 0.0
        %3073 = vmatpush1.xpose.msra.mxu0 0.0
        %3074 = vmatprep.subr.mxu0 0.0
        %3075 = vmatpush1.xpose.msra.mxu0 0.0
        %3076 = vmatprep.subr.mxu0 0.0
        %3077 = vmatpush1.xpose.msra.mxu0 0.0
        %3078 = vmatprep.subr.mxu0 0.0
        %3079 = vmatpush1.xpose.msra.mxu0 0.0
        %3080 = vmatprep.subr.mxu0 0.0
        %3081 = vmatpush1.xpose.msra.mxu0 0.0
        %3082 = vmatprep.subr.mxu0 0.0
        %3083 = vmatpush1.xpose.msra.mxu0 0.0
        %3084 = vmatprep.subr.mxu0 0.0
        %3085 = vmatpush1.xpose.msra.mxu0 0.0
        %3086 = vmatprep.subr.mxu0 0.0
        %3087 = vmatpush1.xpose.msra.mxu0 0.0
        %3088 = vmatprep.subr.mxu0 0.0
        %3089 = vmatpush1.xpose.msra.mxu0 0.0
        %3090 = vmatprep.subr.mxu0 0.0
        %3091 = vmatpush1.xpose.msra.mxu0 0.0
        %3092 = vmatprep.mubr.f32.mxu0 0.0
        %3093 = vmatmul.mubr.f32.gmra.mrb[0].mxu0 %v3020
        %v3094 = vpop.f32.mrb[0].mxu0
        %v3095 = vadd.f32 0.0, %v3094
        %v3096 = vpop.f32.mrb[0].mxu0
        %3097 = vmatprep.mubr.f32.mxu0 0.0
        %3098 = vmatmul.mubr.f32.gmra.mrb[0].mxu0 %v3022
        %v3099 = vpop.f32.mrb[0].mxu0
        %v3100 = vadd.f32 0.0, %v3099
        %v3101 = vpop.f32.mrb[0].mxu0
        %3102 = vdwg.mxu0
        %v3103 = vmul.f32 %v3095, 0.35355338
        %v3104 = vmul.f32 %v3100, 0.35355338
        %v3105 = vsel %vm635, %v3103, -inf
        %3106 = vmax.xlane.f32.xlu0 %v3105
        %v3107 = vpop.xlane.xlu0 %3106
        %v3108 = vsel %vm635, %v3104, -inf
        %3109 = vmax.xlane.f32.xlu0 %v3108
        %v3110 = vpop.xlane.xlu0 %3109
        %v3111 = vsub.f32 %v3103, %v3107
        %v3112 = vsub.f32 %v3104, %v3110
        %v3113 = vmul.f32 %v3111, 1.442695
        %v3114 = vpow.pop %v3113
        %v3115 = vmul.f32 %v3112, 1.442695
        %v3116 = vpow.pop %v3115
        %v3117 = vsel %vm635, %v3114, 0.0
        %3118 = vadd.xlane.f32.xlu0 %v3117
        %v3119 = vpop.xlane.xlu0 %3118
        %v3120 = vsel %vm635, %v3116, 0.0
        %3121 = vadd.xlane.f32.xlu0 %v3120
        %v3122 = vpop.xlane.xlu0 %3121
        %v3123 = vrcp.pop %v3119
        %v3124 = vmul.f32 %v3114, %v3123
        %v3125 = vrcp.pop %v3122
        %v3126 = vmul.f32 %v3116, %v3125
        %3127 = vrot.lane.b32.xlu0 %v2917, 80
        %v3128 = vpop.permute.xlu0 %3127
        %3129 = vrot.lane.b32.xlu0 %v2924, 80
        %v3130 = vpop.permute.xlu0 %3129
        %v3134 = vsel %vm635, %v3124, 0
        %v3137 = vsel %vm635, %v3126, 0
        %3139 = vmatprep.subr.mxu0 0.0
        %3140 = vmatpush1.msra.mxu0 %v3128
        %3141 = vmatprep.subr.mxu0 0.0
        %3142 = vmatpush1.msra.mxu0 %v3130
        %3143 = vmatprep.subr.mxu0 0.0
        %3144 = vmatpush1.msra.mxu0 0.0
        %3145 = vmatprep.subr.mxu0 0.0
        %3146 = vmatpush1.msra.mxu0 0.0
        %3147 = vmatprep.subr.mxu0 0.0
        %3148 = vmatpush1.msra.mxu0 0.0
        %3149 = vmatprep.subr.mxu0 0.0
        %3150 = vmatpush1.msra.mxu0 0.0
        %3151 = vmatprep.subr.mxu0 0.0
        %3152 = vmatpush1.msra.mxu0 0.0
        %3153 = vmatprep.subr.mxu0 0.0
        %3154 = vmatpush1.msra.mxu0 0.0
        %3155 = vmatprep.subr.mxu0 0.0
        %3156 = vmatpush1.msra.mxu0 0.0
        %3157 = vmatprep.subr.mxu0 0.0
        %3158 = vmatpush1.msra.mxu0 0.0
        %3159 = vmatprep.subr.mxu0 0.0
        %3160 = vmatpush1.msra.mxu0 0.0
        %3161 = vmatprep.subr.mxu0 0.0
        %3162 = vmatpush1.msra.mxu0 0.0
        %3163 = vmatprep.subr.mxu0 0.0
        %3164 = vmatpush1.msra.mxu0 0.0
        %3165 = vmatprep.subr.mxu0 0.0
        %3166 = vmatpush1.msra.mxu0 0.0
        %3167 = vmatprep.subr.mxu0 0.0
        %3168 = vmatpush1.msra.mxu0 0.0
        %3169 = vmatprep.subr.mxu0 0.0
        %3170 = vmatpush1.msra.mxu0 0.0
        %3171 = vmatprep.subr.mxu0 0.0
        %3172 = vmatpush1.msra.mxu0 0.0
        %3173 = vmatprep.subr.mxu0 0.0
        %3174 = vmatpush1.msra.mxu0 0.0
        %3175 = vmatprep.subr.mxu0 0.0
        %3176 = vmatpush1.msra.mxu0 0.0
        %3177 = vmatprep.subr.mxu0 0.0
        %3178 = vmatpush1.msra.mxu0 0.0
        %3179 = vmatprep.subr.mxu0 0.0
        %3180 = vmatpush1.msra.mxu0 0.0
        %3181 = vmatprep.subr.mxu0 0.0
        %3182 = vmatpush1.msra.mxu0 0.0
        %3183 = vmatprep.subr.mxu0 0.0
        %3184 = vmatpush1.msra.mxu0 0.0
        %3185 = vmatprep.subr.mxu0 0.0
        %3186 = vmatpush1.msra.mxu0 0.0
        %3187 = vmatprep.subr.mxu0 0.0
        %3188 = vmatpush1.msra.mxu0 0.0
        %3189 = vmatprep.subr.mxu0 0.0
        %3190 = vmatpush1.msra.mxu0 0.0
        %3191 = vmatprep.subr.mxu0 0.0
        %3192 = vmatpush1.msra.mxu0 0.0
        %3193 = vmatprep.subr.mxu0 0.0
        %3194 = vmatpush1.msra.mxu0 0.0
        %3195 = vmatprep.subr.mxu0 0.0
        %3196 = vmatpush1.msra.mxu0 0.0
        %3197 = vmatprep.subr.mxu0 0.0
        %3198 = vmatpush1.msra.mxu0 0.0
        %3199 = vmatprep.subr.mxu0 0.0
        %3200 = vmatpush1.msra.mxu0 0.0
        %3201 = vmatprep.subr.mxu0 0.0
        %3202 = vmatpush1.msra.mxu0 0.0
        %3203 = vmatprep.mubr.f32.mxu0 0.0
        %3204 = vmatmul.mubr.f32.gmra.mrb[0].mxu0 %v3134
        %v3205 = vpop.f32.mrb[0].mxu0
        %v3206 = vadd.f32 0.0, %v3205
        %v3207 = vpop.f32.mrb[0].mxu0
        %3208 = vmatprep.mubr.f32.mxu0 0.0
        %3209 = vmatmul.mubr.f32.gmra.mrb[0].mxu0 %v3137
        %v3210 = vpop.f32.mrb[0].mxu0
        %v3211 = vadd.f32 0.0, %v3210
        %v3212 = vpop.f32.mrb[0].mxu0
        %3213 = vdwg.mxu0
        %3216 = vrot.lane.b32.xlu0 %v3206, 16
        %v3217 = vpop.permute.xlu0 %3216
        %3218 = vrot.lane.b32.xlu0 %v3211, 16
        %v3219 = vpop.permute.xlu0 %3218
        %v3222 = vsel %vm635, %v3004, %v3217
        %v3223 = vsel %vm635, %v3009, %v3219
        %3226 = vrot.lane.b32.xlu0 %v2686, 112
        %v3227 = vpop.permute.xlu0 %3226
        %3228 = vrot.lane.b32.xlu0 %v2687, 112
        %v3229 = vpop.permute.xlu0 %3228
        %v3231 = vsel %vm2787, %v2674, 0
        %v3234 = vsel %vm2787, %v2675, 0
        %v3236 = vsel %vm2787, %v3227, 0
        %v3238 = vsel %vm2787, %v3229, 0
        %3240 = vmatprep.subr.mxu0 0.0
        %3241 = vmatpush1.xpose.msra.mxu0 %v3236
        %3242 = vmatprep.subr.mxu0 0.0
        %3243 = vmatpush1.xpose.msra.mxu0 %v3238
        %3244 = vmatprep.subr.mxu0 0.0
        %3245 = vmatpush1.xpose.msra.mxu0 0.0
        %3246 = vmatprep.subr.mxu0 0.0
        %3247 = vmatpush1.xpose.msra.mxu0 0.0
        %3248 = vmatprep.subr.mxu0 0.0
        %3249 = vmatpush1.xpose.msra.mxu0 0.0
        %3250 = vmatprep.subr.mxu0 0.0
        %3251 = vmatpush1.xpose.msra.mxu0 0.0
        %3252 = vmatprep.subr.mxu0 0.0
        %3253 = vmatpush1.xpose.msra.mxu0 0.0
        %3254 = vmatprep.subr.mxu0 0.0
        %3255 = vmatpush1.xpose.msra.mxu0 0.0
        %3256 = vmatprep.subr.mxu0 0.0
        %3257 = vmatpush1.xpose.msra.mxu0 0.0
        %3258 = vmatprep.subr.mxu0 0.0
        %3259 = vmatpush1.xpose.msra.mxu0 0.0
        %3260 = vmatprep.subr.mxu0 0.0
        %3261 = vmatpush1.xpose.msra.mxu0 0.0
        %3262 = vmatprep.subr.mxu0 0.0
        %3263 = vmatpush1.xpose.msra.mxu0 0.0
        %3264 = vmatprep.subr.mxu0 0.0
        %3265 = vmatpush1.xpose.msra.mxu0 0.0
        %3266 = vmatprep.subr.mxu0 0.0
        %3267 = vmatpush1.xpose.msra.mxu0 0.0
        %3268 = vmatprep.subr.mxu0 0.0
        %3269 = vmatpush1.xpose.msra.mxu0 0.0
        %3270 = vmatprep.subr.mxu0 0.0
        %3271 = vmatpush1.xpose.msra.mxu0 0.0
        %3272 = vmatprep.subr.mxu0 0.0
        %3273 = vmatpush1.xpose.msra.mxu0 0.0
        %3274 = vmatprep.subr.mxu0 0.0
        %3275 = vmatpush1.xpose.msra.mxu0 0.0
        %3276 = vmatprep.subr.mxu0 0.0
        %3277 = vmatpush1.xpose.msra.mxu0 0.0
        %3278 = vmatprep.subr.mxu0 0.0
        %3279 = vmatpush1.xpose.msra.mxu0 0.0
        %3280 = vmatprep.subr.mxu0 0.0
        %3281 = vmatpush1.xpose.msra.mxu0 0.0
        %3282 = vmatprep.subr.mxu0 0.0
        %3283 = vmatpush1.xpose.msra.mxu0 0.0
        %3284 = vmatprep.subr.mxu0 0.0
        %3285 = vmatpush1.xpose.msra.mxu0 0.0
        %3286 = vmatprep.subr.mxu0 0.0
        %3287 = vmatpush1.xpose.msra.mxu0 0.0
        %3288 = vmatprep.subr.mxu0 0.0
        %3289 = vmatpush1.xpose.msra.mxu0 0.0
        %3290 = vmatprep.subr.mxu0 0.0
        %3291 = vmatpush1.xpose.msra.mxu0 0.0
        %3292 = vmatprep.subr.mxu0 0.0
        %3293 = vmatpush1.xpose.msra.mxu0 0.0
        %3294 = vmatprep.subr.mxu0 0.0
        %3295 = vmatpush1.xpose.msra.mxu0 0.0
        %3296 = vmatprep.subr.mxu0 0.0
        %3297 = vmatpush1.xpose.msra.mxu0 0.0
        %3298 = vmatprep.subr.mxu0 0.0
        %3299 = vmatpush1.xpose.msra.mxu0 0.0
        %3300 = vmatprep.subr.mxu0 0.0
        %3301 = vmatpush1.xpose.msra.mxu0 0.0
        %3302 = vmatprep.subr.mxu0 0.0
        %3303 = vmatpush1.xpose.msra.mxu0 0.0
        %3304 = vmatprep.mubr.f32.mxu0 0.0
        %3305 = vmatmul.mubr.f32.gmra.mrb[0].mxu0 %v3231
        %v3306 = vpop.f32.mrb[0].mxu0
        %v3307 = vadd.f32 0.0, %v3306
        %v3308 = vpop.f32.mrb[0].mxu0
        %3309 = vmatprep.mubr.f32.mxu0 0.0
        %3310 = vmatmul.mubr.f32.gmra.mrb[0].mxu0 %v3234
        %v3311 = vpop.f32.mrb[0].mxu0
        %v3312 = vadd.f32 0.0, %v3311
        %v3313 = vpop.f32.mrb[0].mxu0
        %3314 = vdwg.mxu0
        %v3315 = vmul.f32 %v3307, 0.35355338
        %v3316 = vmul.f32 %v3312, 0.35355338
        %v3317 = vsel %vm635, %v3315, -inf
        %3318 = vmax.xlane.f32.xlu0 %v3317
        %v3319 = vpop.xlane.xlu0 %3318
        %v3320 = vsel %vm635, %v3316, -inf
        %3321 = vmax.xlane.f32.xlu0 %v3320
        %v3322 = vpop.xlane.xlu0 %3321
        %v3323 = vsub.f32 %v3315, %v3319
        %v3324 = vsub.f32 %v3316, %v3322
        %v3325 = vmul.f32 %v3323, 1.442695
        %v3326 = vpow.pop %v3325
        %v3327 = vmul.f32 %v3324, 1.442695
        %v3328 = vpow.pop %v3327
        %v3329 = vsel %vm635, %v3326, 0.0
        %3330 = vadd.xlane.f32.xlu0 %v3329
        %v3331 = vpop.xlane.xlu0 %3330
        %v3332 = vsel %vm635, %v3328, 0.0
        %3333 = vadd.xlane.f32.xlu0 %v3332
        %v3334 = vpop.xlane.xlu0 %3333
        %v3335 = vrcp.pop %v3331
        %v3336 = vmul.f32 %v3326, %v3335
        %v3337 = vrcp.pop %v3334
        %v3338 = vmul.f32 %v3328, %v3337
        %3341 = vrot.lane.b32.xlu0 %v2538, 96
        %v3342 = vpop.permute.xlu0 %3341
        %3343 = vrot.lane.b32.xlu0 %v2539, 96
        %v3344 = vpop.permute.xlu0 %3343
        %v3348 = vsel %vm635, %v3336, 0
        %v3351 = vsel %vm635, %v3338, 0
        %3353 = vmatprep.subr.mxu0 0.0
        %3354 = vmatpush1.msra.mxu0 %v3342
        %3355 = vmatprep.subr.mxu0 0.0
        %3356 = vmatpush1.msra.mxu0 %v3344
        %3357 = vmatprep.subr.mxu0 0.0
        %3358 = vmatpush1.msra.mxu0 0.0
        %3359 = vmatprep.subr.mxu0 0.0
        %3360 = vmatpush1.msra.mxu0 0.0
        %3361 = vmatprep.subr.mxu0 0.0
        %3362 = vmatpush1.msra.mxu0 0.0
        %3363 = vmatprep.subr.mxu0 0.0
        %3364 = vmatpush1.msra.mxu0 0.0
        %3365 = vmatprep.subr.mxu0 0.0
        %3366 = vmatpush1.msra.mxu0 0.0
        %3367 = vmatprep.subr.mxu0 0.0
        %3368 = vmatpush1.msra.mxu0 0.0
        %3369 = vmatprep.subr.mxu0 0.0
        %3370 = vmatpush1.msra.mxu0 0.0
        %3371 = vmatprep.subr.mxu0 0.0
        %3372 = vmatpush1.msra.mxu0 0.0
        %3373 = vmatprep.subr.mxu0 0.0
        %3374 = vmatpush1.msra.mxu0 0.0
        %3375 = vmatprep.subr.mxu0 0.0
        %3376 = vmatpush1.msra.mxu0 0.0
        %3377 = vmatprep.subr.mxu0 0.0
        %3378 = vmatpush1.msra.mxu0 0.0
        %3379 = vmatprep.subr.mxu0 0.0
        %3380 = vmatpush1.msra.mxu0 0.0
        %3381 = vmatprep.subr.mxu0 0.0
        %3382 = vmatpush1.msra.mxu0 0.0
        %3383 = vmatprep.subr.mxu0 0.0
        %3384 = vmatpush1.msra.mxu0 0.0
        %3385 = vmatprep.subr.mxu0 0.0
        %3386 = vmatpush1.msra.mxu0 0.0
        %3387 = vmatprep.subr.mxu0 0.0
        %3388 = vmatpush1.msra.mxu0 0.0
        %3389 = vmatprep.subr.mxu0 0.0
        %3390 = vmatpush1.msra.mxu0 0.0
        %3391 = vmatprep.subr.mxu0 0.0
        %3392 = vmatpush1.msra.mxu0 0.0
        %3393 = vmatprep.subr.mxu0 0.0
        %3394 = vmatpush1.msra.mxu0 0.0
        %3395 = vmatprep.subr.mxu0 0.0
        %3396 = vmatpush1.msra.mxu0 0.0
        %3397 = vmatprep.subr.mxu0 0.0
        %3398 = vmatpush1.msra.mxu0 0.0
        %3399 = vmatprep.subr.mxu0 0.0
        %3400 = vmatpush1.msra.mxu0 0.0
        %3401 = vmatprep.subr.mxu0 0.0
        %3402 = vmatpush1.msra.mxu0 0.0
        %3403 = vmatprep.subr.mxu0 0.0
        %3404 = vmatpush1.msra.mxu0 0.0
        %3405 = vmatprep.subr.mxu0 0.0
        %3406 = vmatpush1.msra.mxu0 0.0
        %3407 = vmatprep.subr.mxu0 0.0
        %3408 = vmatpush1.msra.mxu0 0.0
        %3409 = vmatprep.subr.mxu0 0.0
        %3410 = vmatpush1.msra.mxu0 0.0
        %3411 = vmatprep.subr.mxu0 0.0
        %3412 = vmatpush1.msra.mxu0 0.0
        %3413 = vmatprep.subr.mxu0 0.0
        %3414 = vmatpush1.msra.mxu0 0.0
        %3415 = vmatprep.subr.mxu0 0.0
        %3416 = vmatpush1.msra.mxu0 0.0
        %3417 = vmatprep.mubr.f32.mxu0 0.0
        %3418 = vmatmul.mubr.f32.gmra.mrb[0].mxu0 %v3348
        %v3419 = vpop.f32.mrb[0].mxu0
        %v3420 = vadd.f32 0.0, %v3419
        %v3421 = vpop.f32.mrb[0].mxu0
        %3422 = vmatprep.mubr.f32.mxu0 0.0
        %3423 = vmatmul.mubr.f32.gmra.mrb[0].mxu0 %v3351
        %v3424 = vpop.f32.mrb[0].mxu0
        %v3425 = vadd.f32 0.0, %v3424
        %v3426 = vpop.f32.mrb[0].mxu0
        %3427 = vdwg.mxu0
        %3428 = vrot.lane.b32.xlu0 %v2674, 120
        %v3429 = vpop.permute.xlu0 %3428
        %3430 = vrot.lane.b32.xlu0 %v2675, 120
        %v3431 = vpop.permute.xlu0 %3430
        %3432 = vrot.lane.b32.xlu0 %v2686, 104
        %v3433 = vpop.permute.xlu0 %3432
        %3434 = vrot.lane.b32.xlu0 %v2687, 104
        %v3435 = vpop.permute.xlu0 %3434
        %v3436 = vsel %vm2787, %v3429, 0
        %v3438 = vsel %vm2787, %v3431, 0
        %v3440 = vsel %vm2787, %v3433, 0
        %v3442 = vsel %vm2787, %v3435, 0
        %3444 = vmatprep.subr.mxu0 0.0
        %3445 = vmatpush1.xpose.msra.mxu0 %v3440
        %3446 = vmatprep.subr.mxu0 0.0
        %3447 = vmatpush1.xpose.msra.mxu0 %v3442
        %3448 = vmatprep.subr.mxu0 0.0
        %3449 = vmatpush1.xpose.msra.mxu0 0.0
        %3450 = vmatprep.subr.mxu0 0.0
        %3451 = vmatpush1.xpose.msra.mxu0 0.0
        %3452 = vmatprep.subr.mxu0 0.0
        %3453 = vmatpush1.xpose.msra.mxu0 0.0
        %3454 = vmatprep.subr.mxu0 0.0
        %3455 = vmatpush1.xpose.msra.mxu0 0.0
        %3456 = vmatprep.subr.mxu0 0.0
        %3457 = vmatpush1.xpose.msra.mxu0 0.0
        %3458 = vmatprep.subr.mxu0 0.0
        %3459 = vmatpush1.xpose.msra.mxu0 0.0
        %3460 = vmatprep.subr.mxu0 0.0
        %3461 = vmatpush1.xpose.msra.mxu0 0.0
        %3462 = vmatprep.subr.mxu0 0.0
        %3463 = vmatpush1.xpose.msra.mxu0 0.0
        %3464 = vmatprep.subr.mxu0 0.0
        %3465 = vmatpush1.xpose.msra.mxu0 0.0
        %3466 = vmatprep.subr.mxu0 0.0
        %3467 = vmatpush1.xpose.msra.mxu0 0.0
        %3468 = vmatprep.subr.mxu0 0.0
        %3469 = vmatpush1.xpose.msra.mxu0 0.0
        %3470 = vmatprep.subr.mxu0 0.0
        %3471 = vmatpush1.xpose.msra.mxu0 0.0
        %3472 = vmatprep.subr.mxu0 0.0
        %3473 = vmatpush1.xpose.msra.mxu0 0.0
        %3474 = vmatprep.subr.mxu0 0.0
        %3475 = vmatpush1.xpose.msra.mxu0 0.0
        %3476 = vmatprep.subr.mxu0 0.0
        %3477 = vmatpush1.xpose.msra.mxu0 0.0
        %3478 = vmatprep.subr.mxu0 0.0
        %3479 = vmatpush1.xpose.msra.mxu0 0.0
        %3480 = vmatprep.subr.mxu0 0.0
        %3481 = vmatpush1.xpose.msra.mxu0 0.0
        %3482 = vmatprep.subr.mxu0 0.0
        %3483 = vmatpush1.xpose.msra.mxu0 0.0
        %3484 = vmatprep.subr.mxu0 0.0
        %3485 = vmatpush1.xpose.msra.mxu0 0.0
        %3486 = vmatprep.subr.mxu0 0.0
        %3487 = vmatpush1.xpose.msra.mxu0 0.0
        %3488 = vmatprep.subr.mxu0 0.0
        %3489 = vmatpush1.xpose.msra.mxu0 0.0
        %3490 = vmatprep.subr.mxu0 0.0
        %3491 = vmatpush1.xpose.msra.mxu0 0.0
        %3492 = vmatprep.subr.mxu0 0.0
        %3493 = vmatpush1.xpose.msra.mxu0 0.0
        %3494 = vmatprep.subr.mxu0 0.0
        %3495 = vmatpush1.xpose.msra.mxu0 0.0
        %3496 = vmatprep.subr.mxu0 0.0
        %3497 = vmatpush1.xpose.msra.mxu0 0.0
        %3498 = vmatprep.subr.mxu0 0.0
        %3499 = vmatpush1.xpose.msra.mxu0 0.0
        %3500 = vmatprep.subr.mxu0 0.0
        %3501 = vmatpush1.xpose.msra.mxu0 0.0
        %3502 = vmatprep.subr.mxu0 0.0
        %3503 = vmatpush1.xpose.msra.mxu0 0.0
        %3504 = vmatprep.subr.mxu0 0.0
        %3505 = vmatpush1.xpose.msra.mxu0 0.0
        %3506 = vmatprep.subr.mxu0 0.0
        %3507 = vmatpush1.xpose.msra.mxu0 0.0
        %3508 = vmatprep.mubr.f32.mxu0 0.0
        %3509 = vmatmul.mubr.f32.gmra.mrb[0].mxu0 %v3436
        %v3510 = vpop.f32.mrb[0].mxu0
        %v3511 = vadd.f32 0.0, %v3510
        %v3512 = vpop.f32.mrb[0].mxu0
        %3513 = vmatprep.mubr.f32.mxu0 0.0
        %3514 = vmatmul.mubr.f32.gmra.mrb[0].mxu0 %v3438
        %v3515 = vpop.f32.mrb[0].mxu0
        %v3516 = vadd.f32 0.0, %v3515
        %v3517 = vpop.f32.mrb[0].mxu0
        %3518 = vdwg.mxu0
        %v3519 = vmul.f32 %v3511, 0.35355338
        %v3520 = vmul.f32 %v3516, 0.35355338
        %v3521 = vsel %vm635, %v3519, -inf
        %3522 = vmax.xlane.f32.xlu0 %v3521
        %v3523 = vpop.xlane.xlu0 %3522
        %v3524 = vsel %vm635, %v3520, -inf
        %3525 = vmax.xlane.f32.xlu0 %v3524
        %v3526 = vpop.xlane.xlu0 %3525
        %v3527 = vsub.f32 %v3519, %v3523
        %v3528 = vsub.f32 %v3520, %v3526
        %v3529 = vmul.f32 %v3527, 1.442695
        %v3530 = vpow.pop %v3529
        %v3531 = vmul.f32 %v3528, 1.442695
        %v3532 = vpow.pop %v3531
        %v3533 = vsel %vm635, %v3530, 0.0
        %3534 = vadd.xlane.f32.xlu0 %v3533
        %v3535 = vpop.xlane.xlu0 %3534
        %v3536 = vsel %vm635, %v3532, 0.0
        %3537 = vadd.xlane.f32.xlu0 %v3536
        %v3538 = vpop.xlane.xlu0 %3537
        %v3539 = vrcp.pop %v3535
        %v3540 = vmul.f32 %v3530, %v3539
        %v3541 = vrcp.pop %v3538
        %v3542 = vmul.f32 %v3532, %v3541
        %3543 = vrot.lane.b32.xlu0 %v2538, 80
        %v3544 = vpop.permute.xlu0 %3543
        %3545 = vrot.lane.b32.xlu0 %v2539, 80
        %v3546 = vpop.permute.xlu0 %3545
        %v3550 = vsel %vm635, %v3540, 0
        %v3553 = vsel %vm635, %v3542, 0
        %3555 = vmatprep.subr.mxu0 0.0
        %3556 = vmatpush1.msra.mxu0 %v3544
        %3557 = vmatprep.subr.mxu0 0.0
        %3558 = vmatpush1.msra.mxu0 %v3546
        %3559 = vmatprep.subr.mxu0 0.0
        %3560 = vmatpush1.msra.mxu0 0.0
        %3561 = vmatprep.subr.mxu0 0.0
        %3562 = vmatpush1.msra.mxu0 0.0
        %3563 = vmatprep.subr.mxu0 0.0
        %3564 = vmatpush1.msra.mxu0 0.0
        %3565 = vmatprep.subr.mxu0 0.0
        %3566 = vmatpush1.msra.mxu0 0.0
        %3567 = vmatprep.subr.mxu0 0.0
        %3568 = vmatpush1.msra.mxu0 0.0
        %3569 = vmatprep.subr.mxu0 0.0
        %3570 = vmatpush1.msra.mxu0 0.0
        %3571 = vmatprep.subr.mxu0 0.0
        %3572 = vmatpush1.msra.mxu0 0.0
        %3573 = vmatprep.subr.mxu0 0.0
        %3574 = vmatpush1.msra.mxu0 0.0
        %3575 = vmatprep.subr.mxu0 0.0
        %3576 = vmatpush1.msra.mxu0 0.0
        %3577 = vmatprep.subr.mxu0 0.0
        %3578 = vmatpush1.msra.mxu0 0.0
        %3579 = vmatprep.subr.mxu0 0.0
        %3580 = vmatpush1.msra.mxu0 0.0
        %3581 = vmatprep.subr.mxu0 0.0
        %3582 = vmatpush1.msra.mxu0 0.0
        %3583 = vmatprep.subr.mxu0 0.0
        %3584 = vmatpush1.msra.mxu0 0.0
        %3585 = vmatprep.subr.mxu0 0.0
        %3586 = vmatpush1.msra.mxu0 0.0
        %3587 = vmatprep.subr.mxu0 0.0
        %3588 = vmatpush1.msra.mxu0 0.0
        %3589 = vmatprep.subr.mxu0 0.0
        %3590 = vmatpush1.msra.mxu0 0.0
        %3591 = vmatprep.subr.mxu0 0.0
        %3592 = vmatpush1.msra.mxu0 0.0
        %3593 = vmatprep.subr.mxu0 0.0
        %3594 = vmatpush1.msra.mxu0 0.0
        %3595 = vmatprep.subr.mxu0 0.0
        %3596 = vmatpush1.msra.mxu0 0.0
        %3597 = vmatprep.subr.mxu0 0.0
        %3598 = vmatpush1.msra.mxu0 0.0
        %3599 = vmatprep.subr.mxu0 0.0
        %3600 = vmatpush1.msra.mxu0 0.0
        %3601 = vmatprep.subr.mxu0 0.0
        %3602 = vmatpush1.msra.mxu0 0.0
        %3603 = vmatprep.subr.mxu0 0.0
        %3604 = vmatpush1.msra.mxu0 0.0
        %3605 = vmatprep.subr.mxu0 0.0
        %3606 = vmatpush1.msra.mxu0 0.0
        %3607 = vmatprep.subr.mxu0 0.0
        %3608 = vmatpush1.msra.mxu0 0.0
        %3609 = vmatprep.subr.mxu0 0.0
        %3610 = vmatpush1.msra.mxu0 0.0
        %3611 = vmatprep.subr.mxu0 0.0
        %3612 = vmatpush1.msra.mxu0 0.0
        %3613 = vmatprep.subr.mxu0 0.0
        %3614 = vmatpush1.msra.mxu0 0.0
        %3615 = vmatprep.subr.mxu0 0.0
        %3616 = vmatpush1.msra.mxu0 0.0
        %3617 = vmatprep.subr.mxu0 0.0
        %3618 = vmatpush1.msra.mxu0 0.0
        %3619 = vmatprep.mubr.f32.mxu0 0.0
        %3620 = vmatmul.mubr.f32.gmra.mrb[0].mxu0 %v3550
        %v3621 = vpop.f32.mrb[0].mxu0
        %v3622 = vadd.f32 0.0, %v3621
        %v3623 = vpop.f32.mrb[0].mxu0
        %3624 = vmatprep.mubr.f32.mxu0 0.0
        %3625 = vmatmul.mubr.f32.gmra.mrb[0].mxu0 %v3553
        %v3626 = vpop.f32.mrb[0].mxu0
        %v3627 = vadd.f32 0.0, %v3626
        %v3628 = vpop.f32.mrb[0].mxu0
        %3629 = vdwg.mxu0
        %3632 = vrot.lane.b32.xlu0 %v3622, 16
        %v3633 = vpop.permute.xlu0 %3632
        %3634 = vrot.lane.b32.xlu0 %v3627, 16
        %v3635 = vpop.permute.xlu0 %3634
        %v3638 = vsel %vm635, %v3420, %v3633
        %v3639 = vsel %vm635, %v3425, %v3635
        %v3640 = vmax.f32 %v3222, 0.0
        %v3641 = vmax.f32 %v3223, 0.0
        %v3642 = vld [vmem:[%s11] sm:$0xff]
        %v3643 = vld [vmem:[%s11 + $0x8] sm:$0xff]
        %v3644 = vld [vmem:[%s11 + $0x10] sm:$0xff]
        %v3645 = vld [vmem:[%s11 + $0x18] sm:$0xff]
        %v3646 = vld [vmem:[%s12] sm:$0x1]
        %v3648 = vlaneseq
        %v3649 = vshrl.u32 %v3648, 7
        %v3650 = vsub.s32 0, %v3649
        %v3651 = vrot.slane %v3646, %v3650
        %vm3653 = vcmask 261120
        %v3655 = vsel %vm3653, %v3640, 0
        %v3658 = vsel %vm3653, %v3641, 0
        %3660 = vmatprep.subr.mxu0 0.0
        %3661 = vmatpush1.msra.mxu0 %v3642
        %3662 = vmatprep.subr.mxu0 0.0
        %3663 = vmatpush1.msra.mxu0 %v3643
        %3664 = vmatprep.subr.mxu0 0.0
        %3665 = vmatpush1.msra.mxu0 %v3644
        %3666 = vmatprep.subr.mxu0 0.0
        %3667 = vmatpush1.msra.mxu0 %v3645
        %3668 = vmatprep.subr.mxu0 0.0
        %3669 = vmatpush1.msra.mxu0 0.0
        %3670 = vmatprep.subr.mxu0 0.0
        %3671 = vmatpush1.msra.mxu0 0.0
        %3672 = vmatprep.subr.mxu0 0.0
        %3673 = vmatpush1.msra.mxu0 0.0
        %3674 = vmatprep.subr.mxu0 0.0
        %3675 = vmatpush1.msra.mxu0 0.0
        %3676 = vmatprep.subr.mxu0 0.0
        %3677 = vmatpush1.msra.mxu0 0.0
        %3678 = vmatprep.subr.mxu0 0.0
        %3679 = vmatpush1.msra.mxu0 0.0
        %3680 = vmatprep.subr.mxu0 0.0
        %3681 = vmatpush1.msra.mxu0 0.0
        %3682 = vmatprep.subr.mxu0 0.0
        %3683 = vmatpush1.msra.mxu0 0.0
        %3684 = vmatprep.subr.mxu0 0.0
        %3685 = vmatpush1.msra.mxu0 0.0
        %3686 = vmatprep.subr.mxu0 0.0
        %3687 = vmatpush1.msra.mxu0 0.0
        %3688 = vmatprep.subr.mxu0 0.0
        %3689 = vmatpush1.msra.mxu0 0.0
        %3690 = vmatprep.subr.mxu0 0.0
        %3691 = vmatpush1.msra.mxu0 0.0
        %3692 = vmatprep.subr.mxu0 0.0
        %3693 = vmatpush1.msra.mxu0 0.0
        %3694 = vmatprep.subr.mxu0 0.0
        %3695 = vmatpush1.msra.mxu0 0.0
        %3696 = vmatprep.subr.mxu0 0.0
        %3697 = vmatpush1.msra.mxu0 0.0
        %3698 = vmatprep.subr.mxu0 0.0
        %3699 = vmatpush1.msra.mxu0 0.0
        %3700 = vmatprep.subr.mxu0 0.0
        %3701 = vmatpush1.msra.mxu0 0.0
        %3702 = vmatprep.subr.mxu0 0.0
        %3703 = vmatpush1.msra.mxu0 0.0
        %3704 = vmatprep.subr.mxu0 0.0
        %3705 = vmatpush1.msra.mxu0 0.0
        %3706 = vmatprep.subr.mxu0 0.0
        %3707 = vmatpush1.msra.mxu0 0.0
        %3708 = vmatprep.subr.mxu0 0.0
        %3709 = vmatpush1.msra.mxu0 0.0
        %3710 = vmatprep.subr.mxu0 0.0
        %3711 = vmatpush1.msra.mxu0 0.0
        %3712 = vmatprep.subr.mxu0 0.0
        %3713 = vmatpush1.msra.mxu0 0.0
        %3714 = vmatprep.subr.mxu0 0.0
        %3715 = vmatpush1.msra.mxu0 0.0
        %3716 = vmatprep.subr.mxu0 0.0
        %3717 = vmatpush1.msra.mxu0 0.0
        %3718 = vmatprep.subr.mxu0 0.0
        %3719 = vmatpush1.msra.mxu0 0.0
        %3720 = vmatprep.subr.mxu0 0.0
        %3721 = vmatpush1.msra.mxu0 0.0
        %3722 = vmatprep.subr.mxu0 0.0
        %3723 = vmatpush1.msra.mxu0 0.0
        %3724 = vmatprep.mubr.f32.mxu0 0.0
        %3725 = vmatmul.mubr.f32.gmra.mrb[0].mxu0 %v3655
        %v3726 = vpop.f32.mrb[0].mxu0
        %v3727 = vadd.f32 %v3651, %v3726
        %v3728 = vpop.f32.mrb[0].mxu0
        %3729 = vmatprep.mubr.f32.mxu0 0.0
        %3730 = vmatmul.mubr.f32.gmra.mrb[0].mxu0 %v3658
        %v3731 = vpop.f32.mrb[0].mxu0
        %v3732 = vadd.f32 %v3651, %v3731
        %v3733 = vpop.f32.mrb[0].mxu0
        %3734 = vdwg.mxu0
        %v3735 = vmax.f32 %v3638, 0.0
        %v3736 = vmax.f32 %v3639, 0.0
        %v3737 = vld [vmem:[%s13] sm:$0xff]
        %v3738 = vld [vmem:[%s13 + $0x8] sm:$0xff]
        %v3739 = vld [vmem:[%s13 + $0x10] sm:$0xff]
        %v3740 = vld [vmem:[%s13 + $0x18] sm:$0xff]
        %v3741 = vld [vmem:[%s14] sm:$0x1]
        %v3743 = vlaneseq
        %v3744 = vshrl.u32 %v3743, 7
        %v3745 = vsub.s32 0, %v3744
        %v3746 = vrot.slane %v3741, %v3745
        %v3749 = vsel %vm3653, %v3735, 0
        %v3752 = vsel %vm3653, %v3736, 0
        %3754 = vmatprep.subr.mxu0 0.0
        %3755 = vmatpush1.msra.mxu0 %v3737
        %3756 = vmatprep.subr.mxu0 0.0
        %3757 = vmatpush1.msra.mxu0 %v3738
        %3758 = vmatprep.subr.mxu0 0.0
        %3759 = vmatpush1.msra.mxu0 %v3739
        %3760 = vmatprep.subr.mxu0 0.0
        %3761 = vmatpush1.msra.mxu0 %v3740
        %3762 = vmatprep.subr.mxu0 0.0
        %3763 = vmatpush1.msra.mxu0 0.0
        %3764 = vmatprep.subr.mxu0 0.0
        %3765 = vmatpush1.msra.mxu0 0.0
        %3766 = vmatprep.subr.mxu0 0.0
        %3767 = vmatpush1.msra.mxu0 0.0
        %3768 = vmatprep.subr.mxu0 0.0
        %3769 = vmatpush1.msra.mxu0 0.0
        %3770 = vmatprep.subr.mxu0 0.0
        %3771 = vmatpush1.msra.mxu0 0.0
        %3772 = vmatprep.subr.mxu0 0.0
        %3773 = vmatpush1.msra.mxu0 0.0
        %3774 = vmatprep.subr.mxu0 0.0
        %3775 = vmatpush1.msra.mxu0 0.0
        %3776 = vmatprep.subr.mxu0 0.0
        %3777 = vmatpush1.msra.mxu0 0.0
        %3778 = vmatprep.subr.mxu0 0.0
        %3779 = vmatpush1.msra.mxu0 0.0
        %3780 = vmatprep.subr.mxu0 0.0
        %3781 = vmatpush1.msra.mxu0 0.0
        %3782 = vmatprep.subr.mxu0 0.0
        %3783 = vmatpush1.msra.mxu0 0.0
        %3784 = vmatprep.subr.mxu0 0.0
        %3785 = vmatpush1.msra.mxu0 0.0
        %3786 = vmatprep.subr.mxu0 0.0
        %3787 = vmatpush1.msra.mxu0 0.0
        %3788 = vmatprep.subr.mxu0 0.0
        %3789 = vmatpush1.msra.mxu0 0.0
        %3790 = vmatprep.subr.mxu0 0.0
        %3791 = vmatpush1.msra.mxu0 0.0
        %3792 = vmatprep.subr.mxu0 0.0
        %3793 = vmatpush1.msra.mxu0 0.0
        %3794 = vmatprep.subr.mxu0 0.0
        %3795 = vmatpush1.msra.mxu0 0.0
        %3796 = vmatprep.subr.mxu0 0.0
        %3797 = vmatpush1.msra.mxu0 0.0
        %3798 = vmatprep.subr.mxu0 0.0
        %3799 = vmatpush1.msra.mxu0 0.0
        %3800 = vmatprep.subr.mxu0 0.0
        %3801 = vmatpush1.msra.mxu0 0.0
        %3802 = vmatprep.subr.mxu0 0.0
        %3803 = vmatpush1.msra.mxu0 0.0
        %3804 = vmatprep.subr.mxu0 0.0
        %3805 = vmatpush1.msra.mxu0 0.0
        %3806 = vmatprep.subr.mxu0 0.0
        %3807 = vmatpush1.msra.mxu0 0.0
        %3808 = vmatprep.subr.mxu0 0.0
        %3809 = vmatpush1.msra.mxu0 0.0
        %3810 = vmatprep.subr.mxu0 0.0
        %3811 = vmatpush1.msra.mxu0 0.0
        %3812 = vmatprep.subr.mxu0 0.0
        %3813 = vmatpush1.msra.mxu0 0.0
        %3814 = vmatprep.subr.mxu0 0.0
        %3815 = vmatpush1.msra.mxu0 0.0
        %3816 = vmatprep.subr.mxu0 0.0
        %3817 = vmatpush1.msra.mxu0 0.0
        %3818 = vmatprep.mubr.f32.mxu0 0.0
        %3819 = vmatmul.mubr.f32.gmra.mrb[0].mxu0 %v3749
        %v3820 = vpop.f32.mrb[0].mxu0
        %v3821 = vadd.f32 %v3746, %v3820
        %v3822 = vpop.f32.mrb[0].mxu0
        %3823 = vmatprep.mubr.f32.mxu0 0.0
        %3824 = vmatmul.mubr.f32.gmra.mrb[0].mxu0 %v3752
        %v3825 = vpop.f32.mrb[0].mxu0
        %v3826 = vadd.f32 %v3746, %v3825
        %v3827 = vpop.f32.mrb[0].mxu0
        %3828 = vdwg.mxu0
        %v3831 = vcombine.high %v3727, %v3727
        %v3833 = vunpack.c.l.s4 1966171168
        %v3834 = vunpack.c.0.s8 %v3833
        %v3835 = vlaneseq
        %v3836 = vshrl.u32 %v3835, 7
        %v3837 = vsub.s32 %v3834, %v3836
        %v3838 = vrot.slane %v3727, %v3837
        %v3840 = vunpack.c.l.s4 1966171168
        %v3841 = vunpack.c.0.s8 %v3840
        %v3842 = vlaneseq
        %v3843 = vshrl.u32 %v3842, 7
        %v3844 = vsub.s32 %v3841, %v3843
        %v3845 = vrot.slane %v3831, %v3844
        %v3846 = vcombine.high %v3838, %v3838
        %v3847 = vcombine.high %v3845, %v3845
        %v3849 = vunpack.c.l.s4 1966171168
        %v3850 = vunpack.c.0.s8 %v3849
        %v3851 = vlaneseq
        %v3852 = vshrl.u32 %v3851, 7
        %v3853 = vsub.s32 %v3850, %v3852
        %v3854 = vrot.slane %v3838, %v3853
        %v3856 = vunpack.c.l.s4 1966171168
        %v3857 = vunpack.c.0.s8 %v3856
        %v3858 = vlaneseq
        %v3859 = vshrl.u32 %v3858, 7
        %v3860 = vsub.s32 %v3857, %v3859
        %v3861 = vrot.slane %v3845, %v3860
        %v3863 = vunpack.c.l.s4 1966171168
        %v3864 = vunpack.c.0.s8 %v3863
        %v3865 = vlaneseq
        %v3866 = vshrl.u32 %v3865, 7
        %v3867 = vsub.s32 %v3864, %v3866
        %v3868 = vrot.slane %v3846, %v3867
        %v3870 = vunpack.c.l.s4 1966171168
        %v3871 = vunpack.c.0.s8 %v3870
        %v3872 = vlaneseq
        %v3873 = vshrl.u32 %v3872, 7
        %v3874 = vsub.s32 %v3871, %v3873
        %v3875 = vrot.slane %v3847, %v3874
        %v3876 = vcombine.high %v3854, %v3854
        %v3877 = vcombine.high %v3861, %v3861
        %v3878 = vcombine.high %v3868, %v3868
        %v3879 = vcombine.high %v3875, %v3875
        %v3880 = vcombine.high %v3732, %v3732
        %v3882 = vunpack.c.l.s4 1966171168
        %v3883 = vunpack.c.0.s8 %v3882
        %v3884 = vlaneseq
        %v3885 = vshrl.u32 %v3884, 7
        %v3886 = vsub.s32 %v3883, %v3885
        %v3887 = vrot.slane %v3732, %v3886
        %v3889 = vunpack.c.l.s4 1966171168
        %v3890 = vunpack.c.0.s8 %v3889
        %v3891 = vlaneseq
        %v3892 = vshrl.u32 %v3891, 7
        %v3893 = vsub.s32 %v3890, %v3892
        %v3894 = vrot.slane %v3880, %v3893
        %v3895 = vcombine.high %v3887, %v3887
        %v3896 = vcombine.high %v3894, %v3894
        %v3898 = vunpack.c.l.s4 1966171168
        %v3899 = vunpack.c.0.s8 %v3898
        %v3900 = vlaneseq
        %v3901 = vshrl.u32 %v3900, 7
        %v3902 = vsub.s32 %v3899, %v3901
        %v3903 = vrot.slane %v3887, %v3902
        %v3905 = vunpack.c.l.s4 1966171168
        %v3906 = vunpack.c.0.s8 %v3905
        %v3907 = vlaneseq
        %v3908 = vshrl.u32 %v3907, 7
        %v3909 = vsub.s32 %v3906, %v3908
        %v3910 = vrot.slane %v3894, %v3909
        %v3912 = vunpack.c.l.s4 1966171168
        %v3913 = vunpack.c.0.s8 %v3912
        %v3914 = vlaneseq
        %v3915 = vshrl.u32 %v3914, 7
        %v3916 = vsub.s32 %v3913, %v3915
        %v3917 = vrot.slane %v3895, %v3916
        %v3919 = vunpack.c.l.s4 1966171168
        %v3920 = vunpack.c.0.s8 %v3919
        %v3921 = vlaneseq
        %v3922 = vshrl.u32 %v3921, 7
        %v3923 = vsub.s32 %v3920, %v3922
        %v3924 = vrot.slane %v3896, %v3923
        %v3925 = vcombine.high %v3903, %v3903
        %v3926 = vcombine.high %v3910, %v3910
        %v3927 = vcombine.high %v3917, %v3917
        %v3928 = vcombine.high %v3924, %v3924
        %v3929 = vlaneseq
        %v3930 = vshrl.u32 %v3929, 7
        %v3931 = vsub.s32 0, %v3930
        %v3932 = vrot.slane %v3854, %v3931
        %v3933 = vlaneseq
        %v3934 = vshrl.u32 %v3933, 7
        %v3935 = vsub.s32 0, %v3934
        %v3936 = vrot.slane %v3868, %v3935
        %v3937 = vlaneseq
        %v3938 = vshrl.u32 %v3937, 7
        %v3939 = vsub.s32 0, %v3938
        %v3940 = vrot.slane %v3876, %v3939
        %v3941 = vlaneseq
        %v3942 = vshrl.u32 %v3941, 7
        %v3943 = vsub.s32 0, %v3942
        %v3944 = vrot.slane %v3878, %v3943
        %v3945 = vlaneseq
        %v3946 = vshrl.u32 %v3945, 7
        %v3947 = vsub.s32 0, %v3946
        %v3948 = vrot.slane %v3861, %v3947
        %v3949 = vlaneseq
        %v3950 = vshrl.u32 %v3949, 7
        %v3951 = vsub.s32 0, %v3950
        %v3952 = vrot.slane %v3875, %v3951
        %v3953 = vlaneseq
        %v3954 = vshrl.u32 %v3953, 7
        %v3955 = vsub.s32 0, %v3954
        %v3956 = vrot.slane %v3877, %v3955
        %v3957 = vlaneseq
        %v3958 = vshrl.u32 %v3957, 7
        %v3959 = vsub.s32 0, %v3958
        %v3960 = vrot.slane %v3879, %v3959
        %v3961 = vlaneseq
        %v3962 = vshrl.u32 %v3961, 7
        %v3963 = vsub.s32 0, %v3962
        %v3964 = vrot.slane %v3903, %v3963
        %v3965 = vlaneseq
        %v3966 = vshrl.u32 %v3965, 7
        %v3967 = vsub.s32 0, %v3966
        %v3968 = vrot.slane %v3917, %v3967
        %v3969 = vlaneseq
        %v3970 = vshrl.u32 %v3969, 7
        %v3971 = vsub.s32 0, %v3970
        %v3972 = vrot.slane %v3925, %v3971
        %v3973 = vlaneseq
        %v3974 = vshrl.u32 %v3973, 7
        %v3975 = vsub.s32 0, %v3974
        %v3976 = vrot.slane %v3927, %v3975
        %v3977 = vlaneseq
        %v3978 = vshrl.u32 %v3977, 7
        %v3979 = vsub.s32 0, %v3978
        %v3980 = vrot.slane %v3910, %v3979
        %v3981 = vlaneseq
        %v3982 = vshrl.u32 %v3981, 7
        %v3983 = vsub.s32 0, %v3982
        %v3984 = vrot.slane %v3924, %v3983
        %v3985 = vlaneseq
        %v3986 = vshrl.u32 %v3985, 7
        %v3987 = vsub.s32 0, %v3986
        %v3988 = vrot.slane %v3926, %v3987
        %v3989 = vlaneseq
        %v3990 = vshrl.u32 %v3989, 7
        %v3991 = vsub.s32 0, %v3990
        %v3992 = vrot.slane %v3928, %v3991
        %3993 = vrot.lane.b32.xlu0 %v3932, 32
        %v3994 = vpop.permute.xlu0 %3993
        %3995 = vrot.lane.b32.xlu0 %v3936, 32
        %v3996 = vpop.permute.xlu0 %3995
        %3997 = vrot.lane.b32.xlu0 %v3940, 32
        %v3998 = vpop.permute.xlu0 %3997
        %3999 = vrot.lane.b32.xlu0 %v3944, 32
        %v4000 = vpop.permute.xlu0 %3999
        %4001 = vrot.lane.b32.xlu0 %v3948, 32
        %v4002 = vpop.permute.xlu0 %4001
        %4003 = vrot.lane.b32.xlu0 %v3952, 32
        %v4004 = vpop.permute.xlu0 %4003
        %4005 = vrot.lane.b32.xlu0 %v3956, 32
        %v4006 = vpop.permute.xlu0 %4005
        %4007 = vrot.lane.b32.xlu0 %v3960, 32
        %v4008 = vpop.permute.xlu0 %4007
        %4009 = vrot.lane.b32.xlu0 %v3964, 32
        %v4010 = vpop.permute.xlu0 %4009
        %4011 = vrot.lane.b32.xlu0 %v3968, 32
        %v4012 = vpop.permute.xlu0 %4011
        %4013 = vrot.lane.b32.xlu0 %v3972, 32
        %v4014 = vpop.permute.xlu0 %4013
        %4015 = vrot.lane.b32.xlu0 %v3976, 32
        %v4016 = vpop.permute.xlu0 %4015
        %4017 = vrot.lane.b32.xlu0 %v3980, 32
        %v4018 = vpop.permute.xlu0 %4017
        %4019 = vrot.lane.b32.xlu0 %v3984, 32
        %v4020 = vpop.permute.xlu0 %4019
        %4021 = vrot.lane.b32.xlu0 %v3988, 32
        %v4022 = vpop.permute.xlu0 %4021
        %4023 = vrot.lane.b32.xlu0 %v3992, 32
        %v4024 = vpop.permute.xlu0 %4023
        %v4041 = vadd.f32 %v799, %v3994
        %v4042 = vadd.f32 %v804, %v3994
        %v4043 = vadd.f32 %v809, %v3996
        %v4044 = vadd.f32 %v814, %v3996
        %v4045 = vadd.f32 %v819, %v3998
        %v4046 = vadd.f32 %v824, %v3998
        %v4047 = vadd.f32 %v829, %v4000
        %v4048 = vadd.f32 %v834, %v4000
        %v4049 = vadd.f32 %v839, %v4002
        %v4050 = vadd.f32 %v844, %v4002
        %v4051 = vadd.f32 %v849, %v4004
        %v4052 = vadd.f32 %v854, %v4004
        %v4053 = vadd.f32 %v859, %v4006
        %v4054 = vadd.f32 %v864, %v4006
        %v4055 = vadd.f32 %v869, %v4008
        %v4056 = vadd.f32 %v874, %v4008
        %v4057 = vadd.f32 %v879, %v4010
        %v4058 = vadd.f32 %v884, %v4010
        %v4059 = vadd.f32 %v889, %v4012
        %v4060 = vadd.f32 %v894, %v4012
        %v4061 = vadd.f32 %v899, %v4014
        %v4062 = vadd.f32 %v904, %v4014
        %v4063 = vadd.f32 %v909, %v4016
        %v4064 = vadd.f32 %v914, %v4016
        %v4065 = vadd.f32 %v919, %v4018
        %v4066 = vadd.f32 %v924, %v4018
        %v4067 = vadd.f32 %v929, %v4020
        %v4068 = vadd.f32 %v934, %v4020
        %v4069 = vadd.f32 %v939, %v4022
        %v4070 = vadd.f32 %v944, %v4022
        %v4071 = vadd.f32 %v949, %v4024
        %v4072 = vadd.f32 %v954, %v4024
        %4075 = vrot.lane.b32.xlu0 %v3821, 32
        %v4076 = vpop.permute.xlu0 %4075
        %4077 = vrot.lane.b32.xlu0 %v3826, 32
        %v4078 = vpop.permute.xlu0 %4077
        %v4081 = vadd.f32 %v4041, %v4076
        %v4082 = vadd.f32 %v4042, %v4078
        %v4083 = vadd.f32 %v4043, %v4076
        %v4084 = vadd.f32 %v4044, %v4078
        %v4085 = vadd.f32 %v4045, %v4076
        %v4086 = vadd.f32 %v4046, %v4078
        %v4087 = vadd.f32 %v4047, %v4076
        %v4088 = vadd.f32 %v4048, %v4078
        %v4089 = vadd.f32 %v4049, %v4076
        %v4090 = vadd.f32 %v4050, %v4078
        %v4091 = vadd.f32 %v4051, %v4076
        %v4092 = vadd.f32 %v4052, %v4078
        %v4093 = vadd.f32 %v4053, %v4076
        %v4094 = vadd.f32 %v4054, %v4078
        %v4095 = vadd.f32 %v4055, %v4076
        %v4096 = vadd.f32 %v4056, %v4078
        %v4097 = vadd.f32 %v4057, %v4076
        %v4098 = vadd.f32 %v4058, %v4078
        %v4099 = vadd.f32 %v4059, %v4076
        %v4100 = vadd.f32 %v4060, %v4078
        %v4101 = vadd.f32 %v4061, %v4076
        %v4102 = vadd.f32 %v4062, %v4078
        %v4103 = vadd.f32 %v4063, %v4076
        %v4104 = vadd.f32 %v4064, %v4078
        %v4105 = vadd.f32 %v4065, %v4076
        %v4106 = vadd.f32 %v4066, %v4078
        %v4107 = vadd.f32 %v4067, %v4076
        %v4108 = vadd.f32 %v4068, %v4078
        %v4109 = vadd.f32 %v4069, %v4076
        %v4110 = vadd.f32 %v4070, %v4078
        %v4111 = vadd.f32 %v4071, %v4076
        %v4112 = vadd.f32 %v4072, %v4078
        %v4113 = vmax.f32 %v4081, 0.0
        %v4114 = vmax.f32 %v4082, 0.0
        %v4115 = vmax.f32 %v4083, 0.0
        %v4116 = vmax.f32 %v4084, 0.0
        %v4117 = vmax.f32 %v4085, 0.0
        %v4118 = vmax.f32 %v4086, 0.0
        %v4119 = vmax.f32 %v4087, 0.0
        %v4120 = vmax.f32 %v4088, 0.0
        %v4121 = vmax.f32 %v4089, 0.0
        %v4122 = vmax.f32 %v4090, 0.0
        %v4123 = vmax.f32 %v4091, 0.0
        %v4124 = vmax.f32 %v4092, 0.0
        %v4125 = vmax.f32 %v4093, 0.0
        %v4126 = vmax.f32 %v4094, 0.0
        %v4127 = vmax.f32 %v4095, 0.0
        %v4128 = vmax.f32 %v4096, 0.0
        %v4129 = vmax.f32 %v4097, 0.0
        %v4130 = vmax.f32 %v4098, 0.0
        %v4131 = vmax.f32 %v4099, 0.0
        %v4132 = vmax.f32 %v4100, 0.0
        %v4133 = vmax.f32 %v4101, 0.0
        %v4134 = vmax.f32 %v4102, 0.0
        %v4135 = vmax.f32 %v4103, 0.0
        %v4136 = vmax.f32 %v4104, 0.0
        %v4137 = vmax.f32 %v4105, 0.0
        %v4138 = vmax.f32 %v4106, 0.0
        %v4139 = vmax.f32 %v4107, 0.0
        %v4140 = vmax.f32 %v4108, 0.0
        %v4141 = vmax.f32 %v4109, 0.0
        %v4142 = vmax.f32 %v4110, 0.0
        %v4143 = vmax.f32 %v4111, 0.0
        %v4144 = vmax.f32 %v4112, 0.0
        %v4145 = vld [vmem:[%s15] sm:$0xff]
        %v4146 = vld [vmem:[%s15 + $0x8] sm:$0xff]
        %v4147 = vld [vmem:[%s15 + $0x10] sm:$0xff]
        %v4148 = vld [vmem:[%s15 + $0x18] sm:$0xff]
        %v4149 = vld [vmem:[%s16] sm:$0x1]
        %v4151 = vlaneseq
        %v4152 = vshrl.u32 %v4151, 7
        %v4153 = vsub.s32 0, %v4152
        %v4154 = vrot.slane %v4149, %v4153
        %4188 = vrot.lane.b32.xlu0 %v4113, 96
        %v4189 = vpop.permute.xlu0 %4188
        %4190 = vrot.lane.b32.xlu0 %v4114, 96
        %v4191 = vpop.permute.xlu0 %4190
        %4192 = vrot.lane.b32.xlu0 %v4115, 96
        %v4193 = vpop.permute.xlu0 %4192
        %4194 = vrot.lane.b32.xlu0 %v4116, 96
        %v4195 = vpop.permute.xlu0 %4194
        %4196 = vrot.lane.b32.xlu0 %v4117, 96
        %v4197 = vpop.permute.xlu0 %4196
        %4198 = vrot.lane.b32.xlu0 %v4118, 96
        %v4199 = vpop.permute.xlu0 %4198
        %4200 = vrot.lane.b32.xlu0 %v4119, 96
        %v4201 = vpop.permute.xlu0 %4200
        %4202 = vrot.lane.b32.xlu0 %v4120, 96
        %v4203 = vpop.permute.xlu0 %4202
        %4204 = vrot.lane.b32.xlu0 %v4121, 96
        %v4205 = vpop.permute.xlu0 %4204
        %4206 = vrot.lane.b32.xlu0 %v4122, 96
        %v4207 = vpop.permute.xlu0 %4206
        %4208 = vrot.lane.b32.xlu0 %v4123, 96
        %v4209 = vpop.permute.xlu0 %4208
        %4210 = vrot.lane.b32.xlu0 %v4124, 96
        %v4211 = vpop.permute.xlu0 %4210
        %4212 = vrot.lane.b32.xlu0 %v4125, 96
        %v4213 = vpop.permute.xlu0 %4212
        %4214 = vrot.lane.b32.xlu0 %v4126, 96
        %v4215 = vpop.permute.xlu0 %4214
        %4216 = vrot.lane.b32.xlu0 %v4127, 96
        %v4217 = vpop.permute.xlu0 %4216
        %4218 = vrot.lane.b32.xlu0 %v4128, 96
        %v4219 = vpop.permute.xlu0 %4218
        %4220 = vrot.lane.b32.xlu0 %v4129, 96
        %v4221 = vpop.permute.xlu0 %4220
        %4222 = vrot.lane.b32.xlu0 %v4130, 96
        %v4223 = vpop.permute.xlu0 %4222
        %4224 = vrot.lane.b32.xlu0 %v4131, 96
        %v4225 = vpop.permute.xlu0 %4224
        %4226 = vrot.lane.b32.xlu0 %v4132, 96
        %v4227 = vpop.permute.xlu0 %4226
        %4228 = vrot.lane.b32.xlu0 %v4133, 96
        %v4229 = vpop.permute.xlu0 %4228
        %4230 = vrot.lane.b32.xlu0 %v4134, 96
        %v4231 = vpop.permute.xlu0 %4230
        %4232 = vrot.lane.b32.xlu0 %v4135, 96
        %v4233 = vpop.permute.xlu0 %4232
        %4234 = vrot.lane.b32.xlu0 %v4136, 96
        %v4235 = vpop.permute.xlu0 %4234
        %4236 = vrot.lane.b32.xlu0 %v4137, 96
        %v4237 = vpop.permute.xlu0 %4236
        %4238 = vrot.lane.b32.xlu0 %v4138, 96
        %v4239 = vpop.permute.xlu0 %4238
        %4240 = vrot.lane.b32.xlu0 %v4139, 96
        %v4241 = vpop.permute.xlu0 %4240
        %4242 = vrot.lane.b32.xlu0 %v4140, 96
        %v4243 = vpop.permute.xlu0 %4242
        %4244 = vrot.lane.b32.xlu0 %v4141, 96
        %v4245 = vpop.permute.xlu0 %4244
        %4246 = vrot.lane.b32.xlu0 %v4142, 96
        %v4247 = vpop.permute.xlu0 %4246
        %4248 = vrot.lane.b32.xlu0 %v4143, 96
        %v4249 = vpop.permute.xlu0 %4248
        %4250 = vrot.lane.b32.xlu0 %v4144, 96
        %v4251 = vpop.permute.xlu0 %4250
        %v4252 = vsel %vm3653, %v4189, 0
        %v4254 = vsel %vm3653, %v4191, 0
        %v4256 = vsel %vm3653, %v4193, 0
        %v4258 = vsel %vm3653, %v4195, 0
        %v4260 = vsel %vm3653, %v4197, 0
        %v4262 = vsel %vm3653, %v4199, 0
        %v4264 = vsel %vm3653, %v4201, 0
        %v4266 = vsel %vm3653, %v4203, 0
        %v4268 = vsel %vm3653, %v4205, 0
        %v4270 = vsel %vm3653, %v4207, 0
        %v4272 = vsel %vm3653, %v4209, 0
        %v4274 = vsel %vm3653, %v4211, 0
        %v4276 = vsel %vm3653, %v4213, 0
        %v4278 = vsel %vm3653, %v4215, 0
        %v4280 = vsel %vm3653, %v4217, 0
        %v4282 = vsel %vm3653, %v4219, 0
        %v4284 = vsel %vm3653, %v4221, 0
        %v4286 = vsel %vm3653, %v4223, 0
        %v4288 = vsel %vm3653, %v4225, 0
        %v4290 = vsel %vm3653, %v4227, 0
        %v4292 = vsel %vm3653, %v4229, 0
        %v4294 = vsel %vm3653, %v4231, 0
        %v4296 = vsel %vm3653, %v4233, 0
        %v4298 = vsel %vm3653, %v4235, 0
        %v4300 = vsel %vm3653, %v4237, 0
        %v4302 = vsel %vm3653, %v4239, 0
        %v4304 = vsel %vm3653, %v4241, 0
        %v4306 = vsel %vm3653, %v4243, 0
        %v4308 = vsel %vm3653, %v4245, 0
        %v4310 = vsel %vm3653, %v4247, 0
        %v4312 = vsel %vm3653, %v4249, 0
        %v4314 = vsel %vm3653, %v4251, 0
        %4316 = vmatprep.subr.mxu0 0.0
        %4317 = vmatpush1.msra.mxu0 %v4145
        %4318 = vmatprep.subr.mxu0 0.0
        %4319 = vmatpush1.msra.mxu0 %v4146
        %4320 = vmatprep.subr.mxu0 0.0
        %4321 = vmatpush1.msra.mxu0 %v4147
        %4322 = vmatprep.subr.mxu0 0.0
        %4323 = vmatpush1.msra.mxu0 %v4148
        %4324 = vmatprep.subr.mxu0 0.0
        %4325 = vmatpush1.msra.mxu0 0.0
        %4326 = vmatprep.subr.mxu0 0.0
        %4327 = vmatpush1.msra.mxu0 0.0
        %4328 = vmatprep.subr.mxu0 0.0
        %4329 = vmatpush1.msra.mxu0 0.0
        %4330 = vmatprep.subr.mxu0 0.0
        %4331 = vmatpush1.msra.mxu0 0.0
        %4332 = vmatprep.subr.mxu0 0.0
        %4333 = vmatpush1.msra.mxu0 0.0
        %4334 = vmatprep.subr.mxu0 0.0
        %4335 = vmatpush1.msra.mxu0 0.0
        %4336 = vmatprep.subr.mxu0 0.0
        %4337 = vmatpush1.msra.mxu0 0.0
        %4338 = vmatprep.subr.mxu0 0.0
        %4339 = vmatpush1.msra.mxu0 0.0
        %4340 = vmatprep.subr.mxu0 0.0
        %4341 = vmatpush1.msra.mxu0 0.0
        %4342 = vmatprep.subr.mxu0 0.0
        %4343 = vmatpush1.msra.mxu0 0.0
        %4344 = vmatprep.subr.mxu0 0.0
        %4345 = vmatpush1.msra.mxu0 0.0
        %4346 = vmatprep.subr.mxu0 0.0
        %4347 = vmatpush1.msra.mxu0 0.0
        %4348 = vmatprep.subr.mxu0 0.0
        %4349 = vmatpush1.msra.mxu0 0.0
        %4350 = vmatprep.subr.mxu0 0.0
        %4351 = vmatpush1.msra.mxu0 0.0
        %4352 = vmatprep.subr.mxu0 0.0
        %4353 = vmatpush1.msra.mxu0 0.0
        %4354 = vmatprep.subr.mxu0 0.0
        %4355 = vmatpush1.msra.mxu0 0.0
        %4356 = vmatprep.subr.mxu0 0.0
        %4357 = vmatpush1.msra.mxu0 0.0
        %4358 = vmatprep.subr.mxu0 0.0
        %4359 = vmatpush1.msra.mxu0 0.0
        %4360 = vmatprep.subr.mxu0 0.0
        %4361 = vmatpush1.msra.mxu0 0.0
        %4362 = vmatprep.subr.mxu0 0.0
        %4363 = vmatpush1.msra.mxu0 0.0
        %4364 = vmatprep.subr.mxu0 0.0
        %4365 = vmatpush1.msra.mxu0 0.0
        %4366 = vmatprep.subr.mxu0 0.0
        %4367 = vmatpush1.msra.mxu0 0.0
        %4368 = vmatprep.subr.mxu0 0.0
        %4369 = vmatpush1.msra.mxu0 0.0
        %4370 = vmatprep.subr.mxu0 0.0
        %4371 = vmatpush1.msra.mxu0 0.0
        %4372 = vmatprep.subr.mxu0 0.0
        %4373 = vmatpush1.msra.mxu0 0.0
        %4374 = vmatprep.subr.mxu0 0.0
        %4375 = vmatpush1.msra.mxu0 0.0
        %4376 = vmatprep.subr.mxu0 0.0
        %4377 = vmatpush1.msra.mxu0 0.0
        %4378 = vmatprep.subr.mxu0 0.0
        %4379 = vmatpush1.msra.mxu0 0.0
        %4380 = vmatprep.mubr.f32.mxu0 0.0
        %4381 = vmatmul.mubr.f32.gmra.mrb[0].mxu0 %v4252
        %v4382 = vpop.f32.mrb[0].mxu0
        %v4383 = vadd.f32 %v4154, %v4382
        %v4384 = vpop.f32.mrb[0].mxu0
        %4385 = vmatprep.mubr.f32.mxu0 0.0
        %4386 = vmatmul.mubr.f32.gmra.mrb[0].mxu0 %v4254
        %v4387 = vpop.f32.mrb[0].mxu0
        %v4388 = vadd.f32 %v4154, %v4387
        %v4389 = vpop.f32.mrb[0].mxu0
        %4390 = vmatprep.mubr.f32.mxu0 0.0
        %4391 = vmatmul.mubr.f32.gmra.mrb[0].mxu0 %v4256
        %v4392 = vpop.f32.mrb[0].mxu0
        %v4393 = vadd.f32 %v4154, %v4392
        %v4394 = vpop.f32.mrb[0].mxu0
        %4395 = vmatprep.mubr.f32.mxu0 0.0
        %4396 = vmatmul.mubr.f32.gmra.mrb[0].mxu0 %v4258
        %v4397 = vpop.f32.mrb[0].mxu0
        %v4398 = vadd.f32 %v4154, %v4397
        %v4399 = vpop.f32.mrb[0].mxu0
        %4400 = vmatprep.mubr.f32.mxu0 0.0
        %4401 = vmatmul.mubr.f32.gmra.mrb[0].mxu0 %v4260
        %v4402 = vpop.f32.mrb[0].mxu0
        %v4403 = vadd.f32 %v4154, %v4402
        %v4404 = vpop.f32.mrb[0].mxu0
        %4405 = vmatprep.mubr.f32.mxu0 0.0
        %4406 = vmatmul.mubr.f32.gmra.mrb[0].mxu0 %v4262
        %v4407 = vpop.f32.mrb[0].mxu0
        %v4408 = vadd.f32 %v4154, %v4407
        %v4409 = vpop.f32.mrb[0].mxu0
        %4410 = vmatprep.mubr.f32.mxu0 0.0
        %4411 = vmatmul.mubr.f32.gmra.mrb[0].mxu0 %v4264
        %v4412 = vpop.f32.mrb[0].mxu0
        %v4413 = vadd.f32 %v4154, %v4412
        %v4414 = vpop.f32.mrb[0].mxu0
        %4415 = vmatprep.mubr.f32.mxu0 0.0
        %4416 = vmatmul.mubr.f32.gmra.mrb[0].mxu0 %v4266
        %v4417 = vpop.f32.mrb[0].mxu0
        %v4418 = vadd.f32 %v4154, %v4417
        %v4419 = vpop.f32.mrb[0].mxu0
        %4420 = vmatprep.mubr.f32.mxu0 0.0
        %4421 = vmatmul.mubr.f32.gmra.mrb[0].mxu0 %v4268
        %v4422 = vpop.f32.mrb[0].mxu0
        %v4423 = vadd.f32 %v4154, %v4422
        %v4424 = vpop.f32.mrb[0].mxu0
        %4425 = vmatprep.mubr.f32.mxu0 0.0
        %4426 = vmatmul.mubr.f32.gmra.mrb[0].mxu0 %v4270
        %v4427 = vpop.f32.mrb[0].mxu0
        %v4428 = vadd.f32 %v4154, %v4427
        %v4429 = vpop.f32.mrb[0].mxu0
        %4430 = vmatprep.mubr.f32.mxu0 0.0
        %4431 = vmatmul.mubr.f32.gmra.mrb[0].mxu0 %v4272
        %v4432 = vpop.f32.mrb[0].mxu0
        %v4433 = vadd.f32 %v4154, %v4432
        %v4434 = vpop.f32.mrb[0].mxu0
        %4435 = vmatprep.mubr.f32.mxu0 0.0
        %4436 = vmatmul.mubr.f32.gmra.mrb[0].mxu0 %v4274
        %v4437 = vpop.f32.mrb[0].mxu0
        %v4438 = vadd.f32 %v4154, %v4437
        %v4439 = vpop.f32.mrb[0].mxu0
        %4440 = vmatprep.mubr.f32.mxu0 0.0
        %4441 = vmatmul.mubr.f32.gmra.mrb[0].mxu0 %v4276
        %v4442 = vpop.f32.mrb[0].mxu0
        %v4443 = vadd.f32 %v4154, %v4442
        %v4444 = vpop.f32.mrb[0].mxu0
        %4445 = vmatprep.mubr.f32.mxu0 0.0
        %4446 = vmatmul.mubr.f32.gmra.mrb[0].mxu0 %v4278
        %v4447 = vpop.f32.mrb[0].mxu0
        %v4448 = vadd.f32 %v4154, %v4447
        %v4449 = vpop.f32.mrb[0].mxu0
        %4450 = vmatprep.mubr.f32.mxu0 0.0
        %4451 = vmatmul.mubr.f32.gmra.mrb[0].mxu0 %v4280
        %v4452 = vpop.f32.mrb[0].mxu0
        %v4453 = vadd.f32 %v4154, %v4452
        %v4454 = vpop.f32.mrb[0].mxu0
        %4455 = vmatprep.mubr.f32.mxu0 0.0
        %4456 = vmatmul.mubr.f32.gmra.mrb[0].mxu0 %v4282
        %v4457 = vpop.f32.mrb[0].mxu0
        %v4458 = vadd.f32 %v4154, %v4457
        %v4459 = vpop.f32.mrb[0].mxu0
        %4460 = vmatprep.mubr.f32.mxu0 0.0
        %4461 = vmatmul.mubr.f32.gmra.mrb[0].mxu0 %v4284
        %v4462 = vpop.f32.mrb[0].mxu0
        %v4463 = vadd.f32 %v4154, %v4462
        %v4464 = vpop.f32.mrb[0].mxu0
        %4465 = vmatprep.mubr.f32.mxu0 0.0
        %4466 = vmatmul.mubr.f32.gmra.mrb[0].mxu0 %v4286
        %v4467 = vpop.f32.mrb[0].mxu0
        %v4468 = vadd.f32 %v4154, %v4467
        %v4469 = vpop.f32.mrb[0].mxu0
        %4470 = vmatprep.mubr.f32.mxu0 0.0
        %4471 = vmatmul.mubr.f32.gmra.mrb[0].mxu0 %v4288
        %v4472 = vpop.f32.mrb[0].mxu0
        %v4473 = vadd.f32 %v4154, %v4472
        %v4474 = vpop.f32.mrb[0].mxu0
        %4475 = vmatprep.mubr.f32.mxu0 0.0
        %4476 = vmatmul.mubr.f32.gmra.mrb[0].mxu0 %v4290
        %v4477 = vpop.f32.mrb[0].mxu0
        %v4478 = vadd.f32 %v4154, %v4477
        %v4479 = vpop.f32.mrb[0].mxu0
        %4480 = vmatprep.mubr.f32.mxu0 0.0
        %4481 = vmatmul.mubr.f32.gmra.mrb[0].mxu0 %v4292
        %v4482 = vpop.f32.mrb[0].mxu0
        %v4483 = vadd.f32 %v4154, %v4482
        %v4484 = vpop.f32.mrb[0].mxu0
        %4485 = vmatprep.mubr.f32.mxu0 0.0
        %4486 = vmatmul.mubr.f32.gmra.mrb[0].mxu0 %v4294
        %v4487 = vpop.f32.mrb[0].mxu0
        %v4488 = vadd.f32 %v4154, %v4487
        %v4489 = vpop.f32.mrb[0].mxu0
        %4490 = vmatprep.mubr.f32.mxu0 0.0
        %4491 = vmatmul.mubr.f32.gmra.mrb[0].mxu0 %v4296
        %v4492 = vpop.f32.mrb[0].mxu0
        %v4493 = vadd.f32 %v4154, %v4492
        %v4494 = vpop.f32.mrb[0].mxu0
        %4495 = vmatprep.mubr.f32.mxu0 0.0
        %4496 = vmatmul.mubr.f32.gmra.mrb[0].mxu0 %v4298
        %v4497 = vpop.f32.mrb[0].mxu0
        %v4498 = vadd.f32 %v4154, %v4497
        %v4499 = vpop.f32.mrb[0].mxu0
        %4500 = vmatprep.mubr.f32.mxu0 0.0
        %4501 = vmatmul.mubr.f32.gmra.mrb[0].mxu0 %v4300
        %v4502 = vpop.f32.mrb[0].mxu0
        %v4503 = vadd.f32 %v4154, %v4502
        %v4504 = vpop.f32.mrb[0].mxu0
        %4505 = vmatprep.mubr.f32.mxu0 0.0
        %4506 = vmatmul.mubr.f32.gmra.mrb[0].mxu0 %v4302
        %v4507 = vpop.f32.mrb[0].mxu0
        %v4508 = vadd.f32 %v4154, %v4507
        %v4509 = vpop.f32.mrb[0].mxu0
        %4510 = vmatprep.mubr.f32.mxu0 0.0
        %4511 = vmatmul.mubr.f32.gmra.mrb[0].mxu0 %v4304
        %v4512 = vpop.f32.mrb[0].mxu0
        %v4513 = vadd.f32 %v4154, %v4512
        %v4514 = vpop.f32.mrb[0].mxu0
        %4515 = vmatprep.mubr.f32.mxu0 0.0
        %4516 = vmatmul.mubr.f32.gmra.mrb[0].mxu0 %v4306
        %v4517 = vpop.f32.mrb[0].mxu0
        %v4518 = vadd.f32 %v4154, %v4517
        %v4519 = vpop.f32.mrb[0].mxu0
        %4520 = vmatprep.mubr.f32.mxu0 0.0
        %4521 = vmatmul.mubr.f32.gmra.mrb[0].mxu0 %v4308
        %v4522 = vpop.f32.mrb[0].mxu0
        %v4523 = vadd.f32 %v4154, %v4522
        %v4524 = vpop.f32.mrb[0].mxu0
        %4525 = vmatprep.mubr.f32.mxu0 0.0
        %4526 = vmatmul.mubr.f32.gmra.mrb[0].mxu0 %v4310
        %v4527 = vpop.f32.mrb[0].mxu0
        %v4528 = vadd.f32 %v4154, %v4527
        %v4529 = vpop.f32.mrb[0].mxu0
        %4530 = vmatprep.mubr.f32.mxu0 0.0
        %4531 = vmatmul.mubr.f32.gmra.mrb[0].mxu0 %v4312
        %v4532 = vpop.f32.mrb[0].mxu0
        %v4533 = vadd.f32 %v4154, %v4532
        %v4534 = vpop.f32.mrb[0].mxu0
        %4535 = vmatprep.mubr.f32.mxu0 0.0
        %4536 = vmatmul.mubr.f32.gmra.mrb[0].mxu0 %v4314
        %v4537 = vpop.f32.mrb[0].mxu0
        %v4538 = vadd.f32 %v4154, %v4537
        %v4539 = vpop.f32.mrb[0].mxu0
        %4540 = vdwg.mxu0
        %v4541 = vadd.f32 %v4383, 3.0
        %v4542 = vadd.f32 %v4388, 3.0
        %v4543 = vadd.f32 %v4393, 3.0
        %v4544 = vadd.f32 %v4398, 3.0
        %v4545 = vadd.f32 %v4403, 3.0
        %v4546 = vadd.f32 %v4408, 3.0
        %v4547 = vadd.f32 %v4413, 3.0
        %v4548 = vadd.f32 %v4418, 3.0
        %v4549 = vadd.f32 %v4423, 3.0
        %v4550 = vadd.f32 %v4428, 3.0
        %v4551 = vadd.f32 %v4433, 3.0
        %v4552 = vadd.f32 %v4438, 3.0
        %v4553 = vadd.f32 %v4443, 3.0
        %v4554 = vadd.f32 %v4448, 3.0
        %v4555 = vadd.f32 %v4453, 3.0
        %v4556 = vadd.f32 %v4458, 3.0
        %v4557 = vadd.f32 %v4463, 3.0
        %v4558 = vadd.f32 %v4468, 3.0
        %v4559 = vadd.f32 %v4473, 3.0
        %v4560 = vadd.f32 %v4478, 3.0
        %v4561 = vadd.f32 %v4483, 3.0
        %v4562 = vadd.f32 %v4488, 3.0
        %v4563 = vadd.f32 %v4493, 3.0
        %v4564 = vadd.f32 %v4498, 3.0
        %v4565 = vadd.f32 %v4503, 3.0
        %v4566 = vadd.f32 %v4508, 3.0
        %v4567 = vadd.f32 %v4513, 3.0
        %v4568 = vadd.f32 %v4518, 3.0
        %v4569 = vadd.f32 %v4523, 3.0
        %v4570 = vadd.f32 %v4528, 3.0
        %v4571 = vadd.f32 %v4533, 3.0
        %v4572 = vadd.f32 %v4538, 3.0
        %v4573 = vmax.f32 %v4541, 0.0
        %v4574 = vmax.f32 %v4542, 0.0
        %v4575 = vmax.f32 %v4543, 0.0
        %v4576 = vmax.f32 %v4544, 0.0
        %v4577 = vmax.f32 %v4545, 0.0
        %v4578 = vmax.f32 %v4546, 0.0
        %v4579 = vmax.f32 %v4547, 0.0
        %v4580 = vmax.f32 %v4548, 0.0
        %v4581 = vmax.f32 %v4549, 0.0
        %v4582 = vmax.f32 %v4550, 0.0
        %v4583 = vmax.f32 %v4551, 0.0
        %v4584 = vmax.f32 %v4552, 0.0
        %v4585 = vmax.f32 %v4553, 0.0
        %v4586 = vmax.f32 %v4554, 0.0
        %v4587 = vmax.f32 %v4555, 0.0
        %v4588 = vmax.f32 %v4556, 0.0
        %v4589 = vmax.f32 %v4557, 0.0
        %v4590 = vmax.f32 %v4558, 0.0
        %v4591 = vmax.f32 %v4559, 0.0
        %v4592 = vmax.f32 %v4560, 0.0
        %v4593 = vmax.f32 %v4561, 0.0
        %v4594 = vmax.f32 %v4562, 0.0
        %v4595 = vmax.f32 %v4563, 0.0
        %v4596 = vmax.f32 %v4564, 0.0
        %v4597 = vmax.f32 %v4565, 0.0
        %v4598 = vmax.f32 %v4566, 0.0
        %v4599 = vmax.f32 %v4567, 0.0
        %v4600 = vmax.f32 %v4568, 0.0
        %v4601 = vmax.f32 %v4569, 0.0
        %v4602 = vmax.f32 %v4570, 0.0
        %v4603 = vmax.f32 %v4571, 0.0
        %v4604 = vmax.f32 %v4572, 0.0
        %v4605 = vmin.f32 %v4573, 6.0
        %v4606 = vmin.f32 %v4574, 6.0
        %v4607 = vmin.f32 %v4575, 6.0
        %v4608 = vmin.f32 %v4576, 6.0
        %v4609 = vmin.f32 %v4577, 6.0
        %v4610 = vmin.f32 %v4578, 6.0
        %v4611 = vmin.f32 %v4579, 6.0
        %v4612 = vmin.f32 %v4580, 6.0
        %v4613 = vmin.f32 %v4581, 6.0
        %v4614 = vmin.f32 %v4582, 6.0
        %v4615 = vmin.f32 %v4583, 6.0
        %v4616 = vmin.f32 %v4584, 6.0
        %v4617 = vmin.f32 %v4585, 6.0
        %v4618 = vmin.f32 %v4586, 6.0
        %v4619 = vmin.f32 %v4587, 6.0
        %v4620 = vmin.f32 %v4588, 6.0
        %v4621 = vmin.f32 %v4589, 6.0
        %v4622 = vmin.f32 %v4590, 6.0
        %v4623 = vmin.f32 %v4591, 6.0
        %v4624 = vmin.f32 %v4592, 6.0
        %v4625 = vmin.f32 %v4593, 6.0
        %v4626 = vmin.f32 %v4594, 6.0
        %v4627 = vmin.f32 %v4595, 6.0
        %v4628 = vmin.f32 %v4596, 6.0
        %v4629 = vmin.f32 %v4597, 6.0
        %v4630 = vmin.f32 %v4598, 6.0
        %v4631 = vmin.f32 %v4599, 6.0
        %v4632 = vmin.f32 %v4600, 6.0
        %v4633 = vmin.f32 %v4601, 6.0
        %v4634 = vmin.f32 %v4602, 6.0
        %v4635 = vmin.f32 %v4603, 6.0
        %v4636 = vmin.f32 %v4604, 6.0
        %v4637 = vmul.f32 %v4605, 0.16666667
        %v4638 = vmul.f32 %v4606, 0.16666667
        %v4639 = vmul.f32 %v4607, 0.16666667
        %v4640 = vmul.f32 %v4608, 0.16666667
        %v4641 = vmul.f32 %v4609, 0.16666667
        %v4642 = vmul.f32 %v4610, 0.16666667
        %v4643 = vmul.f32 %v4611, 0.16666667
        %v4644 = vmul.f32 %v4612, 0.16666667
        %v4645 = vmul.f32 %v4613, 0.16666667
        %v4646 = vmul.f32 %v4614, 0.16666667
        %v4647 = vmul.f32 %v4615, 0.16666667
        %v4648 = vmul.f32 %v4616, 0.16666667
        %v4649 = vmul.f32 %v4617, 0.16666667
        %v4650 = vmul.f32 %v4618, 0.16666667
        %v4651 = vmul.f32 %v4619, 0.16666667
        %v4652 = vmul.f32 %v4620, 0.16666667
        %v4653 = vmul.f32 %v4621, 0.16666667
        %v4654 = vmul.f32 %v4622, 0.16666667
        %v4655 = vmul.f32 %v4623, 0.16666667
        %v4656 = vmul.f32 %v4624, 0.16666667
        %v4657 = vmul.f32 %v4625, 0.16666667
        %v4658 = vmul.f32 %v4626, 0.16666667
        %v4659 = vmul.f32 %v4627, 0.16666667
        %v4660 = vmul.f32 %v4628, 0.16666667
        %v4661 = vmul.f32 %v4629, 0.16666667
        %v4662 = vmul.f32 %v4630, 0.16666667
        %v4663 = vmul.f32 %v4631, 0.16666667
        %v4664 = vmul.f32 %v4632, 0.16666667
        %v4665 = vmul.f32 %v4633, 0.16666667
        %v4666 = vmul.f32 %v4634, 0.16666667
        %v4667 = vmul.f32 %v4635, 0.16666667
        %v4668 = vmul.f32 %v4636, 0.16666667
        %v4669 = vmul.f32 %v4637, %v2189
        %v4670 = vmul.f32 %v4638, %v2194
        %v4671 = vmul.f32 %v4639, %v2199
        %v4672 = vmul.f32 %v4640, %v2204
        %v4673 = vmul.f32 %v4641, %v2209
        %v4674 = vmul.f32 %v4642, %v2214
        %v4675 = vmul.f32 %v4643, %v2219
        %v4676 = vmul.f32 %v4644, %v2224
        %v4677 = vmul.f32 %v4645, %v2229
        %v4678 = vmul.f32 %v4646, %v2234
        %v4679 = vmul.f32 %v4647, %v2239
        %v4680 = vmul.f32 %v4648, %v2244
        %v4681 = vmul.f32 %v4649, %v2249
        %v4682 = vmul.f32 %v4650, %v2254
        %v4683 = vmul.f32 %v4651, %v2259
        %v4684 = vmul.f32 %v4652, %v2264
        %v4685 = vmul.f32 %v4653, %v2269
        %v4686 = vmul.f32 %v4654, %v2274
        %v4687 = vmul.f32 %v4655, %v2279
        %v4688 = vmul.f32 %v4656, %v2284
        %v4689 = vmul.f32 %v4657, %v2289
        %v4690 = vmul.f32 %v4658, %v2294
        %v4691 = vmul.f32 %v4659, %v2299
        %v4692 = vmul.f32 %v4660, %v2304
        %v4693 = vmul.f32 %v4661, %v2309
        %v4694 = vmul.f32 %v4662, %v2314
        %v4695 = vmul.f32 %v4663, %v2319
        %v4696 = vmul.f32 %v4664, %v2324
        %v4697 = vmul.f32 %v4665, %v2329
        %v4698 = vmul.f32 %v4666, %v2334
        %v4699 = vmul.f32 %v4667, %v2339
        %v4700 = vmul.f32 %v4668, %v2344
        %4701 = vst.msk [vmem:[%s593] sm:$0xff] %vm635, %v4669
        %4702 = vst.msk [vmem:[%s593 + $0x8] sm:$0xff] %vm635, %v4670
        %4703 = vst.msk [vmem:[%s593 + $0x10] sm:$0xff] %vm635, %v4671
        %4704 = vst.msk [vmem:[%s593 + $0x18] sm:$0xff] %vm635, %v4672
        %4705 = vst.msk [vmem:[%s593 + $0x20] sm:$0xff] %vm635, %v4673
        %4706 = vst.msk [vmem:[%s593 + $0x28] sm:$0xff] %vm635, %v4674
        %4707 = vst.msk [vmem:[%s593 + $0x30] sm:$0xff] %vm635, %v4675
        %4708 = vst.msk [vmem:[%s593 + $0x38] sm:$0xff] %vm635, %v4676
        %4709 = vst.msk [vmem:[%s593 + $0x40] sm:$0xff] %vm635, %v4677
        %4710 = vst.msk [vmem:[%s593 + $0x48] sm:$0xff] %vm635, %v4678
        %4711 = vst.msk [vmem:[%s593 + $0x50] sm:$0xff] %vm635, %v4679
        %4712 = vst.msk [vmem:[%s593 + $0x58] sm:$0xff] %vm635, %v4680
        %4713 = vst.msk [vmem:[%s593 + $0x60] sm:$0xff] %vm635, %v4681
        %4714 = vst.msk [vmem:[%s593 + $0x68] sm:$0xff] %vm635, %v4682
        %4715 = vst.msk [vmem:[%s593 + $0x70] sm:$0xff] %vm635, %v4683
        %4716 = vst.msk [vmem:[%s593 + $0x78] sm:$0xff] %vm635, %v4684
        %4717 = vst.msk [vmem:[%s593 + $0x80] sm:$0xff] %vm635, %v4685
        %4718 = vst.msk [vmem:[%s593 + $0x88] sm:$0xff] %vm635, %v4686
        %4719 = vst.msk [vmem:[%s593 + $0x90] sm:$0xff] %vm635, %v4687
        %4720 = vst.msk [vmem:[%s593 + $0x98] sm:$0xff] %vm635, %v4688
        %4721 = vst.msk [vmem:[%s593 + $0xa0] sm:$0xff] %vm635, %v4689
        %4722 = vst.msk [vmem:[%s593 + $0xa8] sm:$0xff] %vm635, %v4690
        %4723 = vst.msk [vmem:[%s593 + $0xb0] sm:$0xff] %vm635, %v4691
        %4724 = vst.msk [vmem:[%s593 + $0xb8] sm:$0xff] %vm635, %v4692
        %4725 = vst.msk [vmem:[%s593 + $0xc0] sm:$0xff] %vm635, %v4693
        %4726 = vst.msk [vmem:[%s593 + $0xc8] sm:$0xff] %vm635, %v4694
        %4727 = vst.msk [vmem:[%s593 + $0xd0] sm:$0xff] %vm635, %v4695
        %4728 = vst.msk [vmem:[%s593 + $0xd8] sm:$0xff] %vm635, %v4696
        %4729 = vst.msk [vmem:[%s593 + $0xe0] sm:$0xff] %vm635, %v4697
        %4730 = vst.msk [vmem:[%s593 + $0xe8] sm:$0xff] %vm635, %v4698
        %4731 = vst.msk [vmem:[%s593 + $0xf0] sm:$0xff] %vm635, %v4699
        %4732 = vst.msk [vmem:[%s593 + $0xf8] sm:$0xff] %vm635, %v4700
        %s4733 = sand.u32 %s405, 1
        %s4734 = scalar_lea.sflag [#allocation5], %s4733
        %s4735 = sand.u32 %s405, 1
        %s4736 = smul.addr %s4735, 256
        %s4737 = scalar_lea.vmem [#allocation9], %s4736
        // Predicated region
        $region101: #{tpu_custom_call.1} parent=87 // pred_check
          %p4738 = pneg %p415
        $region102: #{tpu_custom_call.1} parent=87 // pred_check_branch
          %4740 = sbr.rel (%p4738) target = $region104
        $region103: #{tpu_custom_call.1} parent=87 // pred_region
          %s4742 = ssub.s32 4096, 4096
          %4743 = vsyncadd %s4734, %s4742
          %s4744 = smul.addr %s35, 32
          %s4745 = smul.addr %s4744, 128
          %s4746 = scalar_lea.hbm %s17, %s4745
          %s4747 = sshll.u32 %s4737, 4
          %s4748 = int_to_ptr.vmem [resolvable:$true] %s4747
          %4753 = dma.vmem_to_hbm [thread:$0]  %s4748, 4096, %s4746, %s4734, 128, 128, 8
        $region104: #{tpu_custom_call.1} parent=87 // pred_fallthru
          _
      $region88: #{tpu_custom_call.1} parent=5 // pred_fallthru
        _
      %p4754 = scmp.le.s32.totalorder 2, %s30
      // Predicated region
      $region105: #{tpu_custom_call.1} parent=5 // pred_check
        %p4755 = pneg %p4754
      $region106: #{tpu_custom_call.1} parent=5 // pred_check_branch
        %4757 = sbr.rel (%p4755) target = $region108
      $region107: #{tpu_custom_call.1} parent=5 // pred_region
        %s4758 = ssub.s32 %s30, 2
        // Predicated region
        $region109: #{tpu_custom_call.1} parent=107 // pred_check
          %p4759 = pneg %p421
        $region110: #{tpu_custom_call.1} parent=107 // pred_check_branch
          %4761 = sbr.rel (%p4759) target = $region112
        $region111: #{tpu_custom_call.1} parent=107 // pred_region
          %s4762 = sand.u32 %s406, 1
          %s4763 = scalar_lea.sflag [#allocation5], %s4762
          %s4764 = sand.u32 %s406, 1
          %s4765 = smul.addr %s4764, 256
          %s4766 = scalar_lea.vmem [#allocation9], %s4765
          %4767 = dma.done %s4763, 4096
        $region112: #{tpu_custom_call.1} parent=107 // pred_fallthru
          _
      $region108: #{tpu_custom_call.1} parent=5 // pred_fallthru
        _
    $region6: #{tpu_custom_call.1} parent=1 // loop_footer
      %s34 = sadd.s32 1, %s30
    $region7: #{tpu_custom_call.1} parent=1 // loop_footer_branch
      %29 = sbr.rel target = $region3
    $region8: #{tpu_custom_call.1} parent=1 // loop_exit
      _
    %4768 = vsyncpa [#allocation4], 1
    %s4769 = scalar_lea.sflag [#allocation4], 1
    %4770 = vsyncpa %s4769, 1
    %4771 = vsyncpa [#allocation7], 1
    %4772 = vsyncpa [#allocation5], 1
    %s4773 = scalar_lea.sflag [#allocation5], 1
    %4774 = vsyncpa %s4773, 1

</llo_original>
